<compile_context>
chip_gen: v5e
topology: v5e:2x2
jax: 0.10.0
libtpu: 0.0.40
codegen_flags: <defaults>
</compile_context>

<pallas_src>
import functools

import jax
import jax.numpy as jnp
from jax import lax
from jax.experimental import pallas as pl
from jax.experimental.pallas import tpu as pltpu

_BN_EPS = 1e-5


# ------------------------- host-side weight prep helpers -------------------------

def _prep_dw(w_dw):
    """torch depthwise (C,1,K,K) -> (K*K, C) f32, row index = ky*K + kx."""
    C, _, k, _ = w_dw.shape
    return jnp.transpose(w_dw[:, 0], (1, 2, 0)).reshape(k * k, C)


def _prep_pw(w_pw):
    """torch pointwise (Cout,Cin,1,1) -> (Cin, Cout) f32."""
    return jnp.transpose(w_pw[:, :, 0, 0], (1, 0))


def _bn_fold(g, b, rm, rv):
    """Eval-mode BN -> (scale, bias), each shape (1, C)."""
    sc = g / jnp.sqrt(rv + _BN_EPS)
    return sc.reshape(1, -1), (b - rm * sc).reshape(1, -1)


def _tile_cols(a, W):
    """Tile a (R, C) per-channel param W times along the lane axis -> (R, W*C)."""
    return jnp.tile(a, (1, W))


def _bd_pw(w_pw, W):
    """Block-diagonal 1x1-conv weight for slab layout: (W*Cin, W*Cout) bf16."""
    base = _prep_pw(w_pw)
    return jnp.kron(jnp.eye(W, dtype=base.dtype), base).astype(jnp.bfloat16)


def _pick_nb(n, bytes_per_image, act_budget=2 << 20, min_steps=8):
    """Images per grid step: largest divisor of n under a small activation budget,
    keeping >= min_steps grid steps when the batch allows (feeds both v7x cores)."""
    cap = max(1, act_budget // max(1, bytes_per_image))
    cap = min(cap, n, max(1, n // min_steps))
    nb = 1
    for d in range(1, n + 1):
        if n % d == 0 and d <= cap:
            nb = d
    return nb


# --------------------- stride-1 slab kernels (lane-dense) ------------------------
# Working value layout: (Nb, H, W*C); H on sublanes, W*C on lanes (lane-dense).

def _dw_slab(x, dw_ref, K, d, C):
    """Depthwise KxK (stride 1, dilation d) on a (Nb, H, W*C) slab -> f32 slab.

    H halo: sublane-axis concat (cheap).  W halo: lane-axis concat; each kx tap
    column is then a static lane slice (XLU shift), the ky shift a sublane slice.
    """
    Nb, H, WC = x.shape
    p = d * (K - 1) // 2
    zr = jnp.zeros((Nb, p, WC), x.dtype)
    xp = jnp.concatenate([zr, x, zr], axis=1)                     # (Nb, H+2p, WC)
    zc = jnp.zeros((Nb, H + 2 * p, p * C), x.dtype)
    xp = jnp.concatenate([zc, xp, zc], axis=2)                    # (Nb, H+2p, (W+2p)*C)
    w = dw_ref[...]                                               # (K*K, WC)
    taps = [w[i].reshape(1, 1, WC) for i in range(K * K)]
    acc = jnp.zeros((Nb, H, WC), jnp.float32)
    for kx in range(K):
        col = lax.slice(xp, (0, 0, kx * d * C), (Nb, H + 2 * p, kx * d * C + WC))
        for ky in range(K):
            rows = lax.slice(col, (0, ky * d, 0), (Nb, ky * d + H, WC))
            acc = acc + rows * taps[ky * K + kx]
    return acc


def _pw_slab(h, pw_ref, s_ref, b_ref):
    """1x1 conv in slab layout: block-diagonal (W*C, W*Cout) MXU matmul + folded BN.
    Activations never leave the lane-dense layout (no relayout reshapes)."""
    Nb, H, WC = h.shape
    y = jnp.dot(h.reshape(Nb * H, WC).astype(jnp.bfloat16), pw_ref[...],
                preferred_element_type=jnp.float32)
    y = y * s_ref[...] + b_ref[...]
    return y.reshape(Nb, H, -1)


def _sep_conv_slab_kernel(*refs, K, C, fuse):
    """Fused WSSepConv (stride 1): relu->dw->1x1->BN->relu->dw->1x1->BN [+other]."""
    if fuse:
        (x_ref, dw1_ref, pw1_ref, s1_ref, b1_ref,
         dw2_ref, pw2_ref, s2_ref, b2_ref, other_ref, o_ref) = refs
    else:
        (x_ref, dw1_ref, pw1_ref, s1_ref, b1_ref,
         dw2_ref, pw2_ref, s2_ref, b2_ref, o_ref) = refs
    x = jnp.maximum(x_ref[...], 0.0)
    h = _dw_slab(x, dw1_ref, K, 1, C)
    h = _pw_slab(h, pw1_ref, s1_ref, b1_ref)
    h = jnp.maximum(h, 0.0)
    h = _dw_slab(h, dw2_ref, K, 1, C)
    h = _pw_slab(h, pw2_ref, s2_ref, b2_ref)
    if fuse:
        h = h + other_ref[...]
    o_ref[...] = h.astype(o_ref.dtype)


def _dil_conv_slab_kernel(*refs, K, d, C, fuse):
    """Fused WSDilConv (stride 1): relu -> dilated dw -> 1x1 -> BN [+other]."""
    if fuse:
        x_ref, dw_ref, pw_ref, s_ref, b_ref, other_ref, o_ref = refs
    else:
        x_ref, dw_ref, pw_ref, s_ref, b_ref, o_ref = refs
    x = jnp.maximum(x_ref[...], 0.0)
    h = _dw_slab(x, dw_ref, K, d, C)
    h = _pw_slab(h, pw_ref, s_ref, b_ref)
    if fuse:
        h = h + other_ref[...]
    o_ref[...] = h.astype(o_ref.dtype)


def _pool_slab_kernel(*refs, C, is_max, fuse):
    """3x3 max/avg pool, stride 1, pad 1, in slab layout [+other]."""
    if fuse:
        x_ref, other_ref, o_ref = refs
    else:
        x_ref, o_ref = refs
    x = x_ref[...]                                                # (Nb, H, WC)
    Nb, H, WC = x.shape
    pad_val = -jnp.inf if is_max else 0.0
    zr = jnp.full((Nb, 1, WC), pad_val, x.dtype)
    xp = jnp.concatenate([zr, x, zr], axis=1)
    zc = jnp.full((Nb, H + 2, C), pad_val, x.dtype)
    xp = jnp.concatenate([zc, xp, zc], axis=2)
    acc = None
    for kx in range(3):
        col = lax.slice(xp, (0, 0, kx * C), (Nb, H + 2, kx * C + WC))
        for ky in range(3):
            sl = lax.slice(col, (0, ky, 0), (Nb, ky + H, WC))
            if acc is None:
                acc = sl
            elif is_max:
                acc = jnp.maximum(acc, sl)
            else:
                acc = acc + sl
    if not is_max:
        acc = acc * (1.0 / 9.0)    # count_include_pad=True (F.avg_pool2d default)
    if fuse:
        acc = acc + other_ref[...]
    o_ref[...] = acc.astype(o_ref.dtype)


# ----------------- stride-2 kernels (3-D layout, reduction cells) -----------------

def _pad_hw(x, ph, pw, value=0.0):
    H, W, C = x.shape
    if pw:
        side = jnp.full((H, pw, C), value, x.dtype)
        x = jnp.concatenate([side, x, side], axis=1)
    if ph:
        row = jnp.full((ph, x.shape[1], C), value, x.dtype)
        x = jnp.concatenate([row, x, row], axis=0)
    return x


def _dw_taps(w2d, K):
    C = w2d.shape[-1]
    return [w2d[i].reshape(1, 1, C) for i in range(K * K)]


def _depthwise3d(xp, taps, K, s, d, Ho, Wo):
    Hp, Wp, C = xp.shape
    hspan = (Ho - 1) * s + 1
    wspan = (Wo - 1) * s + 1
    acc = jnp.zeros((Ho, Wo, C), jnp.float32)
    for kx in range(K):
        col = lax.slice(xp, (0, kx * d, 0), (Hp, kx * d + wspan, C),
                        strides=(1, s, 1))
        for ky in range(K):
            rows = lax.slice(col, (ky * d, 0, 0), (ky * d + hspan, Wo, C),
                             strides=(s, 1, 1))
            acc = acc + rows * taps[ky * K + kx]
    return acc


def _pw_bn3d(h, pw_w, scale, bias, Ho, Wo):
    C = h.shape[-1]
    y = jnp.dot(h.reshape(Ho * Wo, C).astype(jnp.bfloat16), pw_w,
                preferred_element_type=jnp.float32)
    y = y * scale + bias
    return y.reshape(Ho, Wo, -1)


def _sep_conv_s2_kernel(*refs, K, s, Ho, Wo, fuse):
    if fuse:
        (x_ref, dw1_ref, pw1_ref, s1_ref, b1_ref,
         dw2_ref, pw2_ref, s2_ref, b2_ref, other_ref, o_ref) = refs
    else:
        (x_ref, dw1_ref, pw1_ref, s1_ref, b1_ref,
         dw2_ref, pw2_ref, s2_ref, b2_ref, o_ref) = refs
    pad = (K - 1) // 2
    x = jnp.maximum(x_ref[0], 0.0)
    h = _depthwise3d(_pad_hw(x, pad, pad), _dw_taps(dw1_ref[...], K), K, s, 1, Ho, Wo)
    h = _pw_bn3d(h, pw1_ref[...], s1_ref[...], b1_ref[...], Ho, Wo)
    h = jnp.maximum(h, 0.0)
    h = _depthwise3d(_pad_hw(h, pad, pad), _dw_taps(dw2_ref[...], K), K, 1, 1, Ho, Wo)
    h = _pw_bn3d(h, pw2_ref[...], s2_ref[...], b2_ref[...], Ho, Wo)
    if fuse:
        h = h + other_ref[0]
    o_ref[0] = h.astype(o_ref.dtype)


def _dil_conv_s2_kernel(*refs, K, s, d, Ho, Wo, fuse):
    if fuse:
        x_ref, dw_ref, pw_ref, s_ref, b_ref, other_ref, o_ref = refs
    else:
        x_ref, dw_ref, pw_ref, s_ref, b_ref, o_ref = refs
    pad = d * (K - 1) // 2
    x = jnp.maximum(x_ref[0], 0.0)
    h = _depthwise3d(_pad_hw(x, pad, pad), _dw_taps(dw_ref[...], K), K, s, d, Ho, Wo)
    h = _pw_bn3d(h, pw_ref[...], s_ref[...], b_ref[...], Ho, Wo)
    if fuse:
        h = h + other_ref[0]
    o_ref[0] = h.astype(o_ref.dtype)


def _pool_s2_kernel(*refs, s, Ho, Wo, is_max, fuse):
    if fuse:
        x_ref, other_ref, o_ref = refs
    else:
        x_ref, o_ref = refs
    K = 3
    x = x_ref[0]
    C = x.shape[2]
    xp = _pad_hw(x, 1, 1, value=(-jnp.inf if is_max else 0.0))
    Hp = xp.shape[0]
    hspan = (Ho - 1) * s + 1
    wspan = (Wo - 1) * s + 1
    acc = None
    for kx in range(K):
        col = lax.slice(xp, (0, kx, 0), (Hp, kx + wspan, C), strides=(1, s, 1))
        for ky in range(K):
            sl = lax.slice(col, (ky, 0, 0), (ky + hspan, Wo, C), strides=(s, 1, 1))
            if acc is None:
                acc = sl
            elif is_max:
                acc = jnp.maximum(acc, sl)
            else:
                acc = acc + sl
    if not is_max:
        acc = acc * (1.0 / (K * K))
    if fuse:
        acc = acc + other_ref[0]
    o_ref[0] = acc.astype(o_ref.dtype)


def _fact_reduce_kernel(*refs, Ho, Wo, fuse):
    """FactorizedReduce: relu -> even/odd subsample -> block-diag 1x1 matmul -> BN."""
    if fuse:
        x_ref, w_ref, s_ref, b_ref, other_ref, o_ref = refs
    else:
        x_ref, w_ref, s_ref, b_ref, o_ref = refs
    x = jnp.maximum(x_ref[0], 0.0)
    Cin = x.shape[-1]
    x1 = lax.slice(x, (0, 0, 0), (2 * Ho - 1, 2 * Wo - 1, Cin), strides=(2, 2, 1))
    x2 = lax.slice(x, (1, 1, 0), (2 * Ho, 2 * Wo, Cin), strides=(2, 2, 1))
    xx = jnp.concatenate([x1, x2], axis=-1).reshape(Ho * Wo, 2 * Cin)
    y = jnp.dot(xx.astype(jnp.bfloat16), w_ref[...], preferred_element_type=jnp.float32)
    y = y * s_ref[...] + b_ref[...]
    y = y.reshape(Ho, Wo, -1)
    if fuse:
        y = y + other_ref[0]
    o_ref[0] = y.astype(o_ref.dtype)


# ------------------------------ pallas_call wrappers ------------------------------

def _call_slab(kernel, x_nhwc, weights, c_out, other=None):
    """Stride-1 path: lane-dense slab blocks (Nb, H, W*C); Nb images per grid step.
    NHWC<->slab reshapes at the XLA level are free (contiguous)."""
    N, H, W, C = x_nhwc.shape
    wc_in, wc_out = W * C, W * c_out
    nb = _pick_nb(N, H * W * C * 4)
    in_specs = [pl.BlockSpec((nb, H, wc_in), lambda n: (n, 0, 0))]
    args = [x_nhwc.reshape(N, H, wc_in)]
    for w in weights:
        in_specs.append(pl.BlockSpec(w.shape, lambda n, _nd=w.ndim: (0,) * _nd))
        args.append(w)
    if other is not None:
        in_specs.append(pl.BlockSpec((nb, H, wc_out), lambda n: (n, 0, 0)))
        args.append(other.reshape(N, H, wc_out))
    out = pl.pallas_call(
        kernel,
        out_shape=jax.ShapeDtypeStruct((N, H, wc_out), x_nhwc.dtype),
        grid=(N // nb,),
        in_specs=in_specs,
        out_specs=pl.BlockSpec((nb, H, wc_out), lambda n: (n, 0, 0)),
        compiler_params=pltpu.CompilerParams(dimension_semantics=("parallel",)),
    )(*args)
    return out.reshape(N, H, W, c_out)


def _call_s2(kernel, x_nhwc, weights, out_hwc, other=None):
    """Stride-2 path (reduction cells): one image per step, 3-D (H, W, C) blocks."""
    N, H, W, C = x_nhwc.shape
    Ho, Wo, Co = out_hwc
    in_specs = [pl.BlockSpec((1, H, W, C), lambda n: (n, 0, 0, 0))]
    args = [x_nhwc]
    for w in weights:
        in_specs.append(pl.BlockSpec(w.shape, lambda n, _nd=w.ndim: (0,) * _nd))
        args.append(w)
    if other is not None:
        in_specs.append(pl.BlockSpec((1, Ho, Wo, Co), lambda n: (n, 0, 0, 0)))
        args.append(other)
    return pl.pallas_call(
        kernel,
        out_shape=jax.ShapeDtypeStruct((N, Ho, Wo, Co), x_nhwc.dtype),
        grid=(N,),
        in_specs=in_specs,
        out_specs=pl.BlockSpec((1, Ho, Wo, Co), lambda n: (n, 0, 0, 0)),
        compiler_params=pltpu.CompilerParams(dimension_semantics=("parallel",)),
    )(*args)


# -------------------------------- branch wrappers ---------------------------------

def _ws_pool(x, stride, is_max, other=None):
    N, H, W, C = x.shape
    fuse = other is not None
    if stride == 1:
        kern = functools.partial(_pool_slab_kernel, C=C, is_max=is_max, fuse=fuse)
        return _call_slab(kern, x, [], C, other)
    Ho = (H - 1) // stride + 1
    Wo = (W - 1) // stride + 1
    kern = functools.partial(_pool_s2_kernel, s=stride, Ho=Ho, Wo=Wo,
                             is_max=is_max, fuse=fuse)
    return _call_s2(kern, x, [], (Ho, Wo, C), other)


def _ws_sep_conv(x, p, idx, stride, k, other=None):
    N, H, W, C = x.shape
    fuse = other is not None
    s1, b1 = _bn_fold(p['bn1_g'][idx], p['bn1_b'][idx], p['bn1_rm'], p['bn1_rv'])
    s2, b2 = _bn_fold(p['bn2_g'][idx], p['bn2_b'][idx], p['bn2_rm'], p['bn2_rv'])
    if stride == 1:
        weights = [_tile_cols(_prep_dw(p['w1_dw'][idx]), W), _bd_pw(p['w1_pw'][idx], W),
                   _tile_cols(s1, W), _tile_cols(b1, W),
                   _tile_cols(_prep_dw(p['w2_dw'][idx]), W), _bd_pw(p['w2_pw'][idx], W),
                   _tile_cols(s2, W), _tile_cols(b2, W)]
        kern = functools.partial(_sep_conv_slab_kernel, K=k, C=C, fuse=fuse)
        return _call_slab(kern, x, weights, C, other)
    pad = (k - 1) // 2
    Ho = (H + 2 * pad - k) // stride + 1
    Wo = (W + 2 * pad - k) // stride + 1
    weights = [_prep_dw(p['w1_dw'][idx]), _prep_pw(p['w1_pw'][idx]).astype(jnp.bfloat16),
               s1, b1,
               _prep_dw(p['w2_dw'][idx]), _prep_pw(p['w2_pw'][idx]).astype(jnp.bfloat16),
               s2, b2]
    kern = functools.partial(_sep_conv_s2_kernel, K=k, s=stride, Ho=Ho, Wo=Wo, fuse=fuse)
    return _call_s2(kern, x, weights, (Ho, Wo, C), other)


def _ws_dil_conv(x, p, idx, stride, k, dilation, other=None):
    N, H, W, C = x.shape
    fuse = other is not None
    sc, bi = _bn_fold(p['bn_g'][idx], p['bn_b'][idx], p['bn_rm'], p['bn_rv'])
    if stride == 1:
        weights = [_tile_cols(_prep_dw(p['w_dw'][idx]), W), _bd_pw(p['w_pw'][idx], W),
                   _tile_cols(sc, W), _tile_cols(bi, W)]
        kern = functools.partial(_dil_conv_slab_kernel, K=k, d=dilation, C=C, fuse=fuse)
        return _call_slab(kern, x, weights, C, other)
    pad = dilation * (k - 1) // 2
    Ho = (H + 2 * pad - dilation * (k - 1) - 1) // stride + 1
    Wo = (W + 2 * pad - dilation * (k - 1) - 1) // stride + 1
    weights = [_prep_dw(p['w_dw'][idx]), _prep_pw(p['w_pw'][idx]).astype(jnp.bfloat16),
               sc, bi]
    kern = functools.partial(_dil_conv_s2_kernel, K=k, s=stride, d=dilation,
                             Ho=Ho, Wo=Wo, fuse=fuse)
    return _call_s2(kern, x, weights, (Ho, Wo, C), other)


def _factorized_reduce(x, p, other=None):
    N, H, W, Cin = x.shape
    assert H % 2 == 0 and W % 2 == 0
    Ho, Wo = H // 2, W // 2
    fuse = other is not None
    Cout = p['bn_g'].shape[0]
    half = Cout // 2
    w1 = jnp.transpose(p['w1'][:, :, 0, 0], (1, 0))
    w2 = jnp.transpose(p['w2'][:, :, 0, 0], (1, 0))
    wbd = jnp.zeros((2 * Cin, Cout), jnp.float32)
    wbd = wbd.at[:Cin, :half].set(w1).at[Cin:, half:].set(w2).astype(jnp.bfloat16)
    sc, bi = _bn_fold(p['bn_g'], p['bn_b'], p['bn_rm'], p['bn_rv'])
    kern = functools.partial(_fact_reduce_kernel, Ho=Ho, Wo=Wo, fuse=fuse)
    return _call_s2(kern, x, [wbd, sc, bi], (Ho, Wo, Cout), other)


# --------------------------------- parameter init ---------------------------------

def _init_sep(key, npi, C, k):
    ks = jax.random.split(key, 8)
    w = lambda kk, shape: 0.1 * jax.random.normal(kk, shape, jnp.float32)
    return dict(
        w1_dw=w(ks[0], (npi, C, 1, k, k)), w1_pw=w(ks[1], (npi, C, C, 1, 1)),
        bn1_g=1.0 + 0.1 * jax.random.normal(ks[2], (npi, C), jnp.float32),
        bn1_b=0.1 * jax.random.normal(ks[3], (npi, C), jnp.float32),
        bn1_rm=jnp.zeros((C,), jnp.float32), bn1_rv=jnp.ones((C,), jnp.float32),
        w2_dw=w(ks[4], (npi, C, 1, k, k)), w2_pw=w(ks[5], (npi, C, C, 1, 1)),
        bn2_g=1.0 + 0.1 * jax.random.normal(ks[6], (npi, C), jnp.float32),
        bn2_b=0.1 * jax.random.normal(ks[7], (npi, C), jnp.float32),
        bn2_rm=jnp.zeros((C,), jnp.float32), bn2_rv=jnp.ones((C,), jnp.float32),
    )


def _init_dil(key, npi, C, k):
    ks = jax.random.split(key, 4)
    return dict(
        w_dw=0.1 * jax.random.normal(ks[0], (npi, C, 1, k, k), jnp.float32),
        w_pw=0.1 * jax.random.normal(ks[1], (npi, C, C, 1, 1), jnp.float32),
        bn_g=1.0 + 0.1 * jax.random.normal(ks[2], (npi, C), jnp.float32),
        bn_b=0.1 * jax.random.normal(ks[3], (npi, C), jnp.float32),
        bn_rm=jnp.zeros((C,), jnp.float32), bn_rv=jnp.ones((C,), jnp.float32),
    )


def _init_fact(key, Cin, Cout):
    ks = jax.random.split(key, 4)
    return dict(
        w1=0.1 * jax.random.normal(ks[0], (Cout // 2, Cin, 1, 1), jnp.float32),
        w2=0.1 * jax.random.normal(ks[1], (Cout // 2, Cin, 1, 1), jnp.float32),
        bn_g=1.0 + 0.1 * jax.random.normal(ks[2], (Cout,), jnp.float32),
        bn_b=0.1 * jax.random.normal(ks[3], (Cout,), jnp.float32),
        bn_rm=jnp.zeros((Cout,), jnp.float32), bn_rv=jnp.ones((Cout,), jnp.float32),
    )


# ---------------------------------- Node module ------------------------------------

class NodePallas:
    """JAX/Pallas port of model_search.Node (eval-mode forward).

    WSBN semantics match NAO: per-op gamma/beta, shared running_mean/running_var.
    `forward_nhwc` is the native (transpose-free) path; `__call__` adds the
    NCHW boundary transposes for torch parity only.
    """

    def __init__(self, prev_layers, channels, stride, drop_path_keep_prob=None,
                 node_id=0, layer_id=0, layers=0, steps=0, *, key):
        self.channels = channels
        self.stride = stride
        self.drop_path_keep_prob = drop_path_keep_prob
        self.node_id = node_id
        self.layer_id = layer_id
        self.layers = layers
        self.steps = steps
        npi = node_id + 2
        ks = jax.random.split(key, 12)
        self.p = {
            'x_sep3': _init_sep(ks[0], npi, channels, 3),
            'x_sep5': _init_sep(ks[1], npi, channels, 5),
            'x_dil3': _init_dil(ks[2], npi, channels, 3),
            'x_dil5': _init_dil(ks[3], npi, channels, 5),
            'y_sep3': _init_sep(ks[4], npi, channels, 3),
            'y_sep5': _init_sep(ks[5], npi, channels, 5),
            'y_dil3': _init_dil(ks[6], npi, channels, 3),
            'y_dil5': _init_dil(ks[7], npi, channels, 5),
        }
        if stride > 1:
            assert stride == 2
            self.p['x_idr1'] = _init_fact(ks[8], prev_layers[0][-1], channels)
            self.p['x_idr2'] = _init_fact(ks[9], prev_layers[1][-1], channels)
            self.p['y_idr1'] = _init_fact(ks[10], prev_layers[0][-1], channels)
            self.p['y_idr2'] = _init_fact(ks[11], prev_layers[1][-1], channels)
        self.out_shape = [prev_layers[0][0] // stride, prev_layers[0][1] // stride, channels]

    def _branch(self, h, h_id, h_op, prefix, other=None):
        stride = self.stride if h_id in (0, 1) else 1
        if h_op == 0:
            return _ws_pool(h, stride, True, other)
        if h_op == 1:
            return _ws_pool(h, stride, False, other)
        if h_op == 2:
            if stride > 1:
                key = f'{prefix}_idr1' if h_id == 0 else f'{prefix}_idr2'
                return _factorized_reduce(h, self.p[key], other)
            return h if other is None else h + other
        if h_op == 3:
            return _ws_sep_conv(h, self.p[f'{prefix}_sep3'], h_id, stride, 3, other)
        if h_op == 4:
            return _ws_sep_conv(h, self.p[f'{prefix}_sep5'], h_id, stride, 5, other)
        if h_op == 5:
            return _ws_dil_conv(h, self.p[f'{prefix}_dil3'], h_id, stride, 3, 2, other)
        if h_op == 6:
            return _ws_dil_conv(h, self.p[f'{prefix}_dil5'], h_id, stride, 5, 2, other)
        raise ValueError(f"unknown op {h_op}")

    def forward_nhwc(self, x, x_id, x_op, y, y_id, y_op, step=0, bn_train=False):
        """Native NHWC forward.  The x+y add is fused into the second branch's
        kernel (or into the non-identity branch when one op is identity)."""
        # TODO(synk): apply_drop_path is training-only stochastic scaling and
        # bn_train=True uses batch statistics; this eval-mode forward treats
        # drop_path as identity and always uses running statistics.
        xs = self.stride if x_id in (0, 1) else 1
        ys = self.stride if y_id in (0, 1) else 1
        x_ident = (x_op == 2 and xs == 1)
        y_ident = (y_op == 2 and ys == 1)
        if x_ident and y_ident:
            return x + y                       # rare corner case: plain add
        if x_ident:
            return self._branch(y, y_id, y_op, 'y', other=x)
        if y_ident:
            return self._branch(x, x_id, x_op, 'x', other=y)
        xh = self._branch(x, x_id, x_op, 'x')
        return self._branch(y, y_id, y_op, 'y', other=xh)

    def __call__(self, x, x_id, x_op, y, y_id, y_op, step=0, bn_train=False):
        # NCHW boundary wrapper (torch parity).  Within a cell/network use
        # forward_nhwc so the NCHW<->NHWC relayouts happen only at the model edge.
        out = self.forward_nhwc(jnp.transpose(x, (0, 2, 3, 1)), x_id, x_op,
                                jnp.transpose(y, (0, 2, 3, 1)), y_id, y_op,
                                step, bn_train)
        return jnp.transpose(out, (0, 3, 1, 2))


# ------------------------------- demo / self-check ---------------------------------

def _pool_ref_nchw(x, stride, is_max):
    """Pure-JAX 3x3 pool reference (NCHW) used only for the demo numeric check."""
    pad_val = -jnp.inf if is_max else 0.0
    xp = jnp.pad(x, ((0, 0), (0, 0), (1, 1), (1, 1)), constant_values=pad_val)
    H, W = x.shape[2], x.shape[3]
    Ho = (H - 1) // stride + 1
    Wo = (W - 1) // stride + 1
    win = [xp[:, :, ky:ky + (Ho - 1) * stride + 1:stride,
              kx:kx + (Wo - 1) * stride + 1:stride]
           for ky in range(3) for kx in range(3)]
    st = jnp.stack(win, 0)
    return jnp.max(st, 0) if is_max else jnp.mean(st, 0)


if __name__ == "__main__":
    key = jax.random.PRNGKey(0)
    k_param, k_param2, k_x, k_y = jax.random.split(key, 4)

    B, C, H, W = 2, 32, 16, 16
    prev_layers = [[H, W, C], [H, W, C]]

    x = jax.random.normal(k_x, (B, C, H, W), jnp.float32)
    y = jax.random.normal(k_y, (B, C, H, W), jnp.float32)

    # ---- stride-1 node -------------------------------------------------------
    node1 = NodePallas(prev_layers, C, 1, drop_path_keep_prob=0.9,
                       node_id=0, layer_id=0, layers=6, steps=100, key=k_param)
    fwd1 = jax.jit(node1.__call__, static_argnums=(1, 2, 4, 5))

    out_a = jax.block_until_ready(fwd1(x, 0, 3, y, 1, 5))   # sep3(x) + dil3(y)
    out_b = jax.block_until_ready(fwd1(x, 0, 0, y, 1, 1))   # maxpool(x) + avgpool(y)
    out_c = jax.block_until_ready(fwd1(x, 0, 2, y, 1, 0))   # identity(x) + maxpool(y)

    assert out_a.shape == (B, C, H, W), out_a.shape
    assert out_b.shape == (B, C, H, W), out_b.shape
    assert out_c.shape == (B, C, H, W), out_c.shape
    assert bool(jnp.all(jnp.isfinite(out_a)))
    assert bool(jnp.all(jnp.isfinite(out_b)))
    assert bool(jnp.all(jnp.isfinite(out_c)))

    # pooling / identity paths have exact references -> check plumbing + fused add
    ref_b = _pool_ref_nchw(x, 1, True) + _pool_ref_nchw(y, 1, False)
    assert bool(jnp.allclose(out_b, ref_b, rtol=1e-5, atol=1e-5)), "pool mismatch"
    ref_c = x + _pool_ref_nchw(y, 1, True)
    assert bool(jnp.allclose(out_c, ref_c, rtol=1e-5, atol=1e-5)), "identity mismatch"

    # ---- stride-2 (reduction) node -------------------------------------------
    node2 = NodePallas(prev_layers, C, 2, drop_path_keep_prob=0.9,
                       node_id=0, layer_id=2, layers=6, steps=100, key=k_param2)
    fwd2 = jax.jit(node2.__call__, static_argnums=(1, 2, 4, 5))

    out_d = jax.block_until_ready(fwd2(x, 0, 2, y, 1, 4))   # FactorizedReduce + sep5 s2
    out_e = jax.block_until_ready(fwd2(x, 0, 0, y, 1, 1))   # maxpool s2 + avgpool s2
    assert out_d.shape == (B, C, H // 2, W // 2), out_d.shape
    assert out_e.shape == (B, C, H // 2, W // 2), out_e.shape
    assert bool(jnp.all(jnp.isfinite(out_d)))
    assert bool(jnp.all(jnp.isfinite(out_e)))

    ref_e = _pool_ref_nchw(x, 2, True) + _pool_ref_nchw(y, 2, False)
    assert bool(jnp.allclose(out_e, ref_e, rtol=1e-5, atol=1e-5)), "s2 pool mismatch"

    print("KERNEL_OK")
</pallas_src>

<mosaic_0001>
module attributes {stable_mosaic.version = 11 : i64} {
  func.func @_sep_conv_slab_kernel(%arg0: i32, %arg1: memref<1x16x512xf32, #tpu.memory_space<vmem>>, %arg2: memref<9x512xf32, #tpu.memory_space<vmem>>, %arg3: memref<512x512xbf16, #tpu.memory_space<vmem>>, %arg4: memref<1x512xf32, #tpu.memory_space<vmem>>, %arg5: memref<1x512xf32, #tpu.memory_space<vmem>>, %arg6: memref<9x512xf32, #tpu.memory_space<vmem>>, %arg7: memref<512x512xbf16, #tpu.memory_space<vmem>>, %arg8: memref<1x512xf32, #tpu.memory_space<vmem>>, %arg9: memref<1x512xf32, #tpu.memory_space<vmem>>, %arg10: memref<1x16x512xf32, #tpu.memory_space<vmem>>) attributes {dimension_semantics = [#tpu.dimension_semantics<parallel>], iteration_bounds = array<i64: 2>, scalar_prefetch = 0 : i64, scratch_operands = 0 : i64, tpu.core_type = #tpu.core_type<tc>, window_params = [{transform_indices = @transform_0, window_bounds = array<i64: 1, 16, 512>}, {pipeline_mode = #tpu.pipeline_mode<synchronous>, transform_indices = @transform_1, window_bounds = array<i64: 9, 512>}, {pipeline_mode = #tpu.pipeline_mode<synchronous>, transform_indices = @transform_2, window_bounds = array<i64: 512, 512>}, {pipeline_mode = #tpu.pipeline_mode<synchronous>, transform_indices = @transform_3, window_bounds = array<i64: 1, 512>}, {pipeline_mode = #tpu.pipeline_mode<synchronous>, transform_indices = @transform_4, window_bounds = array<i64: 1, 512>}, {pipeline_mode = #tpu.pipeline_mode<synchronous>, transform_indices = @transform_5, window_bounds = array<i64: 9, 512>}, {pipeline_mode = #tpu.pipeline_mode<synchronous>, transform_indices = @transform_6, window_bounds = array<i64: 512, 512>}, {pipeline_mode = #tpu.pipeline_mode<synchronous>, transform_indices = @transform_7, window_bounds = array<i64: 1, 512>}, {pipeline_mode = #tpu.pipeline_mode<synchronous>, transform_indices = @transform_8, window_bounds = array<i64: 1, 512>}, {transform_indices = @transform_9, window_bounds = array<i64: 1, 16, 512>}]} {
    %c0 = arith.constant 0 : index
    %c0_0 = arith.constant 0 : index
    %c0_1 = arith.constant 0 : index
    %0 = vector.load %arg1[%c0, %c0_0, %c0_1] : memref<1x16x512xf32, #tpu.memory_space<vmem>>, vector<1x16x512xf32>
    %cst = arith.constant 0.000000e+00 : f32
    %1 = vector.broadcast %cst : f32 to vector<1x16x512xf32>
    %2 = arith.maximumf %0, %1 : vector<1x16x512xf32>
    %cst_2 = arith.constant 0.000000e+00 : f32
    %3 = vector.broadcast %cst_2 : f32 to vector<1x1x512xf32>
    %4 = tpu.concatenate %3, %2, %3 in 1 : vector<1x1x512xf32>, vector<1x16x512xf32>, vector<1x1x512xf32> -> vector<1x18x512xf32>
    %cst_3 = arith.constant 0.000000e+00 : f32
    %5 = vector.broadcast %cst_3 : f32 to vector<1x18x32xf32>
    %6 = tpu.concatenate %5, %4, %5 in 2 : vector<1x18x32xf32>, vector<1x18x512xf32>, vector<1x18x32xf32> -> vector<1x18x576xf32>
    %c0_4 = arith.constant 0 : index
    %c0_5 = arith.constant 0 : index
    %7 = vector.load %arg2[%c0_4, %c0_5] : memref<9x512xf32, #tpu.memory_space<vmem>>, vector<9x512xf32>
    %8 = vector.extract_strided_slice %7 {offsets = [0, 0], sizes = [1, 512], strides = [1, 1]} : vector<9x512xf32> to vector<1x512xf32>
    %9 = vector.shape_cast %8 : vector<1x512xf32> to vector<512xf32>
    %10 = vector.shape_cast %9 : vector<512xf32> to vector<1x1x512xf32>
    %11 = vector.extract_strided_slice %7 {offsets = [1, 0], sizes = [1, 512], strides = [1, 1]} : vector<9x512xf32> to vector<1x512xf32>
    %12 = vector.shape_cast %11 : vector<1x512xf32> to vector<512xf32>
    %13 = vector.shape_cast %12 : vector<512xf32> to vector<1x1x512xf32>
    %14 = vector.extract_strided_slice %7 {offsets = [2, 0], sizes = [1, 512], strides = [1, 1]} : vector<9x512xf32> to vector<1x512xf32>
    %15 = vector.shape_cast %14 : vector<1x512xf32> to vector<512xf32>
    %16 = vector.shape_cast %15 : vector<512xf32> to vector<1x1x512xf32>
    %17 = vector.extract_strided_slice %7 {offsets = [3, 0], sizes = [1, 512], strides = [1, 1]} : vector<9x512xf32> to vector<1x512xf32>
    %18 = vector.shape_cast %17 : vector<1x512xf32> to vector<512xf32>
    %19 = vector.shape_cast %18 : vector<512xf32> to vector<1x1x512xf32>
    %20 = vector.extract_strided_slice %7 {offsets = [4, 0], sizes = [1, 512], strides = [1, 1]} : vector<9x512xf32> to vector<1x512xf32>
    %21 = vector.shape_cast %20 : vector<1x512xf32> to vector<512xf32>
    %22 = vector.shape_cast %21 : vector<512xf32> to vector<1x1x512xf32>
    %23 = vector.extract_strided_slice %7 {offsets = [5, 0], sizes = [1, 512], strides = [1, 1]} : vector<9x512xf32> to vector<1x512xf32>
    %24 = vector.shape_cast %23 : vector<1x512xf32> to vector<512xf32>
    %25 = vector.shape_cast %24 : vector<512xf32> to vector<1x1x512xf32>
    %26 = vector.extract_strided_slice %7 {offsets = [6, 0], sizes = [1, 512], strides = [1, 1]} : vector<9x512xf32> to vector<1x512xf32>
    %27 = vector.shape_cast %26 : vector<1x512xf32> to vector<512xf32>
    %28 = vector.shape_cast %27 : vector<512xf32> to vector<1x1x512xf32>
    %29 = vector.extract_strided_slice %7 {offsets = [7, 0], sizes = [1, 512], strides = [1, 1]} : vector<9x512xf32> to vector<1x512xf32>
    %30 = vector.shape_cast %29 : vector<1x512xf32> to vector<512xf32>
    %31 = vector.shape_cast %30 : vector<512xf32> to vector<1x1x512xf32>
    %32 = vector.extract_strided_slice %7 {offsets = [8, 0], sizes = [1, 512], strides = [1, 1]} : vector<9x512xf32> to vector<1x512xf32>
    %33 = vector.shape_cast %32 : vector<1x512xf32> to vector<512xf32>
    %34 = vector.shape_cast %33 : vector<512xf32> to vector<1x1x512xf32>
    %cst_6 = arith.constant 0.000000e+00 : f32
    %35 = vector.broadcast %cst_6 : f32 to vector<1x16x512xf32>
    %36 = vector.extract_strided_slice %6 {offsets = [0, 0, 0], sizes = [1, 18, 512], strides = [1, 1, 1]} : vector<1x18x576xf32> to vector<1x18x512xf32>
    %37 = vector.extract_strided_slice %36 {offsets = [0, 0, 0], sizes = [1, 16, 512], strides = [1, 1, 1]} : vector<1x18x512xf32> to vector<1x16x512xf32>
    %38 = vector.broadcast %10 : vector<1x1x512xf32> to vector<1x16x512xf32>
    %39 = arith.mulf %37, %38 : vector<1x16x512xf32>
    %40 = arith.addf %35, %39 : vector<1x16x512xf32>
    %41 = vector.extract_strided_slice %36 {offsets = [0, 1, 0], sizes = [1, 16, 512], strides = [1, 1, 1]} : vector<1x18x512xf32> to vector<1x16x512xf32>
    %42 = vector.broadcast %19 : vector<1x1x512xf32> to vector<1x16x512xf32>
    %43 = arith.mulf %41, %42 : vector<1x16x512xf32>
    %44 = arith.addf %40, %43 : vector<1x16x512xf32>
    %45 = vector.extract_strided_slice %36 {offsets = [0, 2, 0], sizes = [1, 16, 512], strides = [1, 1, 1]} : vector<1x18x512xf32> to vector<1x16x512xf32>
    %46 = vector.broadcast %28 : vector<1x1x512xf32> to vector<1x16x512xf32>
    %47 = arith.mulf %45, %46 : vector<1x16x512xf32>
    %48 = arith.addf %44, %47 : vector<1x16x512xf32>
    %49 = vector.extract_strided_slice %6 {offsets = [0, 0, 32], sizes = [1, 18, 512], strides = [1, 1, 1]} : vector<1x18x576xf32> to vector<1x18x512xf32>
    %50 = vector.extract_strided_slice %49 {offsets = [0, 0, 0], sizes = [1, 16, 512], strides = [1, 1, 1]} : vector<1x18x512xf32> to vector<1x16x512xf32>
    %51 = vector.broadcast %13 : vector<1x1x512xf32> to vector<1x16x512xf32>
    %52 = arith.mulf %50, %51 : vector<1x16x512xf32>
    %53 = arith.addf %48, %52 : vector<1x16x512xf32>
    %54 = vector.extract_strided_slice %49 {offsets = [0, 1, 0], sizes = [1, 16, 512], strides = [1, 1, 1]} : vector<1x18x512xf32> to vector<1x16x512xf32>
    %55 = vector.broadcast %22 : vector<1x1x512xf32> to vector<1x16x512xf32>
    %56 = arith.mulf %54, %55 : vector<1x16x512xf32>
    %57 = arith.addf %53, %56 : vector<1x16x512xf32>
    %58 = vector.extract_strided_slice %49 {offsets = [0, 2, 0], sizes = [1, 16, 512], strides = [1, 1, 1]} : vector<1x18x512xf32> to vector<1x16x512xf32>
    %59 = vector.broadcast %31 : vector<1x1x512xf32> to vector<1x16x512xf32>
    %60 = arith.mulf %58, %59 : vector<1x16x512xf32>
    %61 = arith.addf %57, %60 : vector<1x16x512xf32>
    %62 = vector.extract_strided_slice %6 {offsets = [0, 0, 64], sizes = [1, 18, 512], strides = [1, 1, 1]} : vector<1x18x576xf32> to vector<1x18x512xf32>
    %63 = vector.extract_strided_slice %62 {offsets = [0, 0, 0], sizes = [1, 16, 512], strides = [1, 1, 1]} : vector<1x18x512xf32> to vector<1x16x512xf32>
    %64 = vector.broadcast %16 : vector<1x1x512xf32> to vector<1x16x512xf32>
    %65 = arith.mulf %63, %64 : vector<1x16x512xf32>
    %66 = arith.addf %61, %65 : vector<1x16x512xf32>
    %67 = vector.extract_strided_slice %62 {offsets = [0, 1, 0], sizes = [1, 16, 512], strides = [1, 1, 1]} : vector<1x18x512xf32> to vector<1x16x512xf32>
    %68 = vector.broadcast %25 : vector<1x1x512xf32> to vector<1x16x512xf32>
    %69 = arith.mulf %67, %68 : vector<1x16x512xf32>
    %70 = arith.addf %66, %69 : vector<1x16x512xf32>
    %71 = vector.extract_strided_slice %62 {offsets = [0, 2, 0], sizes = [1, 16, 512], strides = [1, 1, 1]} : vector<1x18x512xf32> to vector<1x16x512xf32>
    %72 = vector.broadcast %34 : vector<1x1x512xf32> to vector<1x16x512xf32>
    %73 = arith.mulf %71, %72 : vector<1x16x512xf32>
    %74 = arith.addf %70, %73 : vector<1x16x512xf32>
    %75 = vector.shape_cast %74 : vector<1x16x512xf32> to vector<16x512xf32>
    %76 = arith.truncf %75 : vector<16x512xf32> to vector<16x512xbf16>
    %c0_7 = arith.constant 0 : index
    %c0_8 = arith.constant 0 : index
    %77 = vector.load %arg3[%c0_7, %c0_8] : memref<512x512xbf16, #tpu.memory_space<vmem>>, vector<512x512xbf16>
    %cst_9 = arith.constant dense<0.000000e+00> : vector<16x512xf32>
    %78 = tpu.matmul %76, %77, %cst_9 {dimension_numbers = #tpu.dot_dimension_numbers<[1], [0], [0], [1], [0, 0, 1, 1], [], []>} : vector<16x512xbf16>, vector<512x512xbf16>, vector<16x512xf32> -> vector<16x512xf32>
    %c0_10 = arith.constant 0 : index
    %c0_11 = arith.constant 0 : index
    %79 = vector.load %arg4[%c0_10, %c0_11] : memref<1x512xf32, #tpu.memory_space<vmem>>, vector<1x512xf32>
    %80 = vector.broadcast %79 : vector<1x512xf32> to vector<16x512xf32>
    %81 = arith.mulf %78, %80 : vector<16x512xf32>
    %c0_12 = arith.constant 0 : index
    %c0_13 = arith.constant 0 : index
    %82 = vector.load %arg5[%c0_12, %c0_13] : memref<1x512xf32, #tpu.memory_space<vmem>>, vector<1x512xf32>
    %83 = vector.broadcast %82 : vector<1x512xf32> to vector<16x512xf32>
    %84 = arith.addf %81, %83 : vector<16x512xf32>
    %85 = vector.shape_cast %84 : vector<16x512xf32> to vector<1x16x512xf32>
    %cst_14 = arith.constant 0.000000e+00 : f32
    %86 = vector.broadcast %cst_14 : f32 to vector<1x16x512xf32>
    %87 = arith.maximumf %85, %86 : vector<1x16x512xf32>
    %cst_15 = arith.constant 0.000000e+00 : f32
    %88 = vector.broadcast %cst_15 : f32 to vector<1x1x512xf32>
    %89 = tpu.concatenate %88, %87, %88 in 1 : vector<1x1x512xf32>, vector<1x16x512xf32>, vector<1x1x512xf32> -> vector<1x18x512xf32>
    %cst_16 = arith.constant 0.000000e+00 : f32
    %90 = vector.broadcast %cst_16 : f32 to vector<1x18x32xf32>
    %91 = tpu.concatenate %90, %89, %90 in 2 : vector<1x18x32xf32>, vector<1x18x512xf32>, vector<1x18x32xf32> -> vector<1x18x576xf32>
    %c0_17 = arith.constant 0 : index
    %c0_18 = arith.constant 0 : index
    %92 = vector.load %arg6[%c0_17, %c0_18] : memref<9x512xf32, #tpu.memory_space<vmem>>, vector<9x512xf32>
    %93 = vector.extract_strided_slice %92 {offsets = [0, 0], sizes = [1, 512], strides = [1, 1]} : vector<9x512xf32> to vector<1x512xf32>
    %94 = vector.shape_cast %93 : vector<1x512xf32> to vector<512xf32>
    %95 = vector.shape_cast %94 : vector<512xf32> to vector<1x1x512xf32>
    %96 = vector.extract_strided_slice %92 {offsets = [1, 0], sizes = [1, 512], strides = [1, 1]} : vector<9x512xf32> to vector<1x512xf32>
    %97 = vector.shape_cast %96 : vector<1x512xf32> to vector<512xf32>
    %98 = vector.shape_cast %97 : vector<512xf32> to vector<1x1x512xf32>
    %99 = vector.extract_strided_slice %92 {offsets = [2, 0], sizes = [1, 512], strides = [1, 1]} : vector<9x512xf32> to vector<1x512xf32>
    %100 = vector.shape_cast %99 : vector<1x512xf32> to vector<512xf32>
    %101 = vector.shape_cast %100 : vector<512xf32> to vector<1x1x512xf32>
    %102 = vector.extract_strided_slice %92 {offsets = [3, 0], sizes = [1, 512], strides = [1, 1]} : vector<9x512xf32> to vector<1x512xf32>
    %103 = vector.shape_cast %102 : vector<1x512xf32> to vector<512xf32>
    %104 = vector.shape_cast %103 : vector<512xf32> to vector<1x1x512xf32>
    %105 = vector.extract_strided_slice %92 {offsets = [4, 0], sizes = [1, 512], strides = [1, 1]} : vector<9x512xf32> to vector<1x512xf32>
    %106 = vector.shape_cast %105 : vector<1x512xf32> to vector<512xf32>
    %107 = vector.shape_cast %106 : vector<512xf32> to vector<1x1x512xf32>
    %108 = vector.extract_strided_slice %92 {offsets = [5, 0], sizes = [1, 512], strides = [1, 1]} : vector<9x512xf32> to vector<1x512xf32>
    %109 = vector.shape_cast %108 : vector<1x512xf32> to vector<512xf32>
    %110 = vector.shape_cast %109 : vector<512xf32> to vector<1x1x512xf32>
    %111 = vector.extract_strided_slice %92 {offsets = [6, 0], sizes = [1, 512], strides = [1, 1]} : vector<9x512xf32> to vector<1x512xf32>
    %112 = vector.shape_cast %111 : vector<1x512xf32> to vector<512xf32>
    %113 = vector.shape_cast %112 : vector<512xf32> to vector<1x1x512xf32>
    %114 = vector.extract_strided_slice %92 {offsets = [7, 0], sizes = [1, 512], strides = [1, 1]} : vector<9x512xf32> to vector<1x512xf32>
    %115 = vector.shape_cast %114 : vector<1x512xf32> to vector<512xf32>
    %116 = vector.shape_cast %115 : vector<512xf32> to vector<1x1x512xf32>
    %117 = vector.extract_strided_slice %92 {offsets = [8, 0], sizes = [1, 512], strides = [1, 1]} : vector<9x512xf32> to vector<1x512xf32>
    %118 = vector.shape_cast %117 : vector<1x512xf32> to vector<512xf32>
    %119 = vector.shape_cast %118 : vector<512xf32> to vector<1x1x512xf32>
    %cst_19 = arith.constant 0.000000e+00 : f32
    %120 = vector.broadcast %cst_19 : f32 to vector<1x16x512xf32>
    %121 = vector.extract_strided_slice %91 {offsets = [0, 0, 0], sizes = [1, 18, 512], strides = [1, 1, 1]} : vector<1x18x576xf32> to vector<1x18x512xf32>
    %122 = vector.extract_strided_slice %121 {offsets = [0, 0, 0], sizes = [1, 16, 512], strides = [1, 1, 1]} : vector<1x18x512xf32> to vector<1x16x512xf32>
    %123 = vector.broadcast %95 : vector<1x1x512xf32> to vector<1x16x512xf32>
    %124 = arith.mulf %122, %123 : vector<1x16x512xf32>
    %125 = arith.addf %120, %124 : vector<1x16x512xf32>
    %126 = vector.extract_strided_slice %121 {offsets = [0, 1, 0], sizes = [1, 16, 512], strides = [1, 1, 1]} : vector<1x18x512xf32> to vector<1x16x512xf32>
    %127 = vector.broadcast %104 : vector<1x1x512xf32> to vector<1x16x512xf32>
    %128 = arith.mulf %126, %127 : vector<1x16x512xf32>
    %129 = arith.addf %125, %128 : vector<1x16x512xf32>
    %130 = vector.extract_strided_slice %121 {offsets = [0, 2, 0], sizes = [1, 16, 512], strides = [1, 1, 1]} : vector<1x18x512xf32> to vector<1x16x512xf32>
    %131 = vector.broadcast %113 : vector<1x1x512xf32> to vector<1x16x512xf32>
    %132 = arith.mulf %130, %131 : vector<1x16x512xf32>
    %133 = arith.addf %129, %132 : vector<1x16x512xf32>
    %134 = vector.extract_strided_slice %91 {offsets = [0, 0, 32], sizes = [1, 18, 512], strides = [1, 1, 1]} : vector<1x18x576xf32> to vector<1x18x512xf32>
    %135 = vector.extract_strided_slice %134 {offsets = [0, 0, 0], sizes = [1, 16, 512], strides = [1, 1, 1]} : vector<1x18x512xf32> to vector<1x16x512xf32>
    %136 = vector.broadcast %98 : vector<1x1x512xf32> to vector<1x16x512xf32>
    %137 = arith.mulf %135, %136 : vector<1x16x512xf32>
    %138 = arith.addf %133, %137 : vector<1x16x512xf32>
    %139 = vector.extract_strided_slice %134 {offsets = [0, 1, 0], sizes = [1, 16, 512], strides = [1, 1, 1]} : vector<1x18x512xf32> to vector<1x16x512xf32>
    %140 = vector.broadcast %107 : vector<1x1x512xf32> to vector<1x16x512xf32>
    %141 = arith.mulf %139, %140 : vector<1x16x512xf32>
    %142 = arith.addf %138, %141 : vector<1x16x512xf32>
    %143 = vector.extract_strided_slice %134 {offsets = [0, 2, 0], sizes = [1, 16, 512], strides = [1, 1, 1]} : vector<1x18x512xf32> to vector<1x16x512xf32>
    %144 = vector.broadcast %116 : vector<1x1x512xf32> to vector<1x16x512xf32>
    %145 = arith.mulf %143, %144 : vector<1x16x512xf32>
    %146 = arith.addf %142, %145 : vector<1x16x512xf32>
    %147 = vector.extract_strided_slice %91 {offsets = [0, 0, 64], sizes = [1, 18, 512], strides = [1, 1, 1]} : vector<1x18x576xf32> to vector<1x18x512xf32>
    %148 = vector.extract_strided_slice %147 {offsets = [0, 0, 0], sizes = [1, 16, 512], strides = [1, 1, 1]} : vector<1x18x512xf32> to vector<1x16x512xf32>
    %149 = vector.broadcast %101 : vector<1x1x512xf32> to vector<1x16x512xf32>
    %150 = arith.mulf %148, %149 : vector<1x16x512xf32>
    %151 = arith.addf %146, %150 : vector<1x16x512xf32>
    %152 = vector.extract_strided_slice %147 {offsets = [0, 1, 0], sizes = [1, 16, 512], strides = [1, 1, 1]} : vector<1x18x512xf32> to vector<1x16x512xf32>
    %153 = vector.broadcast %110 : vector<1x1x512xf32> to vector<1x16x512xf32>
    %154 = arith.mulf %152, %153 : vector<1x16x512xf32>
    %155 = arith.addf %151, %154 : vector<1x16x512xf32>
    %156 = vector.extract_strided_slice %147 {offsets = [0, 2, 0], sizes = [1, 16, 512], strides = [1, 1, 1]} : vector<1x18x512xf32> to vector<1x16x512xf32>
    %157 = vector.broadcast %119 : vector<1x1x512xf32> to vector<1x16x512xf32>
    %158 = arith.mulf %156, %157 : vector<1x16x512xf32>
    %159 = arith.addf %155, %158 : vector<1x16x512xf32>
    %160 = vector.shape_cast %159 : vector<1x16x512xf32> to vector<16x512xf32>
    %161 = arith.truncf %160 : vector<16x512xf32> to vector<16x512xbf16>
    %c0_20 = arith.constant 0 : index
    %c0_21 = arith.constant 0 : index
    %162 = vector.load %arg7[%c0_20, %c0_21] : memref<512x512xbf16, #tpu.memory_space<vmem>>, vector<512x512xbf16>
    %cst_22 = arith.constant dense<0.000000e+00> : vector<16x512xf32>
    %163 = tpu.matmul %161, %162, %cst_22 {dimension_numbers = #tpu.dot_dimension_numbers<[1], [0], [0], [1], [0, 0, 1, 1], [], []>} : vector<16x512xbf16>, vector<512x512xbf16>, vector<16x512xf32> -> vector<16x512xf32>
    %c0_23 = arith.constant 0 : index
    %c0_24 = arith.constant 0 : index
    %164 = vector.load %arg8[%c0_23, %c0_24] : memref<1x512xf32, #tpu.memory_space<vmem>>, vector<1x512xf32>
    %165 = vector.broadcast %164 : vector<1x512xf32> to vector<16x512xf32>
    %166 = arith.mulf %163, %165 : vector<16x512xf32>
    %c0_25 = arith.constant 0 : index
    %c0_26 = arith.constant 0 : index
    %167 = vector.load %arg9[%c0_25, %c0_26] : memref<1x512xf32, #tpu.memory_space<vmem>>, vector<1x512xf32>
    %168 = vector.broadcast %167 : vector<1x512xf32> to vector<16x512xf32>
    %169 = arith.addf %166, %168 : vector<16x512xf32>
    %170 = vector.shape_cast %169 : vector<16x512xf32> to vector<1x16x512xf32>
    %c0_27 = arith.constant 0 : index
    %c0_28 = arith.constant 0 : index
    %c0_29 = arith.constant 0 : index
    %171 = vector.load %arg10[%c0_27, %c0_28, %c0_29] : memref<1x16x512xf32, #tpu.memory_space<vmem>>, vector<1x16x512xf32>
    tpu.vector_store %arg10[%c0_27, %c0_28, %c0_29], %170 {strides = array<i32>} : memref<1x16x512xf32, #tpu.memory_space<vmem>>, vector<1x16x512xf32>,
    return
  }
  func.func @transform_0(%arg0: i32) -> (i32, i32, i32) {
    %c0_i32 = arith.constant 0 : i32
    %c0_i32_0 = arith.constant 0 : i32
    %c0_i32_1 = arith.constant 0 : i32
    return %arg0, %c0_i32, %c0_i32_0 : i32, i32, i32
  }
  func.func @transform_1(%arg0: i32) -> (i32, i32) {
    %c0_i32 = arith.constant 0 : i32
    %c0_i32_0 = arith.constant 0 : i32
    %c0_i32_1 = arith.constant 0 : i32
    return %c0_i32, %c0_i32_0 : i32, i32
  }
  func.func @transform_2(%arg0: i32) -> (i32, i32) {
    %c0_i32 = arith.constant 0 : i32
    %c0_i32_0 = arith.constant 0 : i32
    %c0_i32_1 = arith.constant 0 : i32
    return %c0_i32, %c0_i32_0 : i32, i32
  }
  func.func @transform_3(%arg0: i32) -> (i32, i32) {
    %c0_i32 = arith.constant 0 : i32
    %c0_i32_0 = arith.constant 0 : i32
    %c0_i32_1 = arith.constant 0 : i32
    return %c0_i32, %c0_i32_0 : i32, i32
  }
  func.func @transform_4(%arg0: i32) -> (i32, i32) {
    %c0_i32 = arith.constant 0 : i32
    %c0_i32_0 = arith.constant 0 : i32
    %c0_i32_1 = arith.constant 0 : i32
    return %c0_i32, %c0_i32_0 : i32, i32
  }
  func.func @transform_5(%arg0: i32) -> (i32, i32) {
    %c0_i32 = arith.constant 0 : i32
    %c0_i32_0 = arith.constant 0 : i32
    %c0_i32_1 = arith.constant 0 : i32
    return %c0_i32, %c0_i32_0 : i32, i32
  }
  func.func @transform_6(%arg0: i32) -> (i32, i32) {
    %c0_i32 = arith.constant 0 : i32
    %c0_i32_0 = arith.constant 0 : i32
    %c0_i32_1 = arith.constant 0 : i32
    return %c0_i32, %c0_i32_0 : i32, i32
  }
  func.func @transform_7(%arg0: i32) -> (i32, i32) {
    %c0_i32 = arith.constant 0 : i32
    %c0_i32_0 = arith.constant 0 : i32
    %c0_i32_1 = arith.constant 0 : i32
    return %c0_i32, %c0_i32_0 : i32, i32
  }
  func.func @transform_8(%arg0: i32) -> (i32, i32) {
    %c0_i32 = arith.constant 0 : i32
    %c0_i32_0 = arith.constant 0 : i32
    %c0_i32_1 = arith.constant 0 : i32
    return %c0_i32, %c0_i32_0 : i32, i32
  }
  func.func @transform_9(%arg0: i32) -> (i32, i32, i32) {
    %c0_i32 = arith.constant 0 : i32
    %c0_i32_0 = arith.constant 0 : i32
    %c0_i32_1 = arith.constant 0 : i32
    return %arg0, %c0_i32, %c0_i32_0 : i32, i32, i32
  }
}

module attributes {stable_mosaic.version = 11 : i64} {
  func.func @_dil_conv_slab_kernel(%arg0: i32, %arg1: memref<1x16x512xf32, #tpu.memory_space<vmem>>, %arg2: memref<9x512xf32, #tpu.memory_space<vmem>>, %arg3: memref<512x512xbf16, #tpu.memory_space<vmem>>, %arg4: memref<1x512xf32, #tpu.memory_space<vmem>>, %arg5: memref<1x512xf32, #tpu.memory_space<vmem>>, %arg6: memref<1x16x512xf32, #tpu.memory_space<vmem>>, %arg7: memref<1x16x512xf32, #tpu.memory_space<vmem>>) attributes {dimension_semantics = [#tpu.dimension_semantics<parallel>], iteration_bounds = array<i64: 2>, scalar_prefetch = 0 : i64, scratch_operands = 0 : i64, tpu.core_type = #tpu.core_type<tc>, window_params = [{transform_indices = @transform_0, window_bounds = array<i64: 1, 16, 512>}, {pipeline_mode = #tpu.pipeline_mode<synchronous>, transform_indices = @transform_1, window_bounds = array<i64: 9, 512>}, {pipeline_mode = #tpu.pipeline_mode<synchronous>, transform_indices = @transform_2, window_bounds = array<i64: 512, 512>}, {pipeline_mode = #tpu.pipeline_mode<synchronous>, transform_indices = @transform_3, window_bounds = array<i64: 1, 512>}, {pipeline_mode = #tpu.pipeline_mode<synchronous>, transform_indices = @transform_4, window_bounds = array<i64: 1, 512>}, {transform_indices = @transform_5, window_bounds = array<i64: 1, 16, 512>}, {transform_indices = @transform_6, window_bounds = array<i64: 1, 16, 512>}]} {
    %c0 = arith.constant 0 : index
    %c0_0 = arith.constant 0 : index
    %c0_1 = arith.constant 0 : index
    %0 = vector.load %arg1[%c0, %c0_0, %c0_1] : memref<1x16x512xf32, #tpu.memory_space<vmem>>, vector<1x16x512xf32>
    %cst = arith.constant 0.000000e+00 : f32
    %1 = vector.broadcast %cst : f32 to vector<1x16x512xf32>
    %2 = arith.maximumf %0, %1 : vector<1x16x512xf32>
    %cst_2 = arith.constant 0.000000e+00 : f32
    %3 = vector.broadcast %cst_2 : f32 to vector<1x2x512xf32>
    %4 = tpu.concatenate %3, %2, %3 in 1 : vector<1x2x512xf32>, vector<1x16x512xf32>, vector<1x2x512xf32> -> vector<1x20x512xf32>
    %cst_3 = arith.constant 0.000000e+00 : f32
    %5 = vector.broadcast %cst_3 : f32 to vector<1x20x64xf32>
    %6 = tpu.concatenate %5, %4, %5 in 2 : vector<1x20x64xf32>, vector<1x20x512xf32>, vector<1x20x64xf32> -> vector<1x20x640xf32>
    %c0_4 = arith.constant 0 : index
    %c0_5 = arith.constant 0 : index
    %7 = vector.load %arg2[%c0_4, %c0_5] : memref<9x512xf32, #tpu.memory_space<vmem>>, vector<9x512xf32>
    %8 = vector.extract_strided_slice %7 {offsets = [0, 0], sizes = [1, 512], strides = [1, 1]} : vector<9x512xf32> to vector<1x512xf32>
    %9 = vector.shape_cast %8 : vector<1x512xf32> to vector<512xf32>
    %10 = vector.shape_cast %9 : vector<512xf32> to vector<1x1x512xf32>
    %11 = vector.extract_strided_slice %7 {offsets = [1, 0], sizes = [1, 512], strides = [1, 1]} : vector<9x512xf32> to vector<1x512xf32>
    %12 = vector.shape_cast %11 : vector<1x512xf32> to vector<512xf32>
    %13 = vector.shape_cast %12 : vector<512xf32> to vector<1x1x512xf32>
    %14 = vector.extract_strided_slice %7 {offsets = [2, 0], sizes = [1, 512], strides = [1, 1]} : vector<9x512xf32> to vector<1x512xf32>
    %15 = vector.shape_cast %14 : vector<1x512xf32> to vector<512xf32>
    %16 = vector.shape_cast %15 : vector<512xf32> to vector<1x1x512xf32>
    %17 = vector.extract_strided_slice %7 {offsets = [3, 0], sizes = [1, 512], strides = [1, 1]} : vector<9x512xf32> to vector<1x512xf32>
    %18 = vector.shape_cast %17 : vector<1x512xf32> to vector<512xf32>
    %19 = vector.shape_cast %18 : vector<512xf32> to vector<1x1x512xf32>
    %20 = vector.extract_strided_slice %7 {offsets = [4, 0], sizes = [1, 512], strides = [1, 1]} : vector<9x512xf32> to vector<1x512xf32>
    %21 = vector.shape_cast %20 : vector<1x512xf32> to vector<512xf32>
    %22 = vector.shape_cast %21 : vector<512xf32> to vector<1x1x512xf32>
    %23 = vector.extract_strided_slice %7 {offsets = [5, 0], sizes = [1, 512], strides = [1, 1]} : vector<9x512xf32> to vector<1x512xf32>
    %24 = vector.shape_cast %23 : vector<1x512xf32> to vector<512xf32>
    %25 = vector.shape_cast %24 : vector<512xf32> to vector<1x1x512xf32>
    %26 = vector.extract_strided_slice %7 {offsets = [6, 0], sizes = [1, 512], strides = [1, 1]} : vector<9x512xf32> to vector<1x512xf32>
    %27 = vector.shape_cast %26 : vector<1x512xf32> to vector<512xf32>
    %28 = vector.shape_cast %27 : vector<512xf32> to vector<1x1x512xf32>
    %29 = vector.extract_strided_slice %7 {offsets = [7, 0], sizes = [1, 512], strides = [1, 1]} : vector<9x512xf32> to vector<1x512xf32>
    %30 = vector.shape_cast %29 : vector<1x512xf32> to vector<512xf32>
    %31 = vector.shape_cast %30 : vector<512xf32> to vector<1x1x512xf32>
    %32 = vector.extract_strided_slice %7 {offsets = [8, 0], sizes = [1, 512], strides = [1, 1]} : vector<9x512xf32> to vector<1x512xf32>
    %33 = vector.shape_cast %32 : vector<1x512xf32> to vector<512xf32>
    %34 = vector.shape_cast %33 : vector<512xf32> to vector<1x1x512xf32>
    %cst_6 = arith.constant 0.000000e+00 : f32
    %35 = vector.broadcast %cst_6 : f32 to vector<1x16x512xf32>
    %36 = vector.extract_strided_slice %6 {offsets = [0, 0, 0], sizes = [1, 20, 512], strides = [1, 1, 1]} : vector<1x20x640xf32> to vector<1x20x512xf32>
    %37 = vector.extract_strided_slice %36 {offsets = [0, 0, 0], sizes = [1, 16, 512], strides = [1, 1, 1]} : vector<1x20x512xf32> to vector<1x16x512xf32>
    %38 = vector.broadcast %10 : vector<1x1x512xf32> to vector<1x16x512xf32>
    %39 = arith.mulf %37, %38 : vector<1x16x512xf32>
    %40 = arith.addf %35, %39 : vector<1x16x512xf32>
    %41 = vector.extract_strided_slice %36 {offsets = [0, 2, 0], sizes = [1, 16, 512], strides = [1, 1, 1]} : vector<1x20x512xf32> to vector<1x16x512xf32>
    %42 = vector.broadcast %19 : vector<1x1x512xf32> to vector<1x16x512xf32>
    %43 = arith.mulf %41, %42 : vector<1x16x512xf32>
    %44 = arith.addf %40, %43 : vector<1x16x512xf32>
    %45 = vector.extract_strided_slice %36 {offsets = [0, 4, 0], sizes = [1, 16, 512], strides = [1, 1, 1]} : vector<1x20x512xf32> to vector<1x16x512xf32>
    %46 = vector.broadcast %28 : vector<1x1x512xf32> to vector<1x16x512xf32>
    %47 = arith.mulf %45, %46 : vector<1x16x512xf32>
    %48 = arith.addf %44, %47 : vector<1x16x512xf32>
    %49 = vector.extract_strided_slice %6 {offsets = [0, 0, 64], sizes = [1, 20, 512], strides = [1, 1, 1]} : vector<1x20x640xf32> to vector<1x20x512xf32>
    %50 = vector.extract_strided_slice %49 {offsets = [0, 0, 0], sizes = [1, 16, 512], strides = [1, 1, 1]} : vector<1x20x512xf32> to vector<1x16x512xf32>
    %51 = vector.broadcast %13 : vector<1x1x512xf32> to vector<1x16x512xf32>
    %52 = arith.mulf %50, %51 : vector<1x16x512xf32>
    %53 = arith.addf %48, %52 : vector<1x16x512xf32>
    %54 = vector.extract_strided_slice %49 {offsets = [0, 2, 0], sizes = [1, 16, 512], strides = [1, 1, 1]} : vector<1x20x512xf32> to vector<1x16x512xf32>
    %55 = vector.broadcast %22 : vector<1x1x512xf32> to vector<1x16x512xf32>
    %56 = arith.mulf %54, %55 : vector<1x16x512xf32>
    %57 = arith.addf %53, %56 : vector<1x16x512xf32>
    %58 = vector.extract_strided_slice %49 {offsets = [0, 4, 0], sizes = [1, 16, 512], strides = [1, 1, 1]} : vector<1x20x512xf32> to vector<1x16x512xf32>
    %59 = vector.broadcast %31 : vector<1x1x512xf32> to vector<1x16x512xf32>
    %60 = arith.mulf %58, %59 : vector<1x16x512xf32>
    %61 = arith.addf %57, %60 : vector<1x16x512xf32>
    %62 = vector.extract_strided_slice %6 {offsets = [0, 0, 128], sizes = [1, 20, 512], strides = [1, 1, 1]} : vector<1x20x640xf32> to vector<1x20x512xf32>
    %63 = vector.extract_strided_slice %62 {offsets = [0, 0, 0], sizes = [1, 16, 512], strides = [1, 1, 1]} : vector<1x20x512xf32> to vector<1x16x512xf32>
    %64 = vector.broadcast %16 : vector<1x1x512xf32> to vector<1x16x512xf32>
    %65 = arith.mulf %63, %64 : vector<1x16x512xf32>
    %66 = arith.addf %61, %65 : vector<1x16x512xf32>
    %67 = vector.extract_strided_slice %62 {offsets = [0, 2, 0], sizes = [1, 16, 512], strides = [1, 1, 1]} : vector<1x20x512xf32> to vector<1x16x512xf32>
    %68 = vector.broadcast %25 : vector<1x1x512xf32> to vector<1x16x512xf32>
    %69 = arith.mulf %67, %68 : vector<1x16x512xf32>
    %70 = arith.addf %66, %69 : vector<1x16x512xf32>
    %71 = vector.extract_strided_slice %62 {offsets = [0, 4, 0], sizes = [1, 16, 512], strides = [1, 1, 1]} : vector<1x20x512xf32> to vector<1x16x512xf32>
    %72 = vector.broadcast %34 : vector<1x1x512xf32> to vector<1x16x512xf32>
    %73 = arith.mulf %71, %72 : vector<1x16x512xf32>
    %74 = arith.addf %70, %73 : vector<1x16x512xf32>
    %75 = vector.shape_cast %74 : vector<1x16x512xf32> to vector<16x512xf32>
    %76 = arith.truncf %75 : vector<16x512xf32> to vector<16x512xbf16>
    %c0_7 = arith.constant 0 : index
    %c0_8 = arith.constant 0 : index
    %77 = vector.load %arg3[%c0_7, %c0_8] : memref<512x512xbf16, #tpu.memory_space<vmem>>, vector<512x512xbf16>
    %cst_9 = arith.constant dense<0.000000e+00> : vector<16x512xf32>
    %78 = tpu.matmul %76, %77, %cst_9 {dimension_numbers = #tpu.dot_dimension_numbers<[1], [0], [0], [1], [0, 0, 1, 1], [], []>} : vector<16x512xbf16>, vector<512x512xbf16>, vector<16x512xf32> -> vector<16x512xf32>
    %c0_10 = arith.constant 0 : index
    %c0_11 = arith.constant 0 : index
    %79 = vector.load %arg4[%c0_10, %c0_11] : memref<1x512xf32, #tpu.memory_space<vmem>>, vector<1x512xf32>
    %80 = vector.broadcast %79 : vector<1x512xf32> to vector<16x512xf32>
    %81 = arith.mulf %78, %80 : vector<16x512xf32>
    %c0_12 = arith.constant 0 : index
    %c0_13 = arith.constant 0 : index
    %82 = vector.load %arg5[%c0_12, %c0_13] : memref<1x512xf32, #tpu.memory_space<vmem>>, vector<1x512xf32>
    %83 = vector.broadcast %82 : vector<1x512xf32> to vector<16x512xf32>
    %84 = arith.addf %81, %83 : vector<16x512xf32>
    %85 = vector.shape_cast %84 : vector<16x512xf32> to vector<1x16x512xf32>
    %c0_14 = arith.constant 0 : index
    %c0_15 = arith.constant 0 : index
    %c0_16 = arith.constant 0 : index
    %86 = vector.load %arg6[%c0_14, %c0_15, %c0_16] : memref<1x16x512xf32, #tpu.memory_space<vmem>>, vector<1x16x512xf32>
    %87 = arith.addf %85, %86 : vector<1x16x512xf32>
    %c0_17 = arith.constant 0 : index
    %c0_18 = arith.constant 0 : index
    %c0_19 = arith.constant 0 : index
    %88 = vector.load %arg7[%c0_17, %c0_18, %c0_19] : memref<1x16x512xf32, #tpu.memory_space<vmem>>, vector<1x16x512xf32>
    tpu.vector_store %arg7[%c0_17, %c0_18, %c0_19], %87 {strides = array<i32>} : memref<1x16x512xf32, #tpu.memory_space<vmem>>, vector<1x16x512xf32>,
    return
  }
  func.func @transform_0(%arg0: i32) -> (i32, i32, i32) {
    %c0_i32 = arith.constant 0 : i32
    %c0_i32_0 = arith.constant 0 : i32
    %c0_i32_1 = arith.constant 0 : i32
    return %arg0, %c0_i32, %c0_i32_0 : i32, i32, i32
  }
  func.func @transform_1(%arg0: i32) -> (i32, i32) {
    %c0_i32 = arith.constant 0 : i32
    %c0_i32_0 = arith.constant 0 : i32
    %c0_i32_1 = arith.constant 0 : i32
    return %c0_i32, %c0_i32_0 : i32, i32
  }
  func.func @transform_2(%arg0: i32) -> (i32, i32) {
    %c0_i32 = arith.constant 0 : i32
    %c0_i32_0 = arith.constant 0 : i32
    %c0_i32_1 = arith.constant 0 : i32
    return %c0_i32, %c0_i32_0 : i32, i32
  }
  func.func @transform_3(%arg0: i32) -> (i32, i32) {
    %c0_i32 = arith.constant 0 : i32
    %c0_i32_0 = arith.constant 0 : i32
    %c0_i32_1 = arith.constant 0 : i32
    return %c0_i32, %c0_i32_0 : i32, i32
  }
  func.func @transform_4(%arg0: i32) -> (i32, i32) {
    %c0_i32 = arith.constant 0 : i32
    %c0_i32_0 = arith.constant 0 : i32
    %c0_i32_1 = arith.constant 0 : i32
    return %c0_i32, %c0_i32_0 : i32, i32
  }
  func.func @transform_5(%arg0: i32) -> (i32, i32, i32) {
    %c0_i32 = arith.constant 0 : i32
    %c0_i32_0 = arith.constant 0 : i32
    %c0_i32_1 = arith.constant 0 : i32
    return %arg0, %c0_i32, %c0_i32_0 : i32, i32, i32
  }
  func.func @transform_6(%arg0: i32) -> (i32, i32, i32) {
    %c0_i32 = arith.constant 0 : i32
    %c0_i32_0 = arith.constant 0 : i32
    %c0_i32_1 = arith.constant 0 : i32
    return %arg0, %c0_i32, %c0_i32_0 : i32, i32, i32
  }
}

</mosaic_0001>

<llo_original>
// kernel: tile.39
$region0: #{tile.39}
  %s0 = inlined_call_operand.vmem [shape: f32[9,16,32], index: 0, kind: input, shape index: {}]
  %s1 = inlined_call_operand.vmem [shape: f32[9,512], index: 1, kind: output, shape index: {}]
  %v2 = vld [vmem:[%s0] ss:$4 sm:$0xff]
  %vm3 = vcmask 261120
  %4 = vst.msk [vmem:[%s1] ss:$8 sm:$0xf] %vm3, %v2
  %s5 = scalar_lea.vmem %s1, 4294967265
  %6 = vst.msk [vmem:[%s5] ss:$8 sm:$0xf0] %vm3, %v2
  %s7 = scalar_lea.vmem %s0, 32
  %v8 = vld [vmem:[%s7] ss:$4 sm:$0xff]
  %vm9 = vcmask 261120
  %s10 = scalar_lea.vmem %s1, 2
  %11 = vst.msk [vmem:[%s10] ss:$8 sm:$0xf] %vm9, %v8
  %s12 = scalar_lea.vmem %s1, 4294967267
  %13 = vst.msk [vmem:[%s12] ss:$8 sm:$0xf0] %vm9, %v8
  %s14 = scalar_lea.vmem %s0, 64
  %v15 = vld [vmem:[%s14] ss:$4 sm:$0xff]
  %vm16 = vcmask 261120
  %s17 = scalar_lea.vmem %s1, 4
  %18 = vst.msk [vmem:[%s17] ss:$8 sm:$0xf] %vm16, %v15
  %s19 = scalar_lea.vmem %s1, 4294967269
  %20 = vst.msk [vmem:[%s19] ss:$8 sm:$0xf0] %vm16, %v15
  %s21 = scalar_lea.vmem %s0, 96
  %v22 = vld [vmem:[%s21] ss:$4 sm:$0xff]
  %vm23 = vcmask 261120
  %s24 = scalar_lea.vmem %s1, 6
  %25 = vst.msk [vmem:[%s24] ss:$8 sm:$0xf] %vm23, %v22
  %s26 = scalar_lea.vmem %s1, 4294967271
  %27 = vst.msk [vmem:[%s26] ss:$8 sm:$0xf0] %vm23, %v22
  %s28 = scalar_lea.vmem %s0, 128
  %v29 = vld [vmem:[%s28] ss:$4 sm:$0xf]
  %vm30 = vcmask 261120
  %s31 = scalar_lea.vmem %s1, 32
  %32 = vst.msk [vmem:[%s31] ss:$8 sm:$0xf] %vm30, %v29
  %s33 = scalar_lea.vmem %s0, 3
  %s34 = smov 3
  %v35 = vld [vmem:[%s33] ss:$16 sm:%s34]
  %s36 = scalar_lea.vmem %s0, 3
  %s37 = smov 12
  %v38 = vld [vmem:[%s36] ss:$16 sm:%s37]
  %vm39 = vcmask 1043458
  %v40 = vsel %vm39, %v38, %v35
  %s41 = scalar_lea.vmem %s0, 3
  %s42 = smov 48
  %v43 = vld [vmem:[%s41] ss:$16 sm:%s42]
  %vm44 = vcmask 1045508
  %v45 = vsel %vm44, %v43, %v40
  %s46 = scalar_lea.vmem %s0, 3
  %s47 = smov 192
  %v48 = vld [vmem:[%s46] ss:$16 sm:%s47]
  %vm49 = vcmask 1047558
  %v50 = vsel %vm49, %v48, %v45
  %51 = vrot.lane.b32.xlu0 %v50, 96
  %v52 = vpop.permute.xlu0 %51
  %vm53 = vcmask 1048320
  %54 = vst.msk [vmem:[%s1] sm:$0xff] %vm53, %v52
  %s55 = scalar_lea.vmem %s0, 131
  %s56 = smov 3
  %v57 = vld [vmem:[%s55] ss:$-124 sm:%s56]
  %s58 = scalar_lea.vmem %s0, 4294967287
  %s59 = smov 12
  %v60 = vld [vmem:[%s58] ss:$16 sm:%s59]
  %vm61 = vcmask 1043458
  %v62 = vsel %vm61, %v60, %v57
  %s63 = scalar_lea.vmem %s0, 4294967287
  %s64 = smov 48
  %v65 = vld [vmem:[%s63] ss:$16 sm:%s64]
  %vm66 = vcmask 1045508
  %v67 = vsel %vm66, %v65, %v62
  %s68 = scalar_lea.vmem %s0, 4294967287
  %s69 = smov 192
  %v70 = vld [vmem:[%s68] ss:$16 sm:%s69]
  %vm71 = vcmask 1047558
  %v72 = vsel %vm71, %v70, %v67
  %73 = vrot.lane.b32.xlu0 %v72, 96
  %v74 = vpop.permute.xlu0 %73
  %vm75 = vcmask 1048320
  %s76 = scalar_lea.vmem %s1, 32
  %77 = vst.msk [vmem:[%s76] ss:$-24 sm:$0x3] %vm75, %v74
  %s78 = scalar_lea.vmem %s1, 7
  %79 = vst.msk [vmem:[%s78] sm:$0xfc] %vm75, %v74
  %s80 = scalar_lea.vmem %s0, 135
  %s81 = smov 3
  %v82 = vld [vmem:[%s80] ss:$-16 sm:%s81]
  %s83 = scalar_lea.vmem %s0, 4294967275
  %s84 = smov 12
  %v85 = vld [vmem:[%s83] ss:$16 sm:%s84]
  %vm86 = vcmask 1043458
  %v87 = vsel %vm86, %v85, %v82
  %s88 = scalar_lea.vmem %s0, 4294967275
  %s89 = smov 48
  %v90 = vld [vmem:[%s88] ss:$16 sm:%s89]
  %vm91 = vcmask 1045508
  %v92 = vsel %vm91, %v90, %v87
  %s93 = scalar_lea.vmem %s0, 4294967275
  %s94 = smov 192
  %v95 = vld [vmem:[%s93] ss:$16 sm:%s94]
  %vm96 = vcmask 1047558
  %v97 = vsel %vm96, %v95, %v92
  %98 = vrot.lane.b32.xlu0 %v97, 96
  %v99 = vpop.permute.xlu0 %98
  %vm100 = vcmask 1048320
  %s101 = scalar_lea.vmem %s1, 40
  %102 = vst.msk [vmem:[%s101] ss:$-25 sm:$0x3] %vm100, %v99
  %s103 = scalar_lea.vmem %s1, 14
  %104 = vst.msk [vmem:[%s103] sm:$0xfc] %vm100, %v99
  %s105 = scalar_lea.vmem %s0, 139
  %v106 = vld [vmem:[%s105] sm:$0x1]
  %s107 = scalar_lea.vmem %s0, 91
  %s108 = smov 6
  %v109 = vld [vmem:[%s107] ss:$16 sm:%s108]
  %vm110 = vcmask 1042433
  %v111 = vsel %vm110, %v109, %v106
  %s112 = scalar_lea.vmem %s0, 4294967263
  %s113 = smov 24
  %v114 = vld [vmem:[%s112] ss:$16 sm:%s113]
  %vm115 = vcmask 1044483
  %v116 = vsel %vm115, %v114, %v111
  %s117 = scalar_lea.vmem %s0, 4294967263
  %s118 = smov 96
  %v119 = vld [vmem:[%s117] ss:$16 sm:%s118]
  %vm120 = vcmask 1046533
  %v121 = vsel %vm120, %v119, %v116
  %s122 = scalar_lea.vmem %s0, 72
  %v123 = vld [vmem:[%s122] sm:$0x80]
  %vm124 = vcmask 1047559
  %v125 = vsel %vm124, %v123, %v121
  %126 = vrot.lane.b32.xlu0 %v125, 96
  %v127 = vpop.permute.xlu0 %126
  %vm128 = vcmask 1048320
  %s129 = scalar_lea.vmem %s1, 48
  %130 = vst.msk [vmem:[%s129] ss:$-26 sm:$0x3] %vm128, %v127
  %s131 = scalar_lea.vmem %s1, 21
  %132 = vst.msk [vmem:[%s131] sm:$0xfc] %vm128, %v127
  %s133 = scalar_lea.vmem %s0, 143
  %s134 = smov 3
  %v135 = vld [vmem:[%s133] ss:$-48 sm:%s134]
  %s136 = scalar_lea.vmem %s0, 79
  %s137 = smov 12
  %v138 = vld [vmem:[%s136] ss:$16 sm:%s137]
  %vm139 = vcmask 1043458
  %v140 = vsel %vm139, %v138, %v135
  %141 = vrot.lane.b32.xlu0 %v140, 96
  %v142 = vpop.permute.xlu0 %141
  %vm143 = vcmask 1048320
  %s144 = scalar_lea.vmem %s1, 56
  %145 = vst.msk [vmem:[%s144] ss:$-27 sm:$0x3] %vm143, %v142
  %s146 = scalar_lea.vmem %s1, 28
  %147 = vst.msk [vmem:[%s146] sm:$0xc] %vm143, %v142
  %s148 = scalar_lea.vmem %s0, 2
  %s149 = smov 3
  %v150 = vld [vmem:[%s148] ss:$16 sm:%s149]
  %s151 = scalar_lea.vmem %s0, 2
  %s152 = smov 12
  %v153 = vld [vmem:[%s151] ss:$16 sm:%s152]
  %vm154 = vcmask 1043458
  %v155 = vsel %vm154, %v153, %v150
  %s156 = scalar_lea.vmem %s0, 2
  %s157 = smov 48
  %v158 = vld [vmem:[%s156] ss:$16 sm:%s157]
  %vm159 = vcmask 1045508
  %v160 = vsel %vm159, %v158, %v155
  %s161 = scalar_lea.vmem %s0, 2
  %s162 = smov 192
  %v163 = vld [vmem:[%s161] ss:$16 sm:%s162]
  %vm164 = vcmask 1047558
  %v165 = vsel %vm164, %v163, %v160
  %166 = vrot.lane.b32.xlu0 %v165, 64
  %v167 = vpop.permute.xlu0 %166
  %vm168 = vcmask 785920
  %169 = vst.msk [vmem:[%s1] sm:$0xff] %vm168, %v167
  %s170 = scalar_lea.vmem %s0, 130
  %s171 = smov 3
  %v172 = vld [vmem:[%s170] ss:$-124 sm:%s171]
  %s173 = scalar_lea.vmem %s0, 4294967286
  %s174 = smov 12
  %v175 = vld [vmem:[%s173] ss:$16 sm:%s174]
  %vm176 = vcmask 1043458
  %v177 = vsel %vm176, %v175, %v172
  %s178 = scalar_lea.vmem %s0, 4294967286
  %s179 = smov 48
  %v180 = vld [vmem:[%s178] ss:$16 sm:%s179]
  %vm181 = vcmask 1045508
  %v182 = vsel %vm181, %v180, %v177
  %s183 = scalar_lea.vmem %s0, 4294967286
  %s184 = smov 192
  %v185 = vld [vmem:[%s183] ss:$16 sm:%s184]
  %vm186 = vcmask 1047558
  %v187 = vsel %vm186, %v185, %v182
  %188 = vrot.lane.b32.xlu0 %v187, 64
  %v189 = vpop.permute.xlu0 %188
  %vm190 = vcmask 785920
  %s191 = scalar_lea.vmem %s1, 32
  %192 = vst.msk [vmem:[%s191] ss:$-24 sm:$0x3] %vm190, %v189
  %s193 = scalar_lea.vmem %s1, 7
  %194 = vst.msk [vmem:[%s193] sm:$0xfc] %vm190, %v189
  %s195 = scalar_lea.vmem %s0, 134
  %s196 = smov 3
  %v197 = vld [vmem:[%s195] ss:$-16 sm:%s196]
  %s198 = scalar_lea.vmem %s0, 4294967274
  %s199 = smov 12
  %v200 = vld [vmem:[%s198] ss:$16 sm:%s199]
  %vm201 = vcmask 1043458
  %v202 = vsel %vm201, %v200, %v197
  %s203 = scalar_lea.vmem %s0, 4294967274
  %s204 = smov 48
  %v205 = vld [vmem:[%s203] ss:$16 sm:%s204]
  %vm206 = vcmask 1045508
  %v207 = vsel %vm206, %v205, %v202
  %s208 = scalar_lea.vmem %s0, 4294967274
  %s209 = smov 192
  %v210 = vld [vmem:[%s208] ss:$16 sm:%s209]
  %vm211 = vcmask 1047558
  %v212 = vsel %vm211, %v210, %v207
  %213 = vrot.lane.b32.xlu0 %v212, 64
  %v214 = vpop.permute.xlu0 %213
  %vm215 = vcmask 785920
  %s216 = scalar_lea.vmem %s1, 40
  %217 = vst.msk [vmem:[%s216] ss:$-25 sm:$0x3] %vm215, %v214
  %s218 = scalar_lea.vmem %s1, 14
  %219 = vst.msk [vmem:[%s218] sm:$0xfc] %vm215, %v214
  %s220 = scalar_lea.vmem %s0, 138
  %v221 = vld [vmem:[%s220] sm:$0x1]
  %s222 = scalar_lea.vmem %s0, 90
  %s223 = smov 6
  %v224 = vld [vmem:[%s222] ss:$16 sm:%s223]
  %vm225 = vcmask 1042433
  %v226 = vsel %vm225, %v224, %v221
  %s227 = scalar_lea.vmem %s0, 4294967262
  %s228 = smov 24
  %v229 = vld [vmem:[%s227] ss:$16 sm:%s228]
  %vm230 = vcmask 1044483
  %v231 = vsel %vm230, %v229, %v226
  %s232 = scalar_lea.vmem %s0, 4294967262
  %s233 = smov 96
  %v234 = vld [vmem:[%s232] ss:$16 sm:%s233]
  %vm235 = vcmask 1046533
  %v236 = vsel %vm235, %v234, %v231
  %s237 = scalar_lea.vmem %s0, 71
  %v238 = vld [vmem:[%s237] sm:$0x80]
  %vm239 = vcmask 1047559
  %v240 = vsel %vm239, %v238, %v236
  %241 = vrot.lane.b32.xlu0 %v240, 64
  %v242 = vpop.permute.xlu0 %241
  %vm243 = vcmask 785920
  %s244 = scalar_lea.vmem %s1, 48
  %245 = vst.msk [vmem:[%s244] ss:$-26 sm:$0x3] %vm243, %v242
  %s246 = scalar_lea.vmem %s1, 21
  %247 = vst.msk [vmem:[%s246] sm:$0xfc] %vm243, %v242
  %s248 = scalar_lea.vmem %s0, 142
  %s249 = smov 3
  %v250 = vld [vmem:[%s248] ss:$-48 sm:%s249]
  %s251 = scalar_lea.vmem %s0, 78
  %s252 = smov 12
  %v253 = vld [vmem:[%s251] ss:$16 sm:%s252]
  %vm254 = vcmask 1043458
  %v255 = vsel %vm254, %v253, %v250
  %256 = vrot.lane.b32.xlu0 %v255, 64
  %v257 = vpop.permute.xlu0 %256
  %vm258 = vcmask 785920
  %s259 = scalar_lea.vmem %s1, 56
  %260 = vst.msk [vmem:[%s259] ss:$-27 sm:$0x3] %vm258, %v257
  %s261 = scalar_lea.vmem %s1, 28
  %262 = vst.msk [vmem:[%s261] sm:$0xc] %vm258, %v257
  %s263 = scalar_lea.vmem %s0, 1
  %s264 = smov 3
  %v265 = vld [vmem:[%s263] ss:$16 sm:%s264]
  %s266 = scalar_lea.vmem %s0, 1
  %s267 = smov 12
  %v268 = vld [vmem:[%s266] ss:$16 sm:%s267]
  %vm269 = vcmask 1043458
  %v270 = vsel %vm269, %v268, %v265
  %s271 = scalar_lea.vmem %s0, 1
  %s272 = smov 48
  %v273 = vld [vmem:[%s271] ss:$16 sm:%s272]
  %vm274 = vcmask 1045508
  %v275 = vsel %vm274, %v273, %v270
  %s276 = scalar_lea.vmem %s0, 1
  %s277 = smov 192
  %v278 = vld [vmem:[%s276] ss:$16 sm:%s277]
  %vm279 = vcmask 1047558
  %v280 = vsel %vm279, %v278, %v275
  %281 = vrot.lane.b32.xlu0 %v280, 32
  %v282 = vpop.permute.xlu0 %281
  %vm283 = vcmask 523520
  %284 = vst.msk [vmem:[%s1] sm:$0xff] %vm283, %v282
  %s285 = scalar_lea.vmem %s0, 129
  %s286 = smov 3
  %v287 = vld [vmem:[%s285] ss:$-124 sm:%s286]
  %s288 = scalar_lea.vmem %s0, 4294967285
  %s289 = smov 12
  %v290 = vld [vmem:[%s288] ss:$16 sm:%s289]
  %vm291 = vcmask 1043458
  %v292 = vsel %vm291, %v290, %v287
  %s293 = scalar_lea.vmem %s0, 4294967285
  %s294 = smov 48
  %v295 = vld [vmem:[%s293] ss:$16 sm:%s294]
  %vm296 = vcmask 1045508
  %v297 = vsel %vm296, %v295, %v292
  %s298 = scalar_lea.vmem %s0, 4294967285
  %s299 = smov 192
  %v300 = vld [vmem:[%s298] ss:$16 sm:%s299]
  %vm301 = vcmask 1047558
  %v302 = vsel %vm301, %v300, %v297
  %303 = vrot.lane.b32.xlu0 %v302, 32
  %v304 = vpop.permute.xlu0 %303
  %vm305 = vcmask 523520
  %s306 = scalar_lea.vmem %s1, 32
  %307 = vst.msk [vmem:[%s306] ss:$-24 sm:$0x3] %vm305, %v304
  %s308 = scalar_lea.vmem %s1, 7
  %309 = vst.msk [vmem:[%s308] sm:$0xfc] %vm305, %v304
  %s310 = scalar_lea.vmem %s0, 133
  %s311 = smov 3
  %v312 = vld [vmem:[%s310] ss:$-16 sm:%s311]
  %s313 = scalar_lea.vmem %s0, 4294967273
  %s314 = smov 12
  %v315 = vld [vmem:[%s313] ss:$16 sm:%s314]
  %vm316 = vcmask 1043458
  %v317 = vsel %vm316, %v315, %v312
  %s318 = scalar_lea.vmem %s0, 4294967273
  %s319 = smov 48
  %v320 = vld [vmem:[%s318] ss:$16 sm:%s319]
  %vm321 = vcmask 1045508
  %v322 = vsel %vm321, %v320, %v317
  %s323 = scalar_lea.vmem %s0, 4294967273
  %s324 = smov 192
  %v325 = vld [vmem:[%s323] ss:$16 sm:%s324]
  %vm326 = vcmask 1047558
  %v327 = vsel %vm326, %v325, %v322
  %328 = vrot.lane.b32.xlu0 %v327, 32
  %v329 = vpop.permute.xlu0 %328
  %vm330 = vcmask 523520
  %s331 = scalar_lea.vmem %s1, 40
  %332 = vst.msk [vmem:[%s331] ss:$-25 sm:$0x3] %vm330, %v329
  %s333 = scalar_lea.vmem %s1, 14
  %334 = vst.msk [vmem:[%s333] sm:$0xfc] %vm330, %v329
  %s335 = scalar_lea.vmem %s0, 137
  %v336 = vld [vmem:[%s335] sm:$0x1]
  %s337 = scalar_lea.vmem %s0, 89
  %s338 = smov 6
  %v339 = vld [vmem:[%s337] ss:$16 sm:%s338]
  %vm340 = vcmask 1042433
  %v341 = vsel %vm340, %v339, %v336
  %s342 = scalar_lea.vmem %s0, 4294967261
  %s343 = smov 24
  %v344 = vld [vmem:[%s342] ss:$16 sm:%s343]
  %vm345 = vcmask 1044483
  %v346 = vsel %vm345, %v344, %v341
  %s347 = scalar_lea.vmem %s0, 4294967261
  %s348 = smov 96
  %v349 = vld [vmem:[%s347] ss:$16 sm:%s348]
  %vm350 = vcmask 1046533
  %v351 = vsel %vm350, %v349, %v346
  %s352 = scalar_lea.vmem %s0, 70
  %v353 = vld [vmem:[%s352] sm:$0x80]
  %vm354 = vcmask 1047559
  %v355 = vsel %vm354, %v353, %v351
  %356 = vrot.lane.b32.xlu0 %v355, 32
  %v357 = vpop.permute.xlu0 %356
  %vm358 = vcmask 523520
  %s359 = scalar_lea.vmem %s1, 48
  %360 = vst.msk [vmem:[%s359] ss:$-26 sm:$0x3] %vm358, %v357
  %s361 = scalar_lea.vmem %s1, 21
  %362 = vst.msk [vmem:[%s361] sm:$0xfc] %vm358, %v357
  %s363 = scalar_lea.vmem %s0, 141
  %s364 = smov 3
  %v365 = vld [vmem:[%s363] ss:$-48 sm:%s364]
  %s366 = scalar_lea.vmem %s0, 77
  %s367 = smov 12
  %v368 = vld [vmem:[%s366] ss:$16 sm:%s367]
  %vm369 = vcmask 1043458
  %v370 = vsel %vm369, %v368, %v365
  %371 = vrot.lane.b32.xlu0 %v370, 32
  %v372 = vpop.permute.xlu0 %371
  %vm373 = vcmask 523520
  %s374 = scalar_lea.vmem %s1, 56
  %375 = vst.msk [vmem:[%s374] ss:$-27 sm:$0x3] %vm373, %v372
  %s376 = scalar_lea.vmem %s1, 28
  %377 = vst.msk [vmem:[%s376] sm:$0xc] %vm373, %v372

// kernel: a_call__.3
$region0: #{a_call__.3}
  #allocation0 [shape = 'u32[]', space=smem, size = 0x4, offset = 0x4, fixed_abs, tag = 'smem constant byte address 0x4 - core index']
  #allocation1 [shape = 'u32[72,128]{1,0:T(1,128)}', space=vmem, size = 0x9000, scoped, tag = 'internal scratch']
  %s0 = inlined_call_operand.vmem [shape: f32[2,16,512], index: 0, kind: input, shape index: {}]
  %s1 = inlined_call_operand.vmem [shape: f32[9,512], index: 1, kind: input, shape index: {}]
  %s2 = inlined_call_operand.vmem [shape: bf16[512,512], index: 2, kind: input, shape index: {}]
  %s3 = inlined_call_operand.vmem [shape: f32[1,512], index: 3, kind: input, shape index: {}]
  %s4 = inlined_call_operand.vmem [shape: f32[1,512], index: 4, kind: input, shape index: {}]
  %s5 = inlined_call_operand.vmem [shape: f32[2,16,512], index: 5, kind: input, shape index: {}]
  %s6 = inlined_call_operand.vmem [shape: f32[2,16,512], index: 6, kind: output, shape index: {}]
  %s7 = sld [smem:[#allocation0]]
  $region57: #{a_call__.3} parent=0
    _
  %s9 = ssub.s32 1, %s7
  %s10 = scalar_select 0, %s9, %s7
  loop: start=0, step=1, limit=4
  $region2: #{a_call__.3} parent=0 // loop_pre_header
    _
  $region3: #{a_call__.3} parent=0 // loop_header
    %s12 = sphi 0, %s16
    %p13 = scmp.ge.s32.totalorder %s12, 4
    %s22 = sphi 0, %s24
    %s25 = sphi 0, %s22
    %s26 = sphi 0, %s25
    %s42 = sphi 0, %s26
    %s46 = sphi 0, %s46
    %s48 = sphi 0, %s46
    %s49 = sphi 0, %s48
    %s63 = sphi 0, %s49
    %s67 = sphi 0, %s67
    %s69 = sphi 0, %s67
    %s70 = sphi 0, %s69
    %s84 = sphi 0, %s70
    %s88 = sphi 0, %s88
    %s90 = sphi 0, %s88
    %s91 = sphi 0, %s90
    %s105 = sphi 0, %s91
    %s109 = sphi 0, %s109
    %s111 = sphi 0, %s109
    %s112 = sphi 0, %s111
    %s126 = sphi 0, %s112
    %s132 = sphi 0, %s134
    %s135 = sphi 0, %s132
    %s136 = sphi 0, %s135
    %s152 = sphi 0, %s136
    %s158 = sphi 0, %s160
    %s161 = sphi 0, %s158
    %s162 = sphi 0, %s161
    %s178 = sphi 0, %s162
  $region4: #{a_call__.3} parent=0 // loop_header_branch
    %15 = sbr.rel (%p13) target = $region8
  $region5: #{a_call__.3} parent=0 // loop_body
    %s17 = ssub.s32 %s12, 1
    %s18 = ssub.s32 %s12, 2
    %s19 = sadd.s32 %s12, 1
    %s20 = ssub.s32 %s12, %s19
    %p21 = scmp.eq.s32.totalorder %s20, 0
    %s23 = sadd.s32 %s22, 1
    %s24 = scalar_select %p21, %s22, %s23
    %p27 = pneg %p21
    %p28 = scmp.eq.s32.totalorder %s12, 1
    %p29 = por %p27, %p28
    %p30 = scmp.ne.s32.totalorder %s22, %s25
    %p31 = scmp.eq.s32.totalorder %s12, 0
    %p32 = por %p30, %p31
    %p33 = scmp.ne.s32.totalorder %s22, %s25
    %p34 = scmp.eq.s32.totalorder %s17, 1
    %p35 = por %p33, %p34
    %p36 = scmp.ne.s32.totalorder %s25, %s26
    %p37 = scmp.eq.s32.totalorder %s17, 0
    %p38 = por %p36, %p37
    %p39 = scmp.ne.s32.totalorder %s25, %s26
    %p40 = scmp.eq.s32.totalorder %s18, 1
    %p41 = por %p39, %p40
    %p43 = scmp.ne.s32.totalorder %s26, %s42
    %p44 = scmp.eq.s32.totalorder %s18, 0
    %p45 = por %p43, %p44
    %s47 = sadd.s32 %s46, 1
    %p50 = scmp.eq.s32.totalorder %s12, 1
    %p51 = scmp.ne.s32.totalorder %s46, %s48
    %p52 = scmp.eq.s32.totalorder %s12, 0
    %p53 = por %p51, %p52
    %p54 = scmp.ne.s32.totalorder %s46, %s48
    %p55 = scmp.eq.s32.totalorder %s17, 1
    %p56 = por %p54, %p55
    %p57 = scmp.ne.s32.totalorder %s48, %s49
    %p58 = scmp.eq.s32.totalorder %s17, 0
    %p59 = por %p57, %p58
    %p60 = scmp.ne.s32.totalorder %s48, %s49
    %p61 = scmp.eq.s32.totalorder %s18, 1
    %p62 = por %p60, %p61
    %p64 = scmp.ne.s32.totalorder %s49, %s63
    %p65 = scmp.eq.s32.totalorder %s18, 0
    %p66 = por %p64, %p65
    %s68 = sadd.s32 %s67, 1
    %p71 = scmp.eq.s32.totalorder %s12, 1
    %p72 = scmp.ne.s32.totalorder %s67, %s69
    %p73 = scmp.eq.s32.totalorder %s12, 0
    %p74 = por %p72, %p73
    %p75 = scmp.ne.s32.totalorder %s67, %s69
    %p76 = scmp.eq.s32.totalorder %s17, 1
    %p77 = por %p75, %p76
    %p78 = scmp.ne.s32.totalorder %s69, %s70
    %p79 = scmp.eq.s32.totalorder %s17, 0
    %p80 = por %p78, %p79
    %p81 = scmp.ne.s32.totalorder %s69, %s70
    %p82 = scmp.eq.s32.totalorder %s18, 1
    %p83 = por %p81, %p82
    %p85 = scmp.ne.s32.totalorder %s70, %s84
    %p86 = scmp.eq.s32.totalorder %s18, 0
    %p87 = por %p85, %p86
    %s89 = sadd.s32 %s88, 1
    %p92 = scmp.eq.s32.totalorder %s12, 1
    %p93 = scmp.ne.s32.totalorder %s88, %s90
    %p94 = scmp.eq.s32.totalorder %s12, 0
    %p95 = por %p93, %p94
    %p96 = scmp.ne.s32.totalorder %s88, %s90
    %p97 = scmp.eq.s32.totalorder %s17, 1
    %p98 = por %p96, %p97
    %p99 = scmp.ne.s32.totalorder %s90, %s91
    %p100 = scmp.eq.s32.totalorder %s17, 0
    %p101 = por %p99, %p100
    %p102 = scmp.ne.s32.totalorder %s90, %s91
    %p103 = scmp.eq.s32.totalorder %s18, 1
    %p104 = por %p102, %p103
    %p106 = scmp.ne.s32.totalorder %s91, %s105
    %p107 = scmp.eq.s32.totalorder %s18, 0
    %p108 = por %p106, %p107
    %s110 = sadd.s32 %s109, 1
    %p113 = scmp.eq.s32.totalorder %s12, 1
    %p114 = scmp.ne.s32.totalorder %s109, %s111
    %p115 = scmp.eq.s32.totalorder %s12, 0
    %p116 = por %p114, %p115
    %p117 = scmp.ne.s32.totalorder %s109, %s111
    %p118 = scmp.eq.s32.totalorder %s17, 1
    %p119 = por %p117, %p118
    %p120 = scmp.ne.s32.totalorder %s111, %s112
    %p121 = scmp.eq.s32.totalorder %s17, 0
    %p122 = por %p120, %p121
    %p123 = scmp.ne.s32.totalorder %s111, %s112
    %p124 = scmp.eq.s32.totalorder %s18, 1
    %p125 = por %p123, %p124
    %p127 = scmp.ne.s32.totalorder %s112, %s126
    %p128 = scmp.eq.s32.totalorder %s18, 0
    %p129 = por %p127, %p128
    %s130 = ssub.s32 %s12, %s19
    %p131 = scmp.eq.s32.totalorder %s130, 0
    %s133 = sadd.s32 %s132, 1
    %s134 = scalar_select %p131, %s132, %s133
    %p137 = pneg %p131
    %p138 = scmp.eq.s32.totalorder %s12, 1
    %p139 = por %p137, %p138
    %p140 = scmp.ne.s32.totalorder %s132, %s135
    %p141 = scmp.eq.s32.totalorder %s12, 0
    %p142 = por %p140, %p141
    %p143 = scmp.ne.s32.totalorder %s132, %s135
    %p144 = scmp.eq.s32.totalorder %s17, 1
    %p145 = por %p143, %p144
    %p146 = scmp.ne.s32.totalorder %s135, %s136
    %p147 = scmp.eq.s32.totalorder %s17, 0
    %p148 = por %p146, %p147
    %p149 = scmp.ne.s32.totalorder %s135, %s136
    %p150 = scmp.eq.s32.totalorder %s18, 1
    %p151 = por %p149, %p150
    %p153 = scmp.ne.s32.totalorder %s136, %s152
    %p154 = scmp.eq.s32.totalorder %s18, 0
    %p155 = por %p153, %p154
    %s156 = ssub.s32 %s12, %s19
    %p157 = scmp.eq.s32.totalorder %s156, 0
    %s159 = sadd.s32 %s158, 1
    %s160 = scalar_select %p157, %s158, %s159
    %p163 = pneg %p157
    %p164 = scmp.eq.s32.totalorder %s12, 1
    %p165 = por %p163, %p164
    %p166 = scmp.ne.s32.totalorder %s158, %s161
    %p167 = scmp.eq.s32.totalorder %s12, 0
    %p168 = por %p166, %p167
    %p169 = scmp.ne.s32.totalorder %s158, %s161
    %p170 = scmp.eq.s32.totalorder %s17, 1
    %p171 = por %p169, %p170
    %p172 = scmp.ne.s32.totalorder %s161, %s162
    %p173 = scmp.eq.s32.totalorder %s17, 0
    %p174 = por %p172, %p173
    %p175 = scmp.ne.s32.totalorder %s161, %s162
    %p176 = scmp.eq.s32.totalorder %s18, 1
    %p177 = por %p175, %p176
    %p179 = scmp.ne.s32.totalorder %s162, %s178
    %p180 = scmp.eq.s32.totalorder %s18, 0
    %p181 = por %p179, %p180
    %p182 = scmp.le.s32.totalorder 1, %s12
    %p183 = scmp.lt.s32.totalorder %s12, 3
    %p184 = pnand %p182, %p183
    %p185 = pneg %p184
    // Predicated region
    $region9: #{a_call__.3} parent=5 // pred_check
      _
    $region10: #{a_call__.3} parent=5 // pred_check_branch
      %187 = sbr.rel (%p184) target = $region12
    $region11: #{a_call__.3} parent=5 // pred_region
      %s188 = ssub.s32 %s12, 1
      // Predicated region
      $region13: #{a_call__.3} parent=11 // pred_check
        %p189 = pneg %p59
      $region14: #{a_call__.3} parent=11 // pred_check_branch
        %191 = sbr.rel (%p189) target = $region16
      $region15: #{a_call__.3} parent=11 // pred_region
        _
      $region16: #{a_call__.3} parent=11 // pred_fallthru
        _
      // Predicated region
      $region17: #{a_call__.3} parent=11 // pred_check
        %p192 = pneg %p80
      $region18: #{a_call__.3} parent=11 // pred_check_branch
        %194 = sbr.rel (%p192) target = $region20
      $region19: #{a_call__.3} parent=11 // pred_region
        _
      $region20: #{a_call__.3} parent=11 // pred_fallthru
        _
      // Predicated region
      $region21: #{a_call__.3} parent=11 // pred_check
        %p195 = pneg %p101
      $region22: #{a_call__.3} parent=11 // pred_check_branch
        %197 = sbr.rel (%p195) target = $region24
      $region23: #{a_call__.3} parent=11 // pred_region
        _
      $region24: #{a_call__.3} parent=11 // pred_fallthru
        _
      // Predicated region
      $region25: #{a_call__.3} parent=11 // pred_check
        %p198 = pneg %p122
      $region26: #{a_call__.3} parent=11 // pred_check_branch
        %200 = sbr.rel (%p198) target = $region28
      $region27: #{a_call__.3} parent=11 // pred_region
        _
      $region28: #{a_call__.3} parent=11 // pred_fallthru
        _
    $region12: #{a_call__.3} parent=5 // pred_fallthru
      _
    %p201 = scmp.lt.s32.totalorder %s12, 2
    // Predicated region
    $region29: #{a_call__.3} parent=5 // pred_check
      %p202 = pneg %p201
    $region30: #{a_call__.3} parent=5 // pred_check_branch
      %204 = sbr.rel (%p202) target = $region32
    $region31: #{a_call__.3} parent=5 // pred_region
      // Predicated region
      $region33: #{a_call__.3} parent=31 // pred_check
        %p205 = pneg %p32
      $region34: #{a_call__.3} parent=31 // pred_check_branch
        %207 = sbr.rel (%p205) target = $region36
      $region35: #{a_call__.3} parent=31 // pred_region
        %p208 = scmp.lt.s32.totalorder %s12, 1
        %s209 = scalar_select %p208, %s12, 1
        %s210 = smul.addr %s209, 8
        %s211 = smul.addr %s210, 8
        %s212 = scalar_lea.vmem %s0, %s211
      $region36: #{a_call__.3} parent=31 // pred_fallthru
        _
      // Predicated region
      $region37: #{a_call__.3} parent=31 // pred_check
        %p213 = pneg %p142
      $region38: #{a_call__.3} parent=31 // pred_check_branch
        %215 = sbr.rel (%p213) target = $region40
      $region39: #{a_call__.3} parent=31 // pred_region
        %p216 = scmp.lt.s32.totalorder %s12, 1
        %s217 = scalar_select %p216, %s12, 1
        %s218 = smul.addr %s217, 8
        %s219 = smul.addr %s218, 8
        %s220 = scalar_lea.vmem %s5, %s219
      $region40: #{a_call__.3} parent=31 // pred_fallthru
        _
    $region32: #{a_call__.3} parent=5 // pred_fallthru
      _
    %p221 = scmp.le.s32.totalorder 1, %s12
    %p222 = scmp.lt.s32.totalorder %s12, 3
    %p223 = pnand %p221, %p222
    %p224 = pneg %p223
    // Predicated region
    $region41: #{a_call__.3} parent=5 // pred_check
      _
    $region42: #{a_call__.3} parent=5 // pred_check_branch
      %226 = sbr.rel (%p223) target = $region44
    $region43: #{a_call__.3} parent=5 // pred_region
      %s227 = ssub.s32 %s12, 1
      %p228 = scmp.lt.s32.totalorder %s17, 1
      %s229 = scalar_select %p228, %s17, 1
      %s230 = smul.addr %s229, 8
      %s231 = smul.addr %s230, 8
      %s232 = scalar_lea.vmem %s0, %s231
      %p233 = pneg %p38
      %p234 = pneg %p35
      %p235 = pneg %p59
      %p236 = pneg %p56
      %p237 = pneg %p80
      %p238 = pneg %p77
      %p239 = pneg %p101
      %p240 = pneg %p98
      %p241 = pneg %p122
      %p242 = pneg %p119
      %p243 = scmp.lt.s32.totalorder %s17, 1
      %s244 = scalar_select %p243, %s17, 1
      %s245 = smul.addr %s244, 8
      %s246 = smul.addr %s245, 8
      %s247 = scalar_lea.vmem %s5, %s246
      %p248 = pneg %p148
      %p249 = pneg %p145
      %p250 = pneg %p174
      %p251 = pneg %p171
      %p252 = scmp.lt.s32.totalorder %s17, 1
      %s253 = scalar_select %p252, %s17, 1
      %s254 = smul.addr %s253, 8
      %s255 = smul.addr %s254, 8
      %s256 = scalar_lea.vmem %s6, %s255
      %p257 = scmp.lt.s32.totalorder %s17, 1
      %s258 = scalar_select %p257, %s17, 1
      %s259 = smul.addr %s258, 8
      %s260 = smul.addr %s259, 8
      %s261 = scalar_lea.vmem %s0, %s260
      %p262 = scmp.lt.s32.totalorder %s17, 1
      %s263 = scalar_select %p262, %s17, 1
      %s264 = smul.addr %s263, 8
      %s265 = smul.addr %s264, 8
      %s266 = scalar_lea.vmem %s5, %s265
      %p267 = scmp.lt.s32.totalorder %s17, 1
      %s268 = scalar_select %p267, %s17, 1
      %s269 = smul.addr %s268, 8
      %s270 = smul.addr %s269, 8
      %s271 = scalar_lea.vmem %s6, %s270
      %v272 = vld [vmem:[%s261] sm:$0xff]
      %v273 = vld [vmem:[%s261 + $0x8] sm:$0xff]
      %v274 = vld [vmem:[%s261 + $0x10] sm:$0xff]
      %v275 = vld [vmem:[%s261 + $0x18] sm:$0xff]
      %v276 = vld [vmem:[%s261 + $0x20] sm:$0xff]
      %v277 = vld [vmem:[%s261 + $0x28] sm:$0xff]
      %v278 = vld [vmem:[%s261 + $0x30] sm:$0xff]
      %v279 = vld [vmem:[%s261 + $0x38] sm:$0xff]
      %v280 = vmax.f32 %v272, 0.0
      %v281 = vmax.f32 %v273, 0.0
      %v282 = vmax.f32 %v274, 0.0
      %v283 = vmax.f32 %v275, 0.0
      %v284 = vmax.f32 %v276, 0.0
      %v285 = vmax.f32 %v277, 0.0
      %v286 = vmax.f32 %v278, 0.0
      %v287 = vmax.f32 %v279, 0.0
      %vm296 = vcmask 1041408
      %v297 = vrot.slane %v280, 6
      %v298 = vrot.slane %v281, 6
      %v299 = vrot.slane %v282, 6
      %v300 = vrot.slane %v283, 6
      %v301 = vrot.slane %v284, 6
      %v302 = vsel %vm296, %v297, %v301
      %v303 = vrot.slane %v285, 6
      %v304 = vsel %vm296, %v298, %v303
      %v305 = vrot.slane %v286, 6
      %v306 = vsel %vm296, %v299, %v305
      %v307 = vrot.slane %v287, 6
      %v308 = vsel %vm296, %v300, %v307
      %v317 = vsel %vm296, 0.0, %v297
      %v318 = vsel %vm296, 0.0, %v298
      %v319 = vsel %vm296, 0.0, %v299
      %v320 = vsel %vm296, 0.0, %v300
      %v321 = vsel %vm296, %v301, 0.0
      %v322 = vsel %vm296, %v303, 0.0
      %v323 = vsel %vm296, %v305, 0.0
      %v324 = vsel %vm296, %v307, 0.0
      %333 = vrot.lane.b32.xlu0 %v317, 64
      %v334 = vpop.permute.xlu0 %333
      %335 = vrot.lane.b32.xlu0 %v318, 64
      %v336 = vpop.permute.xlu0 %335
      %337 = vrot.lane.b32.xlu0 %v319, 64
      %v338 = vpop.permute.xlu0 %337
      %339 = vrot.lane.b32.xlu0 %v320, 64
      %v340 = vpop.permute.xlu0 %339
      %341 = vrot.lane.b32.xlu0 %v302, 64
      %v342 = vpop.permute.xlu0 %341
      %343 = vrot.lane.b32.xlu0 %v304, 64
      %v344 = vpop.permute.xlu0 %343
      %345 = vrot.lane.b32.xlu0 %v306, 64
      %v346 = vpop.permute.xlu0 %345
      %347 = vrot.lane.b32.xlu0 %v308, 64
      %v348 = vpop.permute.xlu0 %347
      %349 = vrot.lane.b32.xlu0 %v321, 64
      %v350 = vpop.permute.xlu0 %349
      %351 = vrot.lane.b32.xlu0 %v322, 64
      %v352 = vpop.permute.xlu0 %351
      %353 = vrot.lane.b32.xlu0 %v323, 64
      %v354 = vpop.permute.xlu0 %353
      %355 = vrot.lane.b32.xlu0 %v324, 64
      %v356 = vpop.permute.xlu0 %355
      %vm357 = vcmask 523264
      %v358 = vsel %vm357, %v334, %v336
      %v359 = vsel %vm357, %v336, %v338
      %v360 = vsel %vm357, %v338, %v340
      %v361 = vsel %vm357, %v342, %v344
      %v362 = vsel %vm357, %v344, %v346
      %v363 = vsel %vm357, %v346, %v348
      %v364 = vsel %vm357, %v350, %v352
      %v365 = vsel %vm357, %v352, %v354
      %v366 = vsel %vm357, %v354, %v356
      %v382 = vsel %vm357, 0.0, %v334
      %v383 = vsel %vm357, 0.0, %v342
      %v384 = vsel %vm357, 0.0, %v350
      %v385 = vsel %vm357, %v340, 0.0
      %v386 = vsel %vm357, %v348, 0.0
      %v387 = vsel %vm357, %v356, 0.0
      %v388 = vld [vmem:[%s1] sm:$0xff]
      %v389 = vld [vmem:[%s1 + $0x8] sm:$0xff]
      %v390 = vld [vmem:[%s1 + $0x10] sm:$0xff]
      %v391 = vld [vmem:[%s1 + $0x18] sm:$0xff]
      %v392 = vld [vmem:[%s1 + $0x20] sm:$0x1]
      %v393 = vld [vmem:[%s1 + $0x28] sm:$0x1]
      %v394 = vld [vmem:[%s1 + $0x30] sm:$0x1]
      %v395 = vld [vmem:[%s1 + $0x38] sm:$0x1]
      %v396 = vperm.slane %v388, 0
      %v397 = vperm.slane %v389, 0
      %v398 = vperm.slane %v390, 0
      %v399 = vperm.slane %v391, 0
      %v400 = vmul.f32 %v382, %v396
      %v401 = vmul.f32 %v358, %v397
      %v402 = vmul.f32 %v359, %v398
      %v403 = vmul.f32 %v360, %v399
      %v404 = vmul.f32 %v383, %v396
      %v405 = vmul.f32 %v361, %v397
      %v406 = vmul.f32 %v362, %v398
      %v407 = vmul.f32 %v363, %v399
      %v408 = vadd.f32 %v400, 0.0
      %v409 = vadd.f32 %v401, 0.0
      %v410 = vadd.f32 %v402, 0.0
      %v411 = vadd.f32 %v403, 0.0
      %v412 = vadd.f32 %v404, 0.0
      %v413 = vadd.f32 %v405, 0.0
      %v414 = vadd.f32 %v406, 0.0
      %v415 = vadd.f32 %v407, 0.0
      %v416 = vperm.slane %v388, 3
      %v417 = vperm.slane %v389, 3
      %v418 = vperm.slane %v390, 3
      %v419 = vperm.slane %v391, 3
      %v420 = vmul.f32 %v382, %v416
      %v421 = vmul.f32 %v358, %v417
      %v422 = vmul.f32 %v359, %v418
      %v423 = vmul.f32 %v360, %v419
      %v424 = vmul.f32 %v383, %v416
      %v425 = vmul.f32 %v361, %v417
      %v426 = vmul.f32 %v362, %v418
      %v427 = vmul.f32 %v363, %v419
      %v428 = vmul.f32 %v384, %v416
      %v429 = vmul.f32 %v364, %v417
      %v430 = vmul.f32 %v365, %v418
      %v431 = vmul.f32 %v366, %v419
      %vm444 = vcmask 1045504
      %v445 = vrot.slane %v420, 2
      %v446 = vrot.slane %v424, 2
      %v447 = vsel %vm444, %v445, %v446
      %v448 = vrot.slane %v421, 2
      %v449 = vrot.slane %v425, 2
      %v450 = vsel %vm444, %v448, %v449
      %v451 = vrot.slane %v422, 2
      %v452 = vrot.slane %v426, 2
      %v453 = vsel %vm444, %v451, %v452
      %v454 = vrot.slane %v423, 2
      %v455 = vrot.slane %v427, 2
      %v456 = vsel %vm444, %v454, %v455
      %v457 = vrot.slane %v428, 2
      %v458 = vsel %vm444, %v446, %v457
      %v459 = vrot.slane %v429, 2
      %v460 = vsel %vm444, %v449, %v459
      %v461 = vrot.slane %v430, 2
      %v462 = vsel %vm444, %v452, %v461
      %v463 = vrot.slane %v431, 2
      %v464 = vsel %vm444, %v455, %v463
      %v473 = vadd.f32 %v408, %v447
      %v474 = vadd.f32 %v409, %v450
      %v475 = vadd.f32 %v410, %v453
      %v476 = vadd.f32 %v411, %v456
      %v477 = vadd.f32 %v412, %v458
      %v478 = vadd.f32 %v413, %v460
      %v479 = vadd.f32 %v414, %v462
      %v480 = vadd.f32 %v415, %v464
      %v481 = vperm.slane %v388, 6
      %v482 = vperm.slane %v389, 6
      %v483 = vperm.slane %v390, 6
      %v484 = vperm.slane %v391, 6
      %v485 = vmul.f32 %v382, %v481
      %v486 = vmul.f32 %v358, %v482
      %v487 = vmul.f32 %v359, %v483
      %v488 = vmul.f32 %v360, %v484
      %v489 = vmul.f32 %v383, %v481
      %v490 = vmul.f32 %v361, %v482
      %v491 = vmul.f32 %v362, %v483
      %v492 = vmul.f32 %v363, %v484
      %v493 = vmul.f32 %v384, %v481
      %v494 = vmul.f32 %v364, %v482
      %v495 = vmul.f32 %v365, %v483
      %v496 = vmul.f32 %v366, %v484
      %vm509 = vcmask 1043456
      %v510 = vrot.slane %v485, 4
      %v511 = vrot.slane %v489, 4
      %v512 = vsel %vm509, %v510, %v511
      %v513 = vrot.slane %v486, 4
      %v514 = vrot.slane %v490, 4
      %v515 = vsel %vm509, %v513, %v514
      %v516 = vrot.slane %v487, 4
      %v517 = vrot.slane %v491, 4
      %v518 = vsel %vm509, %v516, %v517
      %v519 = vrot.slane %v488, 4
      %v520 = vrot.slane %v492, 4
      %v521 = vsel %vm509, %v519, %v520
      %v522 = vrot.slane %v493, 4
      %v523 = vsel %vm509, %v511, %v522
      %v524 = vrot.slane %v494, 4
      %v525 = vsel %vm509, %v514, %v524
      %v526 = vrot.slane %v495, 4
      %v527 = vsel %vm509, %v517, %v526
      %v528 = vrot.slane %v496, 4
      %v529 = vsel %vm509, %v520, %v528
      %v538 = vadd.f32 %v473, %v512
      %v539 = vadd.f32 %v474, %v515
      %v540 = vadd.f32 %v475, %v518
      %v541 = vadd.f32 %v476, %v521
      %v542 = vadd.f32 %v477, %v523
      %v543 = vadd.f32 %v478, %v525
      %v544 = vadd.f32 %v479, %v527
      %v545 = vadd.f32 %v480, %v529
      %v546 = vperm.slane %v388, 1
      %v547 = vperm.slane %v389, 1
      %v548 = vperm.slane %v390, 1
      %v549 = vperm.slane %v391, 1
      %554 = vrot.lane.b32.xlu0 %v546, 64
      %v555 = vpop.permute.xlu0 %554
      %556 = vrot.lane.b32.xlu0 %v547, 64
      %v557 = vpop.permute.xlu0 %556
      %558 = vrot.lane.b32.xlu0 %v548, 64
      %v559 = vpop.permute.xlu0 %558
      %560 = vrot.lane.b32.xlu0 %v549, 64
      %v561 = vpop.permute.xlu0 %560
      %v562 = vsel %vm357, %v555, %v557
      %v563 = vsel %vm357, %v557, %v559
      %v564 = vsel %vm357, %v559, %v561
      %v570 = vmul.f32 %v382, %v555
      %v571 = vmul.f32 %v358, %v562
      %v572 = vmul.f32 %v359, %v563
      %v573 = vmul.f32 %v360, %v564
      %v574 = vmul.f32 %v385, %v561
      %v575 = vmul.f32 %v383, %v555
      %v576 = vmul.f32 %v361, %v562
      %v577 = vmul.f32 %v362, %v563
      %v578 = vmul.f32 %v363, %v564
      %v579 = vmul.f32 %v386, %v561
      %590 = vrot.lane.b32.xlu0 %v570, 64
      %v591 = vpop.permute.xlu0 %590
      %592 = vrot.lane.b32.xlu0 %v571, 64
      %v593 = vpop.permute.xlu0 %592
      %594 = vrot.lane.b32.xlu0 %v572, 64
      %v595 = vpop.permute.xlu0 %594
      %596 = vrot.lane.b32.xlu0 %v573, 64
      %v597 = vpop.permute.xlu0 %596
      %598 = vrot.lane.b32.xlu0 %v574, 64
      %v599 = vpop.permute.xlu0 %598
      %600 = vrot.lane.b32.xlu0 %v575, 64
      %v601 = vpop.permute.xlu0 %600
      %602 = vrot.lane.b32.xlu0 %v576, 64
      %v603 = vpop.permute.xlu0 %602
      %604 = vrot.lane.b32.xlu0 %v577, 64
      %v605 = vpop.permute.xlu0 %604
      %606 = vrot.lane.b32.xlu0 %v578, 64
      %v607 = vpop.permute.xlu0 %606
      %608 = vrot.lane.b32.xlu0 %v579, 64
      %v609 = vpop.permute.xlu0 %608
      %v610 = vsel %vm357, %v591, %v593
      %v611 = vsel %vm357, %v593, %v595
      %v612 = vsel %vm357, %v595, %v597
      %v613 = vsel %vm357, %v597, %v599
      %v614 = vsel %vm357, %v601, %v603
      %v615 = vsel %vm357, %v603, %v605
      %v616 = vsel %vm357, %v605, %v607
      %v617 = vsel %vm357, %v607, %v609
      %v626 = vadd.f32 %v538, %v610
      %v627 = vadd.f32 %v539, %v611
      %v628 = vadd.f32 %v540, %v612
      %v629 = vadd.f32 %v541, %v613
      %v630 = vadd.f32 %v542, %v614
      %v631 = vadd.f32 %v543, %v615
      %v632 = vadd.f32 %v544, %v616
      %v633 = vadd.f32 %v545, %v617
      %v634 = vperm.slane %v388, 4
      %v635 = vperm.slane %v389, 4
      %v636 = vperm.slane %v390, 4
      %v637 = vperm.slane %v391, 4
      %642 = vrot.lane.b32.xlu0 %v634, 64
      %v643 = vpop.permute.xlu0 %642
      %644 = vrot.lane.b32.xlu0 %v635, 64
      %v645 = vpop.permute.xlu0 %644
      %646 = vrot.lane.b32.xlu0 %v636, 64
      %v647 = vpop.permute.xlu0 %646
      %648 = vrot.lane.b32.xlu0 %v637, 64
      %v649 = vpop.permute.xlu0 %648
      %v650 = vsel %vm357, %v643, %v645
      %v651 = vsel %vm357, %v645, %v647
      %v652 = vsel %vm357, %v647, %v649
      %v658 = vmul.f32 %v382, %v643
      %v659 = vmul.f32 %v358, %v650
      %v660 = vmul.f32 %v359, %v651
      %v661 = vmul.f32 %v360, %v652
      %v662 = vmul.f32 %v385, %v649
      %v663 = vmul.f32 %v383, %v643
      %v664 = vmul.f32 %v361, %v650
      %v665 = vmul.f32 %v362, %v651
      %v666 = vmul.f32 %v363, %v652
      %v667 = vmul.f32 %v386, %v649
      %v668 = vmul.f32 %v384, %v643
      %v669 = vmul.f32 %v364, %v650
      %v670 = vmul.f32 %v365, %v651
      %v671 = vmul.f32 %v366, %v652
      %v672 = vmul.f32 %v387, %v649
      %v688 = vrot.slane %v658, 2
      %v689 = vrot.slane %v663, 2
      %v690 = vsel %vm444, %v688, %v689
      %v691 = vrot.slane %v659, 2
      %v692 = vrot.slane %v664, 2
      %v693 = vsel %vm444, %v691, %v692
      %v694 = vrot.slane %v660, 2
      %v695 = vrot.slane %v665, 2
      %v696 = vsel %vm444, %v694, %v695
      %v697 = vrot.slane %v661, 2
      %v698 = vrot.slane %v666, 2
      %v699 = vsel %vm444, %v697, %v698
      %v700 = vrot.slane %v662, 2
      %v701 = vrot.slane %v667, 2
      %v702 = vsel %vm444, %v700, %v701
      %v703 = vrot.slane %v668, 2
      %v704 = vsel %vm444, %v689, %v703
      %v705 = vrot.slane %v669, 2
      %v706 = vsel %vm444, %v692, %v705
      %v707 = vrot.slane %v670, 2
      %v708 = vsel %vm444, %v695, %v707
      %v709 = vrot.slane %v671, 2
      %v710 = vsel %vm444, %v698, %v709
      %v711 = vrot.slane %v672, 2
      %v712 = vsel %vm444, %v701, %v711
      %713 = vrot.lane.b32.xlu0 %v690, 64
      %v714 = vpop.permute.xlu0 %713
      %715 = vrot.lane.b32.xlu0 %v693, 64
      %v716 = vpop.permute.xlu0 %715
      %717 = vrot.lane.b32.xlu0 %v696, 64
      %v718 = vpop.permute.xlu0 %717
      %719 = vrot.lane.b32.xlu0 %v699, 64
      %v720 = vpop.permute.xlu0 %719
      %721 = vrot.lane.b32.xlu0 %v702, 64
      %v722 = vpop.permute.xlu0 %721
      %723 = vrot.lane.b32.xlu0 %v704, 64
      %v724 = vpop.permute.xlu0 %723
      %725 = vrot.lane.b32.xlu0 %v706, 64
      %v726 = vpop.permute.xlu0 %725
      %727 = vrot.lane.b32.xlu0 %v708, 64
      %v728 = vpop.permute.xlu0 %727
      %729 = vrot.lane.b32.xlu0 %v710, 64
      %v730 = vpop.permute.xlu0 %729
      %731 = vrot.lane.b32.xlu0 %v712, 64
      %v732 = vpop.permute.xlu0 %731
      %v733 = vsel %vm357, %v714, %v716
      %v734 = vsel %vm357, %v716, %v718
      %v735 = vsel %vm357, %v718, %v720
      %v736 = vsel %vm357, %v720, %v722
      %v737 = vsel %vm357, %v724, %v726
      %v738 = vsel %vm357, %v726, %v728
      %v739 = vsel %vm357, %v728, %v730
      %v740 = vsel %vm357, %v730, %v732
      %v749 = vadd.f32 %v626, %v733
      %v750 = vadd.f32 %v627, %v734
      %v751 = vadd.f32 %v628, %v735
      %v752 = vadd.f32 %v629, %v736
      %v753 = vadd.f32 %v630, %v737
      %v754 = vadd.f32 %v631, %v738
      %v755 = vadd.f32 %v632, %v739
      %v756 = vadd.f32 %v633, %v740
      %v757 = vperm.slane %v388, 7
      %v758 = vperm.slane %v389, 7
      %v759 = vperm.slane %v390, 7
      %v760 = vperm.slane %v391, 7
      %765 = vrot.lane.b32.xlu0 %v757, 64
      %v766 = vpop.permute.xlu0 %765
      %767 = vrot.lane.b32.xlu0 %v758, 64
      %v768 = vpop.permute.xlu0 %767
      %769 = vrot.lane.b32.xlu0 %v759, 64
      %v770 = vpop.permute.xlu0 %769
      %771 = vrot.lane.b32.xlu0 %v760, 64
      %v772 = vpop.permute.xlu0 %771
      %v773 = vsel %vm357, %v766, %v768
      %v774 = vsel %vm357, %v768, %v770
      %v775 = vsel %vm357, %v770, %v772
      %v781 = vmul.f32 %v382, %v766
      %v782 = vmul.f32 %v358, %v773
      %v783 = vmul.f32 %v359, %v774
      %v784 = vmul.f32 %v360, %v775
      %v785 = vmul.f32 %v385, %v772
      %v786 = vmul.f32 %v383, %v766
      %v787 = vmul.f32 %v361, %v773
      %v788 = vmul.f32 %v362, %v774
      %v789 = vmul.f32 %v363, %v775
      %v790 = vmul.f32 %v386, %v772
      %v791 = vmul.f32 %v384, %v766
      %v792 = vmul.f32 %v364, %v773
      %v793 = vmul.f32 %v365, %v774
      %v794 = vmul.f32 %v366, %v775
      %v795 = vmul.f32 %v387, %v772
      %v811 = vrot.slane %v781, 4
      %v812 = vrot.slane %v786, 4
      %v813 = vsel %vm509, %v811, %v812
      %v814 = vrot.slane %v782, 4
      %v815 = vrot.slane %v787, 4
      %v816 = vsel %vm509, %v814, %v815
      %v817 = vrot.slane %v783, 4
      %v818 = vrot.slane %v788, 4
      %v819 = vsel %vm509, %v817, %v818
      %v820 = vrot.slane %v784, 4
      %v821 = vrot.slane %v789, 4
      %v822 = vsel %vm509, %v820, %v821
      %v823 = vrot.slane %v785, 4
      %v824 = vrot.slane %v790, 4
      %v825 = vsel %vm509, %v823, %v824
      %v826 = vrot.slane %v791, 4
      %v827 = vsel %vm509, %v812, %v826
      %v828 = vrot.slane %v792, 4
      %v829 = vsel %vm509, %v815, %v828
      %v830 = vrot.slane %v793, 4
      %v831 = vsel %vm509, %v818, %v830
      %v832 = vrot.slane %v794, 4
      %v833 = vsel %vm509, %v821, %v832
      %v834 = vrot.slane %v795, 4
      %v835 = vsel %vm509, %v824, %v834
      %836 = vrot.lane.b32.xlu0 %v813, 64
      %v837 = vpop.permute.xlu0 %836
      %838 = vrot.lane.b32.xlu0 %v816, 64
      %v839 = vpop.permute.xlu0 %838
      %840 = vrot.lane.b32.xlu0 %v819, 64
      %v841 = vpop.permute.xlu0 %840
      %842 = vrot.lane.b32.xlu0 %v822, 64
      %v843 = vpop.permute.xlu0 %842
      %844 = vrot.lane.b32.xlu0 %v825, 64
      %v845 = vpop.permute.xlu0 %844
      %846 = vrot.lane.b32.xlu0 %v827, 64
      %v847 = vpop.permute.xlu0 %846
      %848 = vrot.lane.b32.xlu0 %v829, 64
      %v849 = vpop.permute.xlu0 %848
      %850 = vrot.lane.b32.xlu0 %v831, 64
      %v851 = vpop.permute.xlu0 %850
      %852 = vrot.lane.b32.xlu0 %v833, 64
      %v853 = vpop.permute.xlu0 %852
      %854 = vrot.lane.b32.xlu0 %v835, 64
      %v855 = vpop.permute.xlu0 %854
      %v856 = vsel %vm357, %v837, %v839
      %v857 = vsel %vm357, %v839, %v841
      %v858 = vsel %vm357, %v841, %v843
      %v859 = vsel %vm357, %v843, %v845
      %v860 = vsel %vm357, %v847, %v849
      %v861 = vsel %vm357, %v849, %v851
      %v862 = vsel %vm357, %v851, %v853
      %v863 = vsel %vm357, %v853, %v855
      %v872 = vadd.f32 %v749, %v856
      %v873 = vadd.f32 %v750, %v857
      %v874 = vadd.f32 %v751, %v858
      %v875 = vadd.f32 %v752, %v859
      %v876 = vadd.f32 %v753, %v860
      %v877 = vadd.f32 %v754, %v861
      %v878 = vadd.f32 %v755, %v862
      %v879 = vadd.f32 %v756, %v863
      %v880 = vperm.slane %v388, 2
      %v881 = vperm.slane %v389, 2
      %v882 = vperm.slane %v390, 2
      %v883 = vperm.slane %v391, 2
      %v884 = vmul.f32 %v358, %v880
      %v885 = vmul.f32 %v359, %v881
      %v886 = vmul.f32 %v360, %v882
      %v887 = vmul.f32 %v385, %v883
      %v888 = vmul.f32 %v361, %v880
      %v889 = vmul.f32 %v362, %v881
      %v890 = vmul.f32 %v363, %v882
      %v891 = vmul.f32 %v386, %v883
      %v892 = vadd.f32 %v872, %v884
      %v893 = vadd.f32 %v873, %v885
      %v894 = vadd.f32 %v874, %v886
      %v895 = vadd.f32 %v875, %v887
      %v896 = vadd.f32 %v876, %v888
      %v897 = vadd.f32 %v877, %v889
      %v898 = vadd.f32 %v878, %v890
      %v899 = vadd.f32 %v879, %v891
      %v900 = vperm.slane %v388, 5
      %v901 = vperm.slane %v389, 5
      %v902 = vperm.slane %v390, 5
      %v903 = vperm.slane %v391, 5
      %v904 = vmul.f32 %v358, %v900
      %v905 = vmul.f32 %v359, %v901
      %v906 = vmul.f32 %v360, %v902
      %v907 = vmul.f32 %v385, %v903
      %v908 = vmul.f32 %v361, %v900
      %v909 = vmul.f32 %v362, %v901
      %v910 = vmul.f32 %v363, %v902
      %v911 = vmul.f32 %v386, %v903
      %v912 = vmul.f32 %v364, %v900
      %v913 = vmul.f32 %v365, %v901
      %v914 = vmul.f32 %v366, %v902
      %v915 = vmul.f32 %v387, %v903
      %v928 = vrot.slane %v904, 2
      %v929 = vrot.slane %v908, 2
      %v930 = vsel %vm444, %v928, %v929
      %v931 = vrot.slane %v905, 2
      %v932 = vrot.slane %v909, 2
      %v933 = vsel %vm444, %v931, %v932
      %v934 = vrot.slane %v906, 2
      %v935 = vrot.slane %v910, 2
      %v936 = vsel %vm444, %v934, %v935
      %v937 = vrot.slane %v907, 2
      %v938 = vrot.slane %v911, 2
      %v939 = vsel %vm444, %v937, %v938
      %v940 = vrot.slane %v912, 2
      %v941 = vsel %vm444, %v929, %v940
      %v942 = vrot.slane %v913, 2
      %v943 = vsel %vm444, %v932, %v942
      %v944 = vrot.slane %v914, 2
      %v945 = vsel %vm444, %v935, %v944
      %v946 = vrot.slane %v915, 2
      %v947 = vsel %vm444, %v938, %v946
      %v956 = vadd.f32 %v892, %v930
      %v957 = vadd.f32 %v893, %v933
      %v958 = vadd.f32 %v894, %v936
      %v959 = vadd.f32 %v895, %v939
      %v960 = vadd.f32 %v896, %v941
      %v961 = vadd.f32 %v897, %v943
      %v962 = vadd.f32 %v898, %v945
      %v963 = vadd.f32 %v899, %v947
      %v964 = vperm.slane %v392, 0
      %v965 = vperm.slane %v393, 0
      %v966 = vperm.slane %v394, 0
      %v967 = vperm.slane %v395, 0
      %v968 = vmul.f32 %v358, %v964
      %v969 = vmul.f32 %v359, %v965
      %v970 = vmul.f32 %v360, %v966
      %v971 = vmul.f32 %v385, %v967
      %v972 = vmul.f32 %v361, %v964
      %v973 = vmul.f32 %v362, %v965
      %v974 = vmul.f32 %v363, %v966
      %v975 = vmul.f32 %v386, %v967
      %v976 = vmul.f32 %v364, %v964
      %v977 = vmul.f32 %v365, %v965
      %v978 = vmul.f32 %v366, %v966
      %v979 = vmul.f32 %v387, %v967
      %v992 = vrot.slane %v968, 4
      %v993 = vrot.slane %v972, 4
      %v994 = vsel %vm509, %v992, %v993
      %v995 = vrot.slane %v969, 4
      %v996 = vrot.slane %v973, 4
      %v997 = vsel %vm509, %v995, %v996
      %v998 = vrot.slane %v970, 4
      %v999 = vrot.slane %v974, 4
      %v1000 = vsel %vm509, %v998, %v999
      %v1001 = vrot.slane %v971, 4
      %v1002 = vrot.slane %v975, 4
      %v1003 = vsel %vm509, %v1001, %v1002
      %v1004 = vrot.slane %v976, 4
      %v1005 = vsel %vm509, %v993, %v1004
      %v1006 = vrot.slane %v977, 4
      %v1007 = vsel %vm509, %v996, %v1006
      %v1008 = vrot.slane %v978, 4
      %v1009 = vsel %vm509, %v999, %v1008
      %v1010 = vrot.slane %v979, 4
      %v1011 = vsel %vm509, %v1002, %v1010
      %v1020 = vadd.f32 %v956, %v994
      %v1021 = vadd.f32 %v957, %v997
      %v1022 = vadd.f32 %v958, %v1000
      %v1023 = vadd.f32 %v959, %v1003
      %v1024 = vadd.f32 %v960, %v1005
      %v1025 = vadd.f32 %v961, %v1007
      %v1026 = vadd.f32 %v962, %v1009
      %v1027 = vadd.f32 %v963, %v1011
      %v1028 = vpack.c.bf16 %v1024, %v1020
      %v1029 = vpack.c.bf16 %v1025, %v1021
      %v1030 = vpack.c.bf16 %v1026, %v1022
      %v1031 = vpack.c.bf16 %v1027, %v1023
      %v1032 = vld [vmem:[%s2] sm:$0xff]
      %v1033 = vld [vmem:[%s2 + $0x8] sm:$0xff]
      %v1034 = vld [vmem:[%s2 + $0x10] sm:$0xff]
      %v1035 = vld [vmem:[%s2 + $0x18] sm:$0xff]
      %v1036 = vld [vmem:[%s2 + $0x20] sm:$0xff]
      %v1037 = vld [vmem:[%s2 + $0x28] sm:$0xff]
      %v1038 = vld [vmem:[%s2 + $0x30] sm:$0xff]
      %v1039 = vld [vmem:[%s2 + $0x38] sm:$0xff]
      %v1040 = vld [vmem:[%s2 + $0x40] sm:$0xff]
      %v1041 = vld [vmem:[%s2 + $0x48] sm:$0xff]
      %v1042 = vld [vmem:[%s2 + $0x50] sm:$0xff]
      %v1043 = vld [vmem:[%s2 + $0x58] sm:$0xff]
      %v1044 = vld [vmem:[%s2 + $0x60] sm:$0xff]
      %v1045 = vld [vmem:[%s2 + $0x68] sm:$0xff]
      %v1046 = vld [vmem:[%s2 + $0x70] sm:$0xff]
      %v1047 = vld [vmem:[%s2 + $0x78] sm:$0xff]
      %v1048 = vld [vmem:[%s2 + $0x80] sm:$0xff]
      %v1049 = vld [vmem:[%s2 + $0x88] sm:$0xff]
      %v1050 = vld [vmem:[%s2 + $0x90] sm:$0xff]
      %v1051 = vld [vmem:[%s2 + $0x98] sm:$0xff]
      %v1052 = vld [vmem:[%s2 + $0xa0] sm:$0xff]
      %v1053 = vld [vmem:[%s2 + $0xa8] sm:$0xff]
      %v1054 = vld [vmem:[%s2 + $0xb0] sm:$0xff]
      %v1055 = vld [vmem:[%s2 + $0xb8] sm:$0xff]
      %v1056 = vld [vmem:[%s2 + $0xc0] sm:$0xff]
      %v1057 = vld [vmem:[%s2 + $0xc8] sm:$0xff]
      %v1058 = vld [vmem:[%s2 + $0xd0] sm:$0xff]
      %v1059 = vld [vmem:[%s2 + $0xd8] sm:$0xff]
      %v1060 = vld [vmem:[%s2 + $0xe0] sm:$0xff]
      %v1061 = vld [vmem:[%s2 + $0xe8] sm:$0xff]
      %v1062 = vld [vmem:[%s2 + $0xf0] sm:$0xff]
      %v1063 = vld [vmem:[%s2 + $0xf8] sm:$0xff]
      %v1064 = vld [vmem:[%s2 + $0x100] sm:$0xff]
      %v1065 = vld [vmem:[%s2 + $0x108] sm:$0xff]
      %v1066 = vld [vmem:[%s2 + $0x110] sm:$0xff]
      %v1067 = vld [vmem:[%s2 + $0x118] sm:$0xff]
      %v1068 = vld [vmem:[%s2 + $0x120] sm:$0xff]
      %v1069 = vld [vmem:[%s2 + $0x128] sm:$0xff]
      %v1070 = vld [vmem:[%s2 + $0x130] sm:$0xff]
      %v1071 = vld [vmem:[%s2 + $0x138] sm:$0xff]
      %v1072 = vld [vmem:[%s2 + $0x140] sm:$0xff]
      %v1073 = vld [vmem:[%s2 + $0x148] sm:$0xff]
      %v1074 = vld [vmem:[%s2 + $0x150] sm:$0xff]
      %v1075 = vld [vmem:[%s2 + $0x158] sm:$0xff]
      %v1076 = vld [vmem:[%s2 + $0x160] sm:$0xff]
      %v1077 = vld [vmem:[%s2 + $0x168] sm:$0xff]
      %v1078 = vld [vmem:[%s2 + $0x170] sm:$0xff]
      %v1079 = vld [vmem:[%s2 + $0x178] sm:$0xff]
      %v1080 = vld [vmem:[%s2 + $0x180] sm:$0xff]
      %v1081 = vld [vmem:[%s2 + $0x188] sm:$0xff]
      %v1082 = vld [vmem:[%s2 + $0x190] sm:$0xff]
      %v1083 = vld [vmem:[%s2 + $0x198] sm:$0xff]
      %v1084 = vld [vmem:[%s2 + $0x1a0] sm:$0xff]
      %v1085 = vld [vmem:[%s2 + $0x1a8] sm:$0xff]
      %v1086 = vld [vmem:[%s2 + $0x1b0] sm:$0xff]
      %v1087 = vld [vmem:[%s2 + $0x1b8] sm:$0xff]
      %v1088 = vld [vmem:[%s2 + $0x1c0] sm:$0xff]
      %v1089 = vld [vmem:[%s2 + $0x1c8] sm:$0xff]
      %v1090 = vld [vmem:[%s2 + $0x1d0] sm:$0xff]
      %v1091 = vld [vmem:[%s2 + $0x1d8] sm:$0xff]
      %v1092 = vld [vmem:[%s2 + $0x1e0] sm:$0xff]
      %v1093 = vld [vmem:[%s2 + $0x1e8] sm:$0xff]
      %v1094 = vld [vmem:[%s2 + $0x1f0] sm:$0xff]
      %v1095 = vld [vmem:[%s2 + $0x1f8] sm:$0xff]
      %v1096 = vld [vmem:[%s2 + $0x200] sm:$0xff]
      %v1097 = vld [vmem:[%s2 + $0x208] sm:$0xff]
      %v1098 = vld [vmem:[%s2 + $0x210] sm:$0xff]
      %v1099 = vld [vmem:[%s2 + $0x218] sm:$0xff]
      %v1100 = vld [vmem:[%s2 + $0x220] sm:$0xff]
      %v1101 = vld [vmem:[%s2 + $0x228] sm:$0xff]
      %v1102 = vld [vmem:[%s2 + $0x230] sm:$0xff]
      %v1103 = vld [vmem:[%s2 + $0x238] sm:$0xff]
      %v1104 = vld [vmem:[%s2 + $0x240] sm:$0xff]
      %v1105 = vld [vmem:[%s2 + $0x248] sm:$0xff]
      %v1106 = vld [vmem:[%s2 + $0x250] sm:$0xff]
      %v1107 = vld [vmem:[%s2 + $0x258] sm:$0xff]
      %v1108 = vld [vmem:[%s2 + $0x260] sm:$0xff]
      %v1109 = vld [vmem:[%s2 + $0x268] sm:$0xff]
      %v1110 = vld [vmem:[%s2 + $0x270] sm:$0xff]
      %v1111 = vld [vmem:[%s2 + $0x278] sm:$0xff]
      %v1112 = vld [vmem:[%s2 + $0x280] sm:$0xff]
      %v1113 = vld [vmem:[%s2 + $0x288] sm:$0xff]
      %v1114 = vld [vmem:[%s2 + $0x290] sm:$0xff]
      %v1115 = vld [vmem:[%s2 + $0x298] sm:$0xff]
      %v1116 = vld [vmem:[%s2 + $0x2a0] sm:$0xff]
      %v1117 = vld [vmem:[%s2 + $0x2a8] sm:$0xff]
      %v1118 = vld [vmem:[%s2 + $0x2b0] sm:$0xff]
      %v1119 = vld [vmem:[%s2 + $0x2b8] sm:$0xff]
      %v1120 = vld [vmem:[%s2 + $0x2c0] sm:$0xff]
      %v1121 = vld [vmem:[%s2 + $0x2c8] sm:$0xff]
      %v1122 = vld [vmem:[%s2 + $0x2d0] sm:$0xff]
      %v1123 = vld [vmem:[%s2 + $0x2d8] sm:$0xff]
      %v1124 = vld [vmem:[%s2 + $0x2e0] sm:$0xff]
      %v1125 = vld [vmem:[%s2 + $0x2e8] sm:$0xff]
      %v1126 = vld [vmem:[%s2 + $0x2f0] sm:$0xff]
      %v1127 = vld [vmem:[%s2 + $0x2f8] sm:$0xff]
      %v1128 = vld [vmem:[%s2 + $0x300] sm:$0xff]
      %v1129 = vld [vmem:[%s2 + $0x308] sm:$0xff]
      %v1130 = vld [vmem:[%s2 + $0x310] sm:$0xff]
      %v1131 = vld [vmem:[%s2 + $0x318] sm:$0xff]
      %v1132 = vld [vmem:[%s2 + $0x320] sm:$0xff]
      %v1133 = vld [vmem:[%s2 + $0x328] sm:$0xff]
      %v1134 = vld [vmem:[%s2 + $0x330] sm:$0xff]
      %v1135 = vld [vmem:[%s2 + $0x338] sm:$0xff]
      %v1136 = vld [vmem:[%s2 + $0x340] sm:$0xff]
      %v1137 = vld [vmem:[%s2 + $0x348] sm:$0xff]
      %v1138 = vld [vmem:[%s2 + $0x350] sm:$0xff]
      %v1139 = vld [vmem:[%s2 + $0x358] sm:$0xff]
      %v1140 = vld [vmem:[%s2 + $0x360] sm:$0xff]
      %v1141 = vld [vmem:[%s2 + $0x368] sm:$0xff]
      %v1142 = vld [vmem:[%s2 + $0x370] sm:$0xff]
      %v1143 = vld [vmem:[%s2 + $0x378] sm:$0xff]
      %v1144 = vld [vmem:[%s2 + $0x380] sm:$0xff]
      %v1145 = vld [vmem:[%s2 + $0x388] sm:$0xff]
      %v1146 = vld [vmem:[%s2 + $0x390] sm:$0xff]
      %v1147 = vld [vmem:[%s2 + $0x398] sm:$0xff]
      %v1148 = vld [vmem:[%s2 + $0x3a0] sm:$0xff]
      %v1149 = vld [vmem:[%s2 + $0x3a8] sm:$0xff]
      %v1150 = vld [vmem:[%s2 + $0x3b0] sm:$0xff]
      %v1151 = vld [vmem:[%s2 + $0x3b8] sm:$0xff]
      %v1152 = vld [vmem:[%s2 + $0x3c0] sm:$0xff]
      %v1153 = vld [vmem:[%s2 + $0x3c8] sm:$0xff]
      %v1154 = vld [vmem:[%s2 + $0x3d0] sm:$0xff]
      %v1155 = vld [vmem:[%s2 + $0x3d8] sm:$0xff]
      %v1156 = vld [vmem:[%s2 + $0x3e0] sm:$0xff]
      %v1157 = vld [vmem:[%s2 + $0x3e8] sm:$0xff]
      %v1158 = vld [vmem:[%s2 + $0x3f0] sm:$0xff]
      %v1159 = vld [vmem:[%s2 + $0x3f8] sm:$0xff]
      %v1288 = vunpack.c.l.b16 %v1032
      %v1289 = vunpack.c.h.b16 %v1032
      %v1290 = vunpack.c.l.b16 %v1033
      %v1291 = vunpack.c.h.b16 %v1033
      %v1292 = vunpack.c.l.b16 %v1034
      %v1293 = vunpack.c.h.b16 %v1034
      %v1294 = vunpack.c.l.b16 %v1035
      %v1295 = vunpack.c.h.b16 %v1035
      %v1296 = vunpack.c.l.b16 %v1036
      %v1297 = vunpack.c.h.b16 %v1036
      %v1298 = vunpack.c.l.b16 %v1037
      %v1299 = vunpack.c.h.b16 %v1037
      %v1300 = vunpack.c.l.b16 %v1038
      %v1301 = vunpack.c.h.b16 %v1038
      %v1302 = vunpack.c.l.b16 %v1039
      %v1303 = vunpack.c.h.b16 %v1039
      %v1304 = vunpack.c.l.b16 %v1040
      %v1305 = vunpack.c.h.b16 %v1040
      %v1306 = vunpack.c.l.b16 %v1041
      %v1307 = vunpack.c.h.b16 %v1041
      %v1308 = vunpack.c.l.b16 %v1042
      %v1309 = vunpack.c.h.b16 %v1042
      %v1310 = vunpack.c.l.b16 %v1043
      %v1311 = vunpack.c.h.b16 %v1043
      %v1312 = vunpack.c.l.b16 %v1044
      %v1313 = vunpack.c.h.b16 %v1044
      %v1314 = vunpack.c.l.b16 %v1045
      %v1315 = vunpack.c.h.b16 %v1045
      %v1316 = vunpack.c.l.b16 %v1046
      %v1317 = vunpack.c.h.b16 %v1046
      %v1318 = vunpack.c.l.b16 %v1047
      %v1319 = vunpack.c.h.b16 %v1047
      %v1320 = vunpack.c.l.b16 %v1048
      %v1321 = vunpack.c.h.b16 %v1048
      %v1322 = vunpack.c.l.b16 %v1049
      %v1323 = vunpack.c.h.b16 %v1049
      %v1324 = vunpack.c.l.b16 %v1050
      %v1325 = vunpack.c.h.b16 %v1050
      %v1326 = vunpack.c.l.b16 %v1051
      %v1327 = vunpack.c.h.b16 %v1051
      %v1328 = vunpack.c.l.b16 %v1052
      %v1329 = vunpack.c.h.b16 %v1052
      %v1330 = vunpack.c.l.b16 %v1053
      %v1331 = vunpack.c.h.b16 %v1053
      %v1332 = vunpack.c.l.b16 %v1054
      %v1333 = vunpack.c.h.b16 %v1054
      %v1334 = vunpack.c.l.b16 %v1055
      %v1335 = vunpack.c.h.b16 %v1055
      %v1336 = vunpack.c.l.b16 %v1056
      %v1337 = vunpack.c.h.b16 %v1056
      %v1338 = vunpack.c.l.b16 %v1057
      %v1339 = vunpack.c.h.b16 %v1057
      %v1340 = vunpack.c.l.b16 %v1058
      %v1341 = vunpack.c.h.b16 %v1058
      %v1342 = vunpack.c.l.b16 %v1059
      %v1343 = vunpack.c.h.b16 %v1059
      %v1344 = vunpack.c.l.b16 %v1060
      %v1345 = vunpack.c.h.b16 %v1060
      %v1346 = vunpack.c.l.b16 %v1061
      %v1347 = vunpack.c.h.b16 %v1061
      %v1348 = vunpack.c.l.b16 %v1062
      %v1349 = vunpack.c.h.b16 %v1062
      %v1350 = vunpack.c.l.b16 %v1063
      %v1351 = vunpack.c.h.b16 %v1063
      %v1352 = vunpack.c.l.b16 %v1064
      %v1353 = vunpack.c.h.b16 %v1064
      %v1354 = vunpack.c.l.b16 %v1065
      %v1355 = vunpack.c.h.b16 %v1065
      %v1356 = vunpack.c.l.b16 %v1066
      %v1357 = vunpack.c.h.b16 %v1066
      %v1358 = vunpack.c.l.b16 %v1067
      %v1359 = vunpack.c.h.b16 %v1067
      %v1360 = vunpack.c.l.b16 %v1068
      %v1361 = vunpack.c.h.b16 %v1068
      %v1362 = vunpack.c.l.b16 %v1069
      %v1363 = vunpack.c.h.b16 %v1069
      %v1364 = vunpack.c.l.b16 %v1070
      %v1365 = vunpack.c.h.b16 %v1070
      %v1366 = vunpack.c.l.b16 %v1071
      %v1367 = vunpack.c.h.b16 %v1071
      %v1368 = vunpack.c.l.b16 %v1072
      %v1369 = vunpack.c.h.b16 %v1072
      %v1370 = vunpack.c.l.b16 %v1073
      %v1371 = vunpack.c.h.b16 %v1073
      %v1372 = vunpack.c.l.b16 %v1074
      %v1373 = vunpack.c.h.b16 %v1074
      %v1374 = vunpack.c.l.b16 %v1075
      %v1375 = vunpack.c.h.b16 %v1075
      %v1376 = vunpack.c.l.b16 %v1076
      %v1377 = vunpack.c.h.b16 %v1076
      %v1378 = vunpack.c.l.b16 %v1077
      %v1379 = vunpack.c.h.b16 %v1077
      %v1380 = vunpack.c.l.b16 %v1078
      %v1381 = vunpack.c.h.b16 %v1078
      %v1382 = vunpack.c.l.b16 %v1079
      %v1383 = vunpack.c.h.b16 %v1079
      %v1384 = vunpack.c.l.b16 %v1080
      %v1385 = vunpack.c.h.b16 %v1080
      %v1386 = vunpack.c.l.b16 %v1081
      %v1387 = vunpack.c.h.b16 %v1081
      %v1388 = vunpack.c.l.b16 %v1082
      %v1389 = vunpack.c.h.b16 %v1082
      %v1390 = vunpack.c.l.b16 %v1083
      %v1391 = vunpack.c.h.b16 %v1083
      %v1392 = vunpack.c.l.b16 %v1084
      %v1393 = vunpack.c.h.b16 %v1084
      %v1394 = vunpack.c.l.b16 %v1085
      %v1395 = vunpack.c.h.b16 %v1085
      %v1396 = vunpack.c.l.b16 %v1086
      %v1397 = vunpack.c.h.b16 %v1086
      %v1398 = vunpack.c.l.b16 %v1087
      %v1399 = vunpack.c.h.b16 %v1087
      %v1400 = vunpack.c.l.b16 %v1088
      %v1401 = vunpack.c.h.b16 %v1088
      %v1402 = vunpack.c.l.b16 %v1089
      %v1403 = vunpack.c.h.b16 %v1089
      %v1404 = vunpack.c.l.b16 %v1090
      %v1405 = vunpack.c.h.b16 %v1090
      %v1406 = vunpack.c.l.b16 %v1091
      %v1407 = vunpack.c.h.b16 %v1091
      %v1408 = vunpack.c.l.b16 %v1092
      %v1409 = vunpack.c.h.b16 %v1092
      %v1410 = vunpack.c.l.b16 %v1093
      %v1411 = vunpack.c.h.b16 %v1093
      %v1412 = vunpack.c.l.b16 %v1094
      %v1413 = vunpack.c.h.b16 %v1094
      %v1414 = vunpack.c.l.b16 %v1095
      %v1415 = vunpack.c.h.b16 %v1095
      %v1416 = vunpack.c.l.b16 %v1096
      %v1417 = vunpack.c.h.b16 %v1096
      %v1418 = vunpack.c.l.b16 %v1097
      %v1419 = vunpack.c.h.b16 %v1097
      %v1420 = vunpack.c.l.b16 %v1098
      %v1421 = vunpack.c.h.b16 %v1098
      %v1422 = vunpack.c.l.b16 %v1099
      %v1423 = vunpack.c.h.b16 %v1099
      %v1424 = vunpack.c.l.b16 %v1100
      %v1425 = vunpack.c.h.b16 %v1100
      %v1426 = vunpack.c.l.b16 %v1101
      %v1427 = vunpack.c.h.b16 %v1101
      %v1428 = vunpack.c.l.b16 %v1102
      %v1429 = vunpack.c.h.b16 %v1102
      %v1430 = vunpack.c.l.b16 %v1103
      %v1431 = vunpack.c.h.b16 %v1103
      %v1432 = vunpack.c.l.b16 %v1104
      %v1433 = vunpack.c.h.b16 %v1104
      %v1434 = vunpack.c.l.b16 %v1105
      %v1435 = vunpack.c.h.b16 %v1105
      %v1436 = vunpack.c.l.b16 %v1106
      %v1437 = vunpack.c.h.b16 %v1106
      %v1438 = vunpack.c.l.b16 %v1107
      %v1439 = vunpack.c.h.b16 %v1107
      %v1440 = vunpack.c.l.b16 %v1108
      %v1441 = vunpack.c.h.b16 %v1108
      %v1442 = vunpack.c.l.b16 %v1109
      %v1443 = vunpack.c.h.b16 %v1109
      %v1444 = vunpack.c.l.b16 %v1110
      %v1445 = vunpack.c.h.b16 %v1110
      %v1446 = vunpack.c.l.b16 %v1111
      %v1447 = vunpack.c.h.b16 %v1111
      %v1448 = vunpack.c.l.b16 %v1112
      %v1449 = vunpack.c.h.b16 %v1112
      %v1450 = vunpack.c.l.b16 %v1113
      %v1451 = vunpack.c.h.b16 %v1113
      %v1452 = vunpack.c.l.b16 %v1114
      %v1453 = vunpack.c.h.b16 %v1114
      %v1454 = vunpack.c.l.b16 %v1115
      %v1455 = vunpack.c.h.b16 %v1115
      %v1456 = vunpack.c.l.b16 %v1116
      %v1457 = vunpack.c.h.b16 %v1116
      %v1458 = vunpack.c.l.b16 %v1117
      %v1459 = vunpack.c.h.b16 %v1117
      %v1460 = vunpack.c.l.b16 %v1118
      %v1461 = vunpack.c.h.b16 %v1118
      %v1462 = vunpack.c.l.b16 %v1119
      %v1463 = vunpack.c.h.b16 %v1119
      %v1464 = vunpack.c.l.b16 %v1120
      %v1465 = vunpack.c.h.b16 %v1120
      %v1466 = vunpack.c.l.b16 %v1121
      %v1467 = vunpack.c.h.b16 %v1121
      %v1468 = vunpack.c.l.b16 %v1122
      %v1469 = vunpack.c.h.b16 %v1122
      %v1470 = vunpack.c.l.b16 %v1123
      %v1471 = vunpack.c.h.b16 %v1123
      %v1472 = vunpack.c.l.b16 %v1124
      %v1473 = vunpack.c.h.b16 %v1124
      %v1474 = vunpack.c.l.b16 %v1125
      %v1475 = vunpack.c.h.b16 %v1125
      %v1476 = vunpack.c.l.b16 %v1126
      %v1477 = vunpack.c.h.b16 %v1126
      %v1478 = vunpack.c.l.b16 %v1127
      %v1479 = vunpack.c.h.b16 %v1127
      %v1480 = vunpack.c.l.b16 %v1128
      %v1481 = vunpack.c.h.b16 %v1128
      %v1482 = vunpack.c.l.b16 %v1129
      %v1483 = vunpack.c.h.b16 %v1129
      %v1484 = vunpack.c.l.b16 %v1130
      %v1485 = vunpack.c.h.b16 %v1130
      %v1486 = vunpack.c.l.b16 %v1131
      %v1487 = vunpack.c.h.b16 %v1131
      %v1488 = vunpack.c.l.b16 %v1132
      %v1489 = vunpack.c.h.b16 %v1132
      %v1490 = vunpack.c.l.b16 %v1133
      %v1491 = vunpack.c.h.b16 %v1133
      %v1492 = vunpack.c.l.b16 %v1134
      %v1493 = vunpack.c.h.b16 %v1134
      %v1494 = vunpack.c.l.b16 %v1135
      %v1495 = vunpack.c.h.b16 %v1135
      %v1496 = vunpack.c.l.b16 %v1136
      %v1497 = vunpack.c.h.b16 %v1136
      %v1498 = vunpack.c.l.b16 %v1137
      %v1499 = vunpack.c.h.b16 %v1137
      %v1500 = vunpack.c.l.b16 %v1138
      %v1501 = vunpack.c.h.b16 %v1138
      %v1502 = vunpack.c.l.b16 %v1139
      %v1503 = vunpack.c.h.b16 %v1139
      %v1504 = vunpack.c.l.b16 %v1140
      %v1505 = vunpack.c.h.b16 %v1140
      %v1506 = vunpack.c.l.b16 %v1141
      %v1507 = vunpack.c.h.b16 %v1141
      %v1508 = vunpack.c.l.b16 %v1142
      %v1509 = vunpack.c.h.b16 %v1142
      %v1510 = vunpack.c.l.b16 %v1143
      %v1511 = vunpack.c.h.b16 %v1143
      %v1512 = vunpack.c.l.b16 %v1144
      %v1513 = vunpack.c.h.b16 %v1144
      %v1514 = vunpack.c.l.b16 %v1145
      %v1515 = vunpack.c.h.b16 %v1145
      %v1516 = vunpack.c.l.b16 %v1146
      %v1517 = vunpack.c.h.b16 %v1146
      %v1518 = vunpack.c.l.b16 %v1147
      %v1519 = vunpack.c.h.b16 %v1147
      %v1520 = vunpack.c.l.b16 %v1148
      %v1521 = vunpack.c.h.b16 %v1148
      %v1522 = vunpack.c.l.b16 %v1149
      %v1523 = vunpack.c.h.b16 %v1149
      %v1524 = vunpack.c.l.b16 %v1150
      %v1525 = vunpack.c.h.b16 %v1150
      %v1526 = vunpack.c.l.b16 %v1151
      %v1527 = vunpack.c.h.b16 %v1151
      %v1528 = vunpack.c.l.b16 %v1152
      %v1529 = vunpack.c.h.b16 %v1152
      %v1530 = vunpack.c.l.b16 %v1153
      %v1531 = vunpack.c.h.b16 %v1153
      %v1532 = vunpack.c.l.b16 %v1154
      %v1533 = vunpack.c.h.b16 %v1154
      %v1534 = vunpack.c.l.b16 %v1155
      %v1535 = vunpack.c.h.b16 %v1155
      %v1536 = vunpack.c.l.b16 %v1156
      %v1537 = vunpack.c.h.b16 %v1156
      %v1538 = vunpack.c.l.b16 %v1157
      %v1539 = vunpack.c.h.b16 %v1157
      %v1540 = vunpack.c.l.b16 %v1158
      %v1541 = vunpack.c.h.b16 %v1158
      %v1542 = vunpack.c.l.b16 %v1159
      %v1543 = vunpack.c.h.b16 %v1159
      %v1544 = vpack.c.b16 %v1292, %v1288
      %v1545 = vpack.c.b16 %v1293, %v1289
      %v1546 = vpack.c.b16 %v1294, %v1290
      %v1547 = vpack.c.b16 %v1295, %v1291
      %v1548 = vpack.c.b16 %v1300, %v1296
      %v1549 = vpack.c.b16 %v1301, %v1297
      %v1550 = vpack.c.b16 %v1302, %v1298
      %v1551 = vpack.c.b16 %v1303, %v1299
      %v1552 = vpack.c.b16 %v1308, %v1304
      %v1553 = vpack.c.b16 %v1309, %v1305
      %v1554 = vpack.c.b16 %v1310, %v1306
      %v1555 = vpack.c.b16 %v1311, %v1307
      %v1556 = vpack.c.b16 %v1316, %v1312
      %v1557 = vpack.c.b16 %v1317, %v1313
      %v1558 = vpack.c.b16 %v1318, %v1314
      %v1559 = vpack.c.b16 %v1319, %v1315
      %v1560 = vpack.c.b16 %v1324, %v1320
      %v1561 = vpack.c.b16 %v1325, %v1321
      %v1562 = vpack.c.b16 %v1326, %v1322
      %v1563 = vpack.c.b16 %v1327, %v1323
      %v1564 = vpack.c.b16 %v1332, %v1328
      %v1565 = vpack.c.b16 %v1333, %v1329
      %v1566 = vpack.c.b16 %v1334, %v1330
      %v1567 = vpack.c.b16 %v1335, %v1331
      %v1568 = vpack.c.b16 %v1340, %v1336
      %v1569 = vpack.c.b16 %v1341, %v1337
      %v1570 = vpack.c.b16 %v1342, %v1338
      %v1571 = vpack.c.b16 %v1343, %v1339
      %v1572 = vpack.c.b16 %v1348, %v1344
      %v1573 = vpack.c.b16 %v1349, %v1345
      %v1574 = vpack.c.b16 %v1350, %v1346
      %v1575 = vpack.c.b16 %v1351, %v1347
      %v1576 = vpack.c.b16 %v1356, %v1352
      %v1577 = vpack.c.b16 %v1357, %v1353
      %v1578 = vpack.c.b16 %v1358, %v1354
      %v1579 = vpack.c.b16 %v1359, %v1355
      %v1580 = vpack.c.b16 %v1364, %v1360
      %v1581 = vpack.c.b16 %v1365, %v1361
      %v1582 = vpack.c.b16 %v1366, %v1362
      %v1583 = vpack.c.b16 %v1367, %v1363
      %v1584 = vpack.c.b16 %v1372, %v1368
      %v1585 = vpack.c.b16 %v1373, %v1369
      %v1586 = vpack.c.b16 %v1374, %v1370
      %v1587 = vpack.c.b16 %v1375, %v1371
      %v1588 = vpack.c.b16 %v1380, %v1376
      %v1589 = vpack.c.b16 %v1381, %v1377
      %v1590 = vpack.c.b16 %v1382, %v1378
      %v1591 = vpack.c.b16 %v1383, %v1379
      %v1592 = vpack.c.b16 %v1388, %v1384
      %v1593 = vpack.c.b16 %v1389, %v1385
      %v1594 = vpack.c.b16 %v1390, %v1386
      %v1595 = vpack.c.b16 %v1391, %v1387
      %v1596 = vpack.c.b16 %v1396, %v1392
      %v1597 = vpack.c.b16 %v1397, %v1393
      %v1598 = vpack.c.b16 %v1398, %v1394
      %v1599 = vpack.c.b16 %v1399, %v1395
      %v1600 = vpack.c.b16 %v1404, %v1400
      %v1601 = vpack.c.b16 %v1405, %v1401
      %v1602 = vpack.c.b16 %v1406, %v1402
      %v1603 = vpack.c.b16 %v1407, %v1403
      %v1604 = vpack.c.b16 %v1412, %v1408
      %v1605 = vpack.c.b16 %v1413, %v1409
      %v1606 = vpack.c.b16 %v1414, %v1410
      %v1607 = vpack.c.b16 %v1415, %v1411
      %v1608 = vpack.c.b16 %v1420, %v1416
      %v1609 = vpack.c.b16 %v1421, %v1417
      %v1610 = vpack.c.b16 %v1422, %v1418
      %v1611 = vpack.c.b16 %v1423, %v1419
      %v1612 = vpack.c.b16 %v1428, %v1424
      %v1613 = vpack.c.b16 %v1429, %v1425
      %v1614 = vpack.c.b16 %v1430, %v1426
      %v1615 = vpack.c.b16 %v1431, %v1427
      %v1616 = vpack.c.b16 %v1436, %v1432
      %v1617 = vpack.c.b16 %v1437, %v1433
      %v1618 = vpack.c.b16 %v1438, %v1434
      %v1619 = vpack.c.b16 %v1439, %v1435
      %v1620 = vpack.c.b16 %v1444, %v1440
      %v1621 = vpack.c.b16 %v1445, %v1441
      %v1622 = vpack.c.b16 %v1446, %v1442
      %v1623 = vpack.c.b16 %v1447, %v1443
      %v1624 = vpack.c.b16 %v1452, %v1448
      %v1625 = vpack.c.b16 %v1453, %v1449
      %v1626 = vpack.c.b16 %v1454, %v1450
      %v1627 = vpack.c.b16 %v1455, %v1451
      %v1628 = vpack.c.b16 %v1460, %v1456
      %v1629 = vpack.c.b16 %v1461, %v1457
      %v1630 = vpack.c.b16 %v1462, %v1458
      %v1631 = vpack.c.b16 %v1463, %v1459
      %v1632 = vpack.c.b16 %v1468, %v1464
      %v1633 = vpack.c.b16 %v1469, %v1465
      %v1634 = vpack.c.b16 %v1470, %v1466
      %v1635 = vpack.c.b16 %v1471, %v1467
      %v1636 = vpack.c.b16 %v1476, %v1472
      %v1637 = vpack.c.b16 %v1477, %v1473
      %v1638 = vpack.c.b16 %v1478, %v1474
      %v1639 = vpack.c.b16 %v1479, %v1475
      %v1640 = vpack.c.b16 %v1484, %v1480
      %v1641 = vpack.c.b16 %v1485, %v1481
      %v1642 = vpack.c.b16 %v1486, %v1482
      %v1643 = vpack.c.b16 %v1487, %v1483
      %v1644 = vpack.c.b16 %v1492, %v1488
      %v1645 = vpack.c.b16 %v1493, %v1489
      %v1646 = vpack.c.b16 %v1494, %v1490
      %v1647 = vpack.c.b16 %v1495, %v1491
      %v1648 = vpack.c.b16 %v1500, %v1496
      %v1649 = vpack.c.b16 %v1501, %v1497
      %v1650 = vpack.c.b16 %v1502, %v1498
      %v1651 = vpack.c.b16 %v1503, %v1499
      %v1652 = vpack.c.b16 %v1508, %v1504
      %v1653 = vpack.c.b16 %v1509, %v1505
      %v1654 = vpack.c.b16 %v1510, %v1506
      %v1655 = vpack.c.b16 %v1511, %v1507
      %v1656 = vpack.c.b16 %v1516, %v1512
      %v1657 = vpack.c.b16 %v1517, %v1513
      %v1658 = vpack.c.b16 %v1518, %v1514
      %v1659 = vpack.c.b16 %v1519, %v1515
      %v1660 = vpack.c.b16 %v1524, %v1520
      %v1661 = vpack.c.b16 %v1525, %v1521
      %v1662 = vpack.c.b16 %v1526, %v1522
      %v1663 = vpack.c.b16 %v1527, %v1523
      %v1664 = vpack.c.b16 %v1532, %v1528
      %v1665 = vpack.c.b16 %v1533, %v1529
      %v1666 = vpack.c.b16 %v1534, %v1530
      %v1667 = vpack.c.b16 %v1535, %v1531
      %v1668 = vpack.c.b16 %v1540, %v1536
      %v1669 = vpack.c.b16 %v1541, %v1537
      %v1670 = vpack.c.b16 %v1542, %v1538
      %v1671 = vpack.c.b16 %v1543, %v1539
      %1800 = vmatpush.bf16.msra.mxu0 %v1572
      %1801 = vmatpush.bf16.msra.mxu0 %v1568
      %1802 = vmatpush.bf16.msra.mxu0 %v1564
      %1803 = vmatpush.bf16.msra.mxu0 %v1560
      %1804 = vmatpush.bf16.msra.mxu0 %v1556
      %1805 = vmatpush.bf16.msra.mxu0 %v1552
      %1806 = vmatpush.bf16.msra.mxu0 %v1548
      %1807 = vmatpush.bf16.msra.mxu0 %v1544
      %1808 = vmatmul.bf16.gmra.mxu0 %v1028
      %v1809 = vpop.f32.mrf.mxu0
      %v1810 = vadd.f32 0.0, %v1809
      %v1811 = vpop.f32.mrf.mxu0
      %v1812 = vadd.f32 0.0, %v1811
      %1813 = vdwg.mxu0
      %1814 = vmatpush.bf16.msra.mxu0 %v1604
      %1815 = vmatpush.bf16.msra.mxu0 %v1600
      %1816 = vmatpush.bf16.msra.mxu0 %v1596
      %1817 = vmatpush.bf16.msra.mxu0 %v1592
      %1818 = vmatpush.bf16.msra.mxu0 %v1588
      %1819 = vmatpush.bf16.msra.mxu0 %v1584
      %1820 = vmatpush.bf16.msra.mxu0 %v1580
      %1821 = vmatpush.bf16.msra.mxu0 %v1576
      %1822 = vmatmul.bf16.gmra.mxu0 %v1029
      %v1823 = vpop.f32.mrf.mxu0
      %v1824 = vadd.f32 %v1810, %v1823
      %v1825 = vpop.f32.mrf.mxu0
      %v1826 = vadd.f32 %v1812, %v1825
      %1827 = vdwg.mxu0
      %1828 = vmatpush.bf16.msra.mxu0 %v1636
      %1829 = vmatpush.bf16.msra.mxu0 %v1632
      %1830 = vmatpush.bf16.msra.mxu0 %v1628
      %1831 = vmatpush.bf16.msra.mxu0 %v1624
      %1832 = vmatpush.bf16.msra.mxu0 %v1620
      %1833 = vmatpush.bf16.msra.mxu0 %v1616
      %1834 = vmatpush.bf16.msra.mxu0 %v1612
      %1835 = vmatpush.bf16.msra.mxu0 %v1608
      %1836 = vmatmul.bf16.gmra.mxu0 %v1030
      %v1837 = vpop.f32.mrf.mxu0
      %v1838 = vadd.f32 %v1824, %v1837
      %v1839 = vpop.f32.mrf.mxu0
      %v1840 = vadd.f32 %v1826, %v1839
      %1841 = vdwg.mxu0
      %1842 = vmatpush.bf16.msra.mxu0 %v1668
      %1843 = vmatpush.bf16.msra.mxu0 %v1664
      %1844 = vmatpush.bf16.msra.mxu0 %v1660
      %1845 = vmatpush.bf16.msra.mxu0 %v1656
      %1846 = vmatpush.bf16.msra.mxu0 %v1652
      %1847 = vmatpush.bf16.msra.mxu0 %v1648
      %1848 = vmatpush.bf16.msra.mxu0 %v1644
      %1849 = vmatpush.bf16.msra.mxu0 %v1640
      %1850 = vmatmul.bf16.gmra.mxu0 %v1031
      %v1851 = vpop.f32.mrf.mxu0
      %v1852 = vadd.f32 %v1838, %v1851
      %v1853 = vpop.f32.mrf.mxu0
      %v1854 = vadd.f32 %v1840, %v1853
      %1855 = vdwg.mxu0
      %1856 = vmatpush.bf16.msra.mxu0 %v1573
      %1857 = vmatpush.bf16.msra.mxu0 %v1569
      %1858 = vmatpush.bf16.msra.mxu0 %v1565
      %1859 = vmatpush.bf16.msra.mxu0 %v1561
      %1860 = vmatpush.bf16.msra.mxu0 %v1557
      %1861 = vmatpush.bf16.msra.mxu0 %v1553
      %1862 = vmatpush.bf16.msra.mxu0 %v1549
      %1863 = vmatpush.bf16.msra.mxu0 %v1545
      %1864 = vmatmul.bf16.gmra.mxu0 %v1028
      %v1865 = vpop.f32.mrf.mxu0
      %v1866 = vadd.f32 0.0, %v1865
      %v1867 = vpop.f32.mrf.mxu0
      %v1868 = vadd.f32 0.0, %v1867
      %1869 = vdwg.mxu0
      %1870 = vmatpush.bf16.msra.mxu0 %v1605
      %1871 = vmatpush.bf16.msra.mxu0 %v1601
      %1872 = vmatpush.bf16.msra.mxu0 %v1597
      %1873 = vmatpush.bf16.msra.mxu0 %v1593
      %1874 = vmatpush.bf16.msra.mxu0 %v1589
      %1875 = vmatpush.bf16.msra.mxu0 %v1585
      %1876 = vmatpush.bf16.msra.mxu0 %v1581
      %1877 = vmatpush.bf16.msra.mxu0 %v1577
      %1878 = vmatmul.bf16.gmra.mxu0 %v1029
      %v1879 = vpop.f32.mrf.mxu0
      %v1880 = vadd.f32 %v1866, %v1879
      %v1881 = vpop.f32.mrf.mxu0
      %v1882 = vadd.f32 %v1868, %v1881
      %1883 = vdwg.mxu0
      %1884 = vmatpush.bf16.msra.mxu0 %v1637
      %1885 = vmatpush.bf16.msra.mxu0 %v1633
      %1886 = vmatpush.bf16.msra.mxu0 %v1629
      %1887 = vmatpush.bf16.msra.mxu0 %v1625
      %1888 = vmatpush.bf16.msra.mxu0 %v1621
      %1889 = vmatpush.bf16.msra.mxu0 %v1617
      %1890 = vmatpush.bf16.msra.mxu0 %v1613
      %1891 = vmatpush.bf16.msra.mxu0 %v1609
      %1892 = vmatmul.bf16.gmra.mxu0 %v1030
      %v1893 = vpop.f32.mrf.mxu0
      %v1894 = vadd.f32 %v1880, %v1893
      %v1895 = vpop.f32.mrf.mxu0
      %v1896 = vadd.f32 %v1882, %v1895
      %1897 = vdwg.mxu0
      %1898 = vmatpush.bf16.msra.mxu0 %v1669
      %1899 = vmatpush.bf16.msra.mxu0 %v1665
      %1900 = vmatpush.bf16.msra.mxu0 %v1661
      %1901 = vmatpush.bf16.msra.mxu0 %v1657
      %1902 = vmatpush.bf16.msra.mxu0 %v1653
      %1903 = vmatpush.bf16.msra.mxu0 %v1649
      %1904 = vmatpush.bf16.msra.mxu0 %v1645
      %1905 = vmatpush.bf16.msra.mxu0 %v1641
      %1906 = vmatmul.bf16.gmra.mxu0 %v1031
      %v1907 = vpop.f32.mrf.mxu0
      %v1908 = vadd.f32 %v1894, %v1907
      %v1909 = vpop.f32.mrf.mxu0
      %v1910 = vadd.f32 %v1896, %v1909
      %1911 = vdwg.mxu0
      %1912 = vmatpush.bf16.msra.mxu0 %v1574
      %1913 = vmatpush.bf16.msra.mxu0 %v1570
      %1914 = vmatpush.bf16.msra.mxu0 %v1566
      %1915 = vmatpush.bf16.msra.mxu0 %v1562
      %1916 = vmatpush.bf16.msra.mxu0 %v1558
      %1917 = vmatpush.bf16.msra.mxu0 %v1554
      %1918 = vmatpush.bf16.msra.mxu0 %v1550
      %1919 = vmatpush.bf16.msra.mxu0 %v1546
      %1920 = vmatmul.bf16.gmra.mxu0 %v1028
      %v1921 = vpop.f32.mrf.mxu0
      %v1922 = vadd.f32 0.0, %v1921
      %v1923 = vpop.f32.mrf.mxu0
      %v1924 = vadd.f32 0.0, %v1923
      %1925 = vdwg.mxu0
      %1926 = vmatpush.bf16.msra.mxu0 %v1606
      %1927 = vmatpush.bf16.msra.mxu0 %v1602
      %1928 = vmatpush.bf16.msra.mxu0 %v1598
      %1929 = vmatpush.bf16.msra.mxu0 %v1594
      %1930 = vmatpush.bf16.msra.mxu0 %v1590
      %1931 = vmatpush.bf16.msra.mxu0 %v1586
      %1932 = vmatpush.bf16.msra.mxu0 %v1582
      %1933 = vmatpush.bf16.msra.mxu0 %v1578
      %1934 = vmatmul.bf16.gmra.mxu0 %v1029
      %v1935 = vpop.f32.mrf.mxu0
      %v1936 = vadd.f32 %v1922, %v1935
      %v1937 = vpop.f32.mrf.mxu0
      %v1938 = vadd.f32 %v1924, %v1937
      %1939 = vdwg.mxu0
      %1940 = vmatpush.bf16.msra.mxu0 %v1638
      %1941 = vmatpush.bf16.msra.mxu0 %v1634
      %1942 = vmatpush.bf16.msra.mxu0 %v1630
      %1943 = vmatpush.bf16.msra.mxu0 %v1626
      %1944 = vmatpush.bf16.msra.mxu0 %v1622
      %1945 = vmatpush.bf16.msra.mxu0 %v1618
      %1946 = vmatpush.bf16.msra.mxu0 %v1614
      %1947 = vmatpush.bf16.msra.mxu0 %v1610
      %1948 = vmatmul.bf16.gmra.mxu0 %v1030
      %v1949 = vpop.f32.mrf.mxu0
      %v1950 = vadd.f32 %v1936, %v1949
      %v1951 = vpop.f32.mrf.mxu0
      %v1952 = vadd.f32 %v1938, %v1951
      %1953 = vdwg.mxu0
      %1954 = vmatpush.bf16.msra.mxu0 %v1670
      %1955 = vmatpush.bf16.msra.mxu0 %v1666
      %1956 = vmatpush.bf16.msra.mxu0 %v1662
      %1957 = vmatpush.bf16.msra.mxu0 %v1658
      %1958 = vmatpush.bf16.msra.mxu0 %v1654
      %1959 = vmatpush.bf16.msra.mxu0 %v1650
      %1960 = vmatpush.bf16.msra.mxu0 %v1646
      %1961 = vmatpush.bf16.msra.mxu0 %v1642
      %1962 = vmatmul.bf16.gmra.mxu0 %v1031
      %v1963 = vpop.f32.mrf.mxu0
      %v1964 = vadd.f32 %v1950, %v1963
      %v1965 = vpop.f32.mrf.mxu0
      %v1966 = vadd.f32 %v1952, %v1965
      %1967 = vdwg.mxu0
      %1968 = vmatpush.bf16.msra.mxu0 %v1575
      %1969 = vmatpush.bf16.msra.mxu0 %v1571
      %1970 = vmatpush.bf16.msra.mxu0 %v1567
      %1971 = vmatpush.bf16.msra.mxu0 %v1563
      %1972 = vmatpush.bf16.msra.mxu0 %v1559
      %1973 = vmatpush.bf16.msra.mxu0 %v1555
      %1974 = vmatpush.bf16.msra.mxu0 %v1551
      %1975 = vmatpush.bf16.msra.mxu0 %v1547
      %1976 = vmatmul.bf16.gmra.mxu0 %v1028
      %v1977 = vpop.f32.mrf.mxu0
      %v1978 = vadd.f32 0.0, %v1977
      %v1979 = vpop.f32.mrf.mxu0
      %v1980 = vadd.f32 0.0, %v1979
      %1981 = vdwg.mxu0
      %1982 = vmatpush.bf16.msra.mxu0 %v1607
      %1983 = vmatpush.bf16.msra.mxu0 %v1603
      %1984 = vmatpush.bf16.msra.mxu0 %v1599
      %1985 = vmatpush.bf16.msra.mxu0 %v1595
      %1986 = vmatpush.bf16.msra.mxu0 %v1591
      %1987 = vmatpush.bf16.msra.mxu0 %v1587
      %1988 = vmatpush.bf16.msra.mxu0 %v1583
      %1989 = vmatpush.bf16.msra.mxu0 %v1579
      %1990 = vmatmul.bf16.gmra.mxu0 %v1029
      %v1991 = vpop.f32.mrf.mxu0
      %v1992 = vadd.f32 %v1978, %v1991
      %v1993 = vpop.f32.mrf.mxu0
      %v1994 = vadd.f32 %v1980, %v1993
      %1995 = vdwg.mxu0
      %1996 = vmatpush.bf16.msra.mxu0 %v1639
      %1997 = vmatpush.bf16.msra.mxu0 %v1635
      %1998 = vmatpush.bf16.msra.mxu0 %v1631
      %1999 = vmatpush.bf16.msra.mxu0 %v1627
      %2000 = vmatpush.bf16.msra.mxu0 %v1623
      %2001 = vmatpush.bf16.msra.mxu0 %v1619
      %2002 = vmatpush.bf16.msra.mxu0 %v1615
      %2003 = vmatpush.bf16.msra.mxu0 %v1611
      %2004 = vmatmul.bf16.gmra.mxu0 %v1030
      %v2005 = vpop.f32.mrf.mxu0
      %v2006 = vadd.f32 %v1992, %v2005
      %v2007 = vpop.f32.mrf.mxu0
      %v2008 = vadd.f32 %v1994, %v2007
      %2009 = vdwg.mxu0
      %2010 = vmatpush.bf16.msra.mxu0 %v1671
      %2011 = vmatpush.bf16.msra.mxu0 %v1667
      %2012 = vmatpush.bf16.msra.mxu0 %v1663
      %2013 = vmatpush.bf16.msra.mxu0 %v1659
      %2014 = vmatpush.bf16.msra.mxu0 %v1655
      %2015 = vmatpush.bf16.msra.mxu0 %v1651
      %2016 = vmatpush.bf16.msra.mxu0 %v1647
      %2017 = vmatpush.bf16.msra.mxu0 %v1643
      %2018 = vmatmul.bf16.gmra.mxu0 %v1031
      %v2019 = vpop.f32.mrf.mxu0
      %v2020 = vadd.f32 %v2006, %v2019
      %v2021 = vpop.f32.mrf.mxu0
      %v2022 = vadd.f32 %v2008, %v2021
      %2023 = vdwg.mxu0
      %v2024 = vld [vmem:[%s3] sm:$0xf]
      %v2026 = vperm.slane %v2024, 0
      %v2027 = vperm.slane %v2024, 1
      %v2028 = vperm.slane %v2024, 2
      %v2029 = vperm.slane %v2024, 3
      %v2034 = vmul.f32 %v1852, %v2026
      %v2035 = vmul.f32 %v1908, %v2027
      %v2036 = vmul.f32 %v1964, %v2028
      %v2037 = vmul.f32 %v2020, %v2029
      %v2038 = vmul.f32 %v1854, %v2026
      %v2039 = vmul.f32 %v1910, %v2027
      %v2040 = vmul.f32 %v1966, %v2028
      %v2041 = vmul.f32 %v2022, %v2029
      %v2042 = vld [vmem:[%s4] sm:$0xf]
      %v2044 = vperm.slane %v2042, 0
      %v2045 = vperm.slane %v2042, 1
      %v2046 = vperm.slane %v2042, 2
      %v2047 = vperm.slane %v2042, 3
      %v2052 = vadd.f32 %v2034, %v2044
      %v2053 = vadd.f32 %v2035, %v2045
      %v2054 = vadd.f32 %v2036, %v2046
      %v2055 = vadd.f32 %v2037, %v2047
      %v2056 = vadd.f32 %v2038, %v2044
      %v2057 = vadd.f32 %v2039, %v2045
      %v2058 = vadd.f32 %v2040, %v2046
      %v2059 = vadd.f32 %v2041, %v2047
      %v2060 = vld [vmem:[%s266] sm:$0xff]
      %v2061 = vld [vmem:[%s266 + $0x8] sm:$0xff]
      %v2062 = vld [vmem:[%s266 + $0x10] sm:$0xff]
      %v2063 = vld [vmem:[%s266 + $0x18] sm:$0xff]
      %v2064 = vld [vmem:[%s266 + $0x20] sm:$0xff]
      %v2065 = vld [vmem:[%s266 + $0x28] sm:$0xff]
      %v2066 = vld [vmem:[%s266 + $0x30] sm:$0xff]
      %v2067 = vld [vmem:[%s266 + $0x38] sm:$0xff]
      %v2068 = vadd.f32 %v2052, %v2060
      %v2069 = vadd.f32 %v2053, %v2061
      %v2070 = vadd.f32 %v2054, %v2062
      %v2071 = vadd.f32 %v2055, %v2063
      %v2072 = vadd.f32 %v2056, %v2064
      %v2073 = vadd.f32 %v2057, %v2065
      %v2074 = vadd.f32 %v2058, %v2066
      %v2075 = vadd.f32 %v2059, %v2067
      %2076 = vst [vmem:[%s271] sm:$0xff] %v2068
      %2077 = vst [vmem:[%s271 + $0x8] sm:$0xff] %v2069
      %2078 = vst [vmem:[%s271 + $0x10] sm:$0xff] %v2070
      %2079 = vst [vmem:[%s271 + $0x18] sm:$0xff] %v2071
      %2080 = vst [vmem:[%s271 + $0x20] sm:$0xff] %v2072
      %2081 = vst [vmem:[%s271 + $0x28] sm:$0xff] %v2073
      %2082 = vst [vmem:[%s271 + $0x30] sm:$0xff] %v2074
      %2083 = vst [vmem:[%s271 + $0x38] sm:$0xff] %v2075
      %p2084 = scmp.lt.s32.totalorder %s17, 1
      %s2085 = scalar_select %p2084, %s17, 1
      %s2086 = smul.addr %s2085, 8
      %s2087 = smul.addr %s2086, 8
      %s2088 = scalar_lea.vmem %s6, %s2087
      // Predicated region
      $region45: #{a_call__.3} parent=43 // pred_check
        %p2089 = pneg %p171
      $region46: #{a_call__.3} parent=43 // pred_check_branch
        %2091 = sbr.rel (%p2089) target = $region48
      $region47: #{a_call__.3} parent=43 // pred_region
        _
      $region48: #{a_call__.3} parent=43 // pred_fallthru
        _
    $region44: #{a_call__.3} parent=5 // pred_fallthru
      _
    %p2092 = scmp.le.s32.totalorder 2, %s12
    // Predicated region
    $region49: #{a_call__.3} parent=5 // pred_check
      %p2093 = pneg %p2092
    $region50: #{a_call__.3} parent=5 // pred_check_branch
      %2095 = sbr.rel (%p2093) target = $region52
    $region51: #{a_call__.3} parent=5 // pred_region
      %s2096 = ssub.s32 %s12, 2
      // Predicated region
      $region53: #{a_call__.3} parent=51 // pred_check
        %p2097 = pneg %p177
      $region54: #{a_call__.3} parent=51 // pred_check_branch
        %2099 = sbr.rel (%p2097) target = $region56
      $region55: #{a_call__.3} parent=51 // pred_region
        %p2100 = scmp.lt.s32.totalorder %s18, 1
        %s2101 = scalar_select %p2100, %s18, 1
        %s2102 = smul.addr %s2101, 8
        %s2103 = smul.addr %s2102, 8
        %s2104 = scalar_lea.vmem %s6, %s2103
      $region56: #{a_call__.3} parent=51 // pred_fallthru
        _
    $region52: #{a_call__.3} parent=5 // pred_fallthru
      _
  $region6: #{a_call__.3} parent=0 // loop_footer
    %s16 = sadd.s32 1, %s12
  $region7: #{a_call__.3} parent=0 // loop_footer_branch
    %11 = sbr.rel target = $region3
  $region8: #{a_call__.3} parent=0 // loop_exit
    _

// kernel: a_call__.2
$region0: #{a_call__.2}
  #allocation0 [shape = 'u32[]', space=smem, size = 0x4, offset = 0x4, fixed_abs, tag = 'smem constant byte address 0x4 - core index']
  #allocation1 [shape = 'u32[72,128]{1,0:T(1,128)}', space=vmem, size = 0x9000, scoped, tag = 'internal scratch']
  %s0 = inlined_call_operand.vmem [shape: f32[2,16,512], index: 0, kind: input, shape index: {}]
  %s1 = inlined_call_operand.vmem [shape: f32[9,512], index: 1, kind: input, shape index: {}]
  %s2 = inlined_call_operand.vmem [shape: bf16[512,512], index: 2, kind: input, shape index: {}]
  %s3 = inlined_call_operand.vmem [shape: f32[1,512], index: 3, kind: input, shape index: {}]
  %s4 = inlined_call_operand.vmem [shape: f32[1,512], index: 4, kind: input, shape index: {}]
  %s5 = inlined_call_operand.vmem [shape: f32[9,512], index: 5, kind: input, shape index: {}]
  %s6 = inlined_call_operand.vmem [shape: bf16[512,512], index: 6, kind: input, shape index: {}]
  %s7 = inlined_call_operand.vmem [shape: f32[1,512], index: 7, kind: input, shape index: {}]
  %s8 = inlined_call_operand.vmem [shape: f32[1,512], index: 8, kind: input, shape index: {}]
  %s9 = inlined_call_operand.vmem [shape: f32[2,16,512], index: 9, kind: output, shape index: {}]
  %s10 = sld [smem:[#allocation0]]
  $region69: #{a_call__.2} parent=0
    _
  %s12 = ssub.s32 1, %s10
  %s13 = scalar_select 0, %s12, %s10
  loop: start=0, step=1, limit=4
  $region2: #{a_call__.2} parent=0 // loop_pre_header
    _
  $region3: #{a_call__.2} parent=0 // loop_header
    %s15 = sphi 0, %s19
    %p16 = scmp.ge.s32.totalorder %s15, 4
    %s25 = sphi 0, %s27
    %s28 = sphi 0, %s25
    %s29 = sphi 0, %s28
    %s45 = sphi 0, %s29
    %s49 = sphi 0, %s49
    %s51 = sphi 0, %s49
    %s52 = sphi 0, %s51
    %s66 = sphi 0, %s52
    %s70 = sphi 0, %s70
    %s72 = sphi 0, %s70
    %s73 = sphi 0, %s72
    %s87 = sphi 0, %s73
    %s91 = sphi 0, %s91
    %s93 = sphi 0, %s91
    %s94 = sphi 0, %s93
    %s108 = sphi 0, %s94
    %s112 = sphi 0, %s112
    %s114 = sphi 0, %s112
    %s115 = sphi 0, %s114
    %s129 = sphi 0, %s115
    %s133 = sphi 0, %s133
    %s135 = sphi 0, %s133
    %s136 = sphi 0, %s135
    %s150 = sphi 0, %s136
    %s154 = sphi 0, %s154
    %s156 = sphi 0, %s154
    %s157 = sphi 0, %s156
    %s171 = sphi 0, %s157
    %s175 = sphi 0, %s175
    %s177 = sphi 0, %s175
    %s178 = sphi 0, %s177
    %s192 = sphi 0, %s178
    %s196 = sphi 0, %s196
    %s198 = sphi 0, %s196
    %s199 = sphi 0, %s198
    %s213 = sphi 0, %s199
    %s219 = sphi 0, %s221
    %s222 = sphi 0, %s219
    %s223 = sphi 0, %s222
    %s239 = sphi 0, %s223
  $region4: #{a_call__.2} parent=0 // loop_header_branch
    %18 = sbr.rel (%p16) target = $region8
  $region5: #{a_call__.2} parent=0 // loop_body
    %s20 = ssub.s32 %s15, 1
    %s21 = ssub.s32 %s15, 2
    %s22 = sadd.s32 %s15, 1
    %s23 = ssub.s32 %s15, %s22
    %p24 = scmp.eq.s32.totalorder %s23, 0
    %s26 = sadd.s32 %s25, 1
    %s27 = scalar_select %p24, %s25, %s26
    %p30 = pneg %p24
    %p31 = scmp.eq.s32.totalorder %s15, 1
    %p32 = por %p30, %p31
    %p33 = scmp.ne.s32.totalorder %s25, %s28
    %p34 = scmp.eq.s32.totalorder %s15, 0
    %p35 = por %p33, %p34
    %p36 = scmp.ne.s32.totalorder %s25, %s28
    %p37 = scmp.eq.s32.totalorder %s20, 1
    %p38 = por %p36, %p37
    %p39 = scmp.ne.s32.totalorder %s28, %s29
    %p40 = scmp.eq.s32.totalorder %s20, 0
    %p41 = por %p39, %p40
    %p42 = scmp.ne.s32.totalorder %s28, %s29
    %p43 = scmp.eq.s32.totalorder %s21, 1
    %p44 = por %p42, %p43
    %p46 = scmp.ne.s32.totalorder %s29, %s45
    %p47 = scmp.eq.s32.totalorder %s21, 0
    %p48 = por %p46, %p47
    %s50 = sadd.s32 %s49, 1
    %p53 = scmp.eq.s32.totalorder %s15, 1
    %p54 = scmp.ne.s32.totalorder %s49, %s51
    %p55 = scmp.eq.s32.totalorder %s15, 0
    %p56 = por %p54, %p55
    %p57 = scmp.ne.s32.totalorder %s49, %s51
    %p58 = scmp.eq.s32.totalorder %s20, 1
    %p59 = por %p57, %p58
    %p60 = scmp.ne.s32.totalorder %s51, %s52
    %p61 = scmp.eq.s32.totalorder %s20, 0
    %p62 = por %p60, %p61
    %p63 = scmp.ne.s32.totalorder %s51, %s52
    %p64 = scmp.eq.s32.totalorder %s21, 1
    %p65 = por %p63, %p64
    %p67 = scmp.ne.s32.totalorder %s52, %s66
    %p68 = scmp.eq.s32.totalorder %s21, 0
    %p69 = por %p67, %p68
    %s71 = sadd.s32 %s70, 1
    %p74 = scmp.eq.s32.totalorder %s15, 1
    %p75 = scmp.ne.s32.totalorder %s70, %s72
    %p76 = scmp.eq.s32.totalorder %s15, 0
    %p77 = por %p75, %p76
    %p78 = scmp.ne.s32.totalorder %s70, %s72
    %p79 = scmp.eq.s32.totalorder %s20, 1
    %p80 = por %p78, %p79
    %p81 = scmp.ne.s32.totalorder %s72, %s73
    %p82 = scmp.eq.s32.totalorder %s20, 0
    %p83 = por %p81, %p82
    %p84 = scmp.ne.s32.totalorder %s72, %s73
    %p85 = scmp.eq.s32.totalorder %s21, 1
    %p86 = por %p84, %p85
    %p88 = scmp.ne.s32.totalorder %s73, %s87
    %p89 = scmp.eq.s32.totalorder %s21, 0
    %p90 = por %p88, %p89
    %s92 = sadd.s32 %s91, 1
    %p95 = scmp.eq.s32.totalorder %s15, 1
    %p96 = scmp.ne.s32.totalorder %s91, %s93
    %p97 = scmp.eq.s32.totalorder %s15, 0
    %p98 = por %p96, %p97
    %p99 = scmp.ne.s32.totalorder %s91, %s93
    %p100 = scmp.eq.s32.totalorder %s20, 1
    %p101 = por %p99, %p100
    %p102 = scmp.ne.s32.totalorder %s93, %s94
    %p103 = scmp.eq.s32.totalorder %s20, 0
    %p104 = por %p102, %p103
    %p105 = scmp.ne.s32.totalorder %s93, %s94
    %p106 = scmp.eq.s32.totalorder %s21, 1
    %p107 = por %p105, %p106
    %p109 = scmp.ne.s32.totalorder %s94, %s108
    %p110 = scmp.eq.s32.totalorder %s21, 0
    %p111 = por %p109, %p110
    %s113 = sadd.s32 %s112, 1
    %p116 = scmp.eq.s32.totalorder %s15, 1
    %p117 = scmp.ne.s32.totalorder %s112, %s114
    %p118 = scmp.eq.s32.totalorder %s15, 0
    %p119 = por %p117, %p118
    %p120 = scmp.ne.s32.totalorder %s112, %s114
    %p121 = scmp.eq.s32.totalorder %s20, 1
    %p122 = por %p120, %p121
    %p123 = scmp.ne.s32.totalorder %s114, %s115
    %p124 = scmp.eq.s32.totalorder %s20, 0
    %p125 = por %p123, %p124
    %p126 = scmp.ne.s32.totalorder %s114, %s115
    %p127 = scmp.eq.s32.totalorder %s21, 1
    %p128 = por %p126, %p127
    %p130 = scmp.ne.s32.totalorder %s115, %s129
    %p131 = scmp.eq.s32.totalorder %s21, 0
    %p132 = por %p130, %p131
    %s134 = sadd.s32 %s133, 1
    %p137 = scmp.eq.s32.totalorder %s15, 1
    %p138 = scmp.ne.s32.totalorder %s133, %s135
    %p139 = scmp.eq.s32.totalorder %s15, 0
    %p140 = por %p138, %p139
    %p141 = scmp.ne.s32.totalorder %s133, %s135
    %p142 = scmp.eq.s32.totalorder %s20, 1
    %p143 = por %p141, %p142
    %p144 = scmp.ne.s32.totalorder %s135, %s136
    %p145 = scmp.eq.s32.totalorder %s20, 0
    %p146 = por %p144, %p145
    %p147 = scmp.ne.s32.totalorder %s135, %s136
    %p148 = scmp.eq.s32.totalorder %s21, 1
    %p149 = por %p147, %p148
    %p151 = scmp.ne.s32.totalorder %s136, %s150
    %p152 = scmp.eq.s32.totalorder %s21, 0
    %p153 = por %p151, %p152
    %s155 = sadd.s32 %s154, 1
    %p158 = scmp.eq.s32.totalorder %s15, 1
    %p159 = scmp.ne.s32.totalorder %s154, %s156
    %p160 = scmp.eq.s32.totalorder %s15, 0
    %p161 = por %p159, %p160
    %p162 = scmp.ne.s32.totalorder %s154, %s156
    %p163 = scmp.eq.s32.totalorder %s20, 1
    %p164 = por %p162, %p163
    %p165 = scmp.ne.s32.totalorder %s156, %s157
    %p166 = scmp.eq.s32.totalorder %s20, 0
    %p167 = por %p165, %p166
    %p168 = scmp.ne.s32.totalorder %s156, %s157
    %p169 = scmp.eq.s32.totalorder %s21, 1
    %p170 = por %p168, %p169
    %p172 = scmp.ne.s32.totalorder %s157, %s171
    %p173 = scmp.eq.s32.totalorder %s21, 0
    %p174 = por %p172, %p173
    %s176 = sadd.s32 %s175, 1
    %p179 = scmp.eq.s32.totalorder %s15, 1
    %p180 = scmp.ne.s32.totalorder %s175, %s177
    %p181 = scmp.eq.s32.totalorder %s15, 0
    %p182 = por %p180, %p181
    %p183 = scmp.ne.s32.totalorder %s175, %s177
    %p184 = scmp.eq.s32.totalorder %s20, 1
    %p185 = por %p183, %p184
    %p186 = scmp.ne.s32.totalorder %s177, %s178
    %p187 = scmp.eq.s32.totalorder %s20, 0
    %p188 = por %p186, %p187
    %p189 = scmp.ne.s32.totalorder %s177, %s178
    %p190 = scmp.eq.s32.totalorder %s21, 1
    %p191 = por %p189, %p190
    %p193 = scmp.ne.s32.totalorder %s178, %s192
    %p194 = scmp.eq.s32.totalorder %s21, 0
    %p195 = por %p193, %p194
    %s197 = sadd.s32 %s196, 1
    %p200 = scmp.eq.s32.totalorder %s15, 1
    %p201 = scmp.ne.s32.totalorder %s196, %s198
    %p202 = scmp.eq.s32.totalorder %s15, 0
    %p203 = por %p201, %p202
    %p204 = scmp.ne.s32.totalorder %s196, %s198
    %p205 = scmp.eq.s32.totalorder %s20, 1
    %p206 = por %p204, %p205
    %p207 = scmp.ne.s32.totalorder %s198, %s199
    %p208 = scmp.eq.s32.totalorder %s20, 0
    %p209 = por %p207, %p208
    %p210 = scmp.ne.s32.totalorder %s198, %s199
    %p211 = scmp.eq.s32.totalorder %s21, 1
    %p212 = por %p210, %p211
    %p214 = scmp.ne.s32.totalorder %s199, %s213
    %p215 = scmp.eq.s32.totalorder %s21, 0
    %p216 = por %p214, %p215
    %s217 = ssub.s32 %s15, %s22
    %p218 = scmp.eq.s32.totalorder %s217, 0
    %s220 = sadd.s32 %s219, 1
    %s221 = scalar_select %p218, %s219, %s220
    %p224 = pneg %p218
    %p225 = scmp.eq.s32.totalorder %s15, 1
    %p226 = por %p224, %p225
    %p227 = scmp.ne.s32.totalorder %s219, %s222
    %p228 = scmp.eq.s32.totalorder %s15, 0
    %p229 = por %p227, %p228
    %p230 = scmp.ne.s32.totalorder %s219, %s222
    %p231 = scmp.eq.s32.totalorder %s20, 1
    %p232 = por %p230, %p231
    %p233 = scmp.ne.s32.totalorder %s222, %s223
    %p234 = scmp.eq.s32.totalorder %s20, 0
    %p235 = por %p233, %p234
    %p236 = scmp.ne.s32.totalorder %s222, %s223
    %p237 = scmp.eq.s32.totalorder %s21, 1
    %p238 = por %p236, %p237
    %p240 = scmp.ne.s32.totalorder %s223, %s239
    %p241 = scmp.eq.s32.totalorder %s21, 0
    %p242 = por %p240, %p241
    %p243 = scmp.le.s32.totalorder 1, %s15
    %p244 = scmp.lt.s32.totalorder %s15, 3
    %p245 = pnand %p243, %p244
    %p246 = pneg %p245
    // Predicated region
    $region9: #{a_call__.2} parent=5 // pred_check
      _
    $region10: #{a_call__.2} parent=5 // pred_check_branch
      %248 = sbr.rel (%p245) target = $region12
    $region11: #{a_call__.2} parent=5 // pred_region
      %s249 = ssub.s32 %s15, 1
      // Predicated region
      $region13: #{a_call__.2} parent=11 // pred_check
        %p250 = pneg %p62
      $region14: #{a_call__.2} parent=11 // pred_check_branch
        %252 = sbr.rel (%p250) target = $region16
      $region15: #{a_call__.2} parent=11 // pred_region
        _
      $region16: #{a_call__.2} parent=11 // pred_fallthru
        _
      // Predicated region
      $region17: #{a_call__.2} parent=11 // pred_check
        %p253 = pneg %p83
      $region18: #{a_call__.2} parent=11 // pred_check_branch
        %255 = sbr.rel (%p253) target = $region20
      $region19: #{a_call__.2} parent=11 // pred_region
        _
      $region20: #{a_call__.2} parent=11 // pred_fallthru
        _
      // Predicated region
      $region21: #{a_call__.2} parent=11 // pred_check
        %p256 = pneg %p104
      $region22: #{a_call__.2} parent=11 // pred_check_branch
        %258 = sbr.rel (%p256) target = $region24
      $region23: #{a_call__.2} parent=11 // pred_region
        _
      $region24: #{a_call__.2} parent=11 // pred_fallthru
        _
      // Predicated region
      $region25: #{a_call__.2} parent=11 // pred_check
        %p259 = pneg %p125
      $region26: #{a_call__.2} parent=11 // pred_check_branch
        %261 = sbr.rel (%p259) target = $region28
      $region27: #{a_call__.2} parent=11 // pred_region
        _
      $region28: #{a_call__.2} parent=11 // pred_fallthru
        _
      // Predicated region
      $region29: #{a_call__.2} parent=11 // pred_check
        %p262 = pneg %p146
      $region30: #{a_call__.2} parent=11 // pred_check_branch
        %264 = sbr.rel (%p262) target = $region32
      $region31: #{a_call__.2} parent=11 // pred_region
        _
      $region32: #{a_call__.2} parent=11 // pred_fallthru
        _
      // Predicated region
      $region33: #{a_call__.2} parent=11 // pred_check
        %p265 = pneg %p167
      $region34: #{a_call__.2} parent=11 // pred_check_branch
        %267 = sbr.rel (%p265) target = $region36
      $region35: #{a_call__.2} parent=11 // pred_region
        _
      $region36: #{a_call__.2} parent=11 // pred_fallthru
        _
      // Predicated region
      $region37: #{a_call__.2} parent=11 // pred_check
        %p268 = pneg %p188
      $region38: #{a_call__.2} parent=11 // pred_check_branch
        %270 = sbr.rel (%p268) target = $region40
      $region39: #{a_call__.2} parent=11 // pred_region
        _
      $region40: #{a_call__.2} parent=11 // pred_fallthru
        _
      // Predicated region
      $region41: #{a_call__.2} parent=11 // pred_check
        %p271 = pneg %p209
      $region42: #{a_call__.2} parent=11 // pred_check_branch
        %273 = sbr.rel (%p271) target = $region44
      $region43: #{a_call__.2} parent=11 // pred_region
        _
      $region44: #{a_call__.2} parent=11 // pred_fallthru
        _
    $region12: #{a_call__.2} parent=5 // pred_fallthru
      _
    %p274 = scmp.lt.s32.totalorder %s15, 2
    // Predicated region
    $region45: #{a_call__.2} parent=5 // pred_check
      %p275 = pneg %p274
    $region46: #{a_call__.2} parent=5 // pred_check_branch
      %277 = sbr.rel (%p275) target = $region48
    $region47: #{a_call__.2} parent=5 // pred_region
      // Predicated region
      $region49: #{a_call__.2} parent=47 // pred_check
        %p278 = pneg %p35
      $region50: #{a_call__.2} parent=47 // pred_check_branch
        %280 = sbr.rel (%p278) target = $region52
      $region51: #{a_call__.2} parent=47 // pred_region
        %p281 = scmp.lt.s32.totalorder %s15, 1
        %s282 = scalar_select %p281, %s15, 1
        %s283 = smul.addr %s282, 8
        %s284 = smul.addr %s283, 8
        %s285 = scalar_lea.vmem %s0, %s284
      $region52: #{a_call__.2} parent=47 // pred_fallthru
        _
    $region48: #{a_call__.2} parent=5 // pred_fallthru
      _
    %p286 = scmp.le.s32.totalorder 1, %s15
    %p287 = scmp.lt.s32.totalorder %s15, 3
    %p288 = pnand %p286, %p287
    %p289 = pneg %p288
    // Predicated region
    $region53: #{a_call__.2} parent=5 // pred_check
      _
    $region54: #{a_call__.2} parent=5 // pred_check_branch
      %291 = sbr.rel (%p288) target = $region56
    $region55: #{a_call__.2} parent=5 // pred_region
      %s292 = ssub.s32 %s15, 1
      %p293 = scmp.lt.s32.totalorder %s20, 1
      %s294 = scalar_select %p293, %s20, 1
      %s295 = smul.addr %s294, 8
      %s296 = smul.addr %s295, 8
      %s297 = scalar_lea.vmem %s0, %s296
      %p298 = pneg %p41
      %p299 = pneg %p38
      %p300 = pneg %p62
      %p301 = pneg %p59
      %p302 = pneg %p83
      %p303 = pneg %p80
      %p304 = pneg %p104
      %p305 = pneg %p101
      %p306 = pneg %p125
      %p307 = pneg %p122
      %p308 = pneg %p146
      %p309 = pneg %p143
      %p310 = pneg %p167
      %p311 = pneg %p164
      %p312 = pneg %p188
      %p313 = pneg %p185
      %p314 = pneg %p209
      %p315 = pneg %p206
      %p316 = pneg %p235
      %p317 = pneg %p232
      %p318 = scmp.lt.s32.totalorder %s20, 1
      %s319 = scalar_select %p318, %s20, 1
      %s320 = smul.addr %s319, 8
      %s321 = smul.addr %s320, 8
      %s322 = scalar_lea.vmem %s9, %s321
      %p323 = scmp.lt.s32.totalorder %s20, 1
      %s324 = scalar_select %p323, %s20, 1
      %s325 = smul.addr %s324, 8
      %s326 = smul.addr %s325, 8
      %s327 = scalar_lea.vmem %s0, %s326
      %p328 = scmp.lt.s32.totalorder %s20, 1
      %s329 = scalar_select %p328, %s20, 1
      %s330 = smul.addr %s329, 8
      %s331 = smul.addr %s330, 8
      %s332 = scalar_lea.vmem %s9, %s331
      %v333 = vld [vmem:[%s327] sm:$0xff]
      %v334 = vld [vmem:[%s327 + $0x8] sm:$0xff]
      %v335 = vld [vmem:[%s327 + $0x10] sm:$0xff]
      %v336 = vld [vmem:[%s327 + $0x18] sm:$0xff]
      %v337 = vld [vmem:[%s327 + $0x20] sm:$0xff]
      %v338 = vld [vmem:[%s327 + $0x28] sm:$0xff]
      %v339 = vld [vmem:[%s327 + $0x30] sm:$0xff]
      %v340 = vld [vmem:[%s327 + $0x38] sm:$0xff]
      %v341 = vmax.f32 %v333, 0.0
      %v342 = vmax.f32 %v334, 0.0
      %v343 = vmax.f32 %v335, 0.0
      %v344 = vmax.f32 %v336, 0.0
      %v345 = vmax.f32 %v337, 0.0
      %v346 = vmax.f32 %v338, 0.0
      %v347 = vmax.f32 %v339, 0.0
      %v348 = vmax.f32 %v340, 0.0
      %vm357 = vcmask 1040384
      %v358 = vrot.slane %v341, 7
      %v359 = vrot.slane %v342, 7
      %v360 = vrot.slane %v343, 7
      %v361 = vrot.slane %v344, 7
      %v362 = vrot.slane %v345, 7
      %v363 = vsel %vm357, %v358, %v362
      %v364 = vrot.slane %v346, 7
      %v365 = vsel %vm357, %v359, %v364
      %v366 = vrot.slane %v347, 7
      %v367 = vsel %vm357, %v360, %v366
      %v368 = vrot.slane %v348, 7
      %v369 = vsel %vm357, %v361, %v368
      %v378 = vsel %vm357, 0.0, %v358
      %v379 = vsel %vm357, 0.0, %v359
      %v380 = vsel %vm357, 0.0, %v360
      %v381 = vsel %vm357, 0.0, %v361
      %v382 = vsel %vm357, %v362, 0.0
      %v383 = vsel %vm357, %v364, 0.0
      %v384 = vsel %vm357, %v366, 0.0
      %v385 = vsel %vm357, %v368, 0.0
      %394 = vrot.lane.b32.xlu0 %v378, 32
      %v395 = vpop.permute.xlu0 %394
      %396 = vrot.lane.b32.xlu0 %v379, 32
      %v397 = vpop.permute.xlu0 %396
      %398 = vrot.lane.b32.xlu0 %v380, 32
      %v399 = vpop.permute.xlu0 %398
      %400 = vrot.lane.b32.xlu0 %v381, 32
      %v401 = vpop.permute.xlu0 %400
      %402 = vrot.lane.b32.xlu0 %v363, 32
      %v403 = vpop.permute.xlu0 %402
      %404 = vrot.lane.b32.xlu0 %v365, 32
      %v405 = vpop.permute.xlu0 %404
      %406 = vrot.lane.b32.xlu0 %v367, 32
      %v407 = vpop.permute.xlu0 %406
      %408 = vrot.lane.b32.xlu0 %v369, 32
      %v409 = vpop.permute.xlu0 %408
      %410 = vrot.lane.b32.xlu0 %v382, 32
      %v411 = vpop.permute.xlu0 %410
      %412 = vrot.lane.b32.xlu0 %v383, 32
      %v413 = vpop.permute.xlu0 %412
      %414 = vrot.lane.b32.xlu0 %v384, 32
      %v415 = vpop.permute.xlu0 %414
      %416 = vrot.lane.b32.xlu0 %v385, 32
      %v417 = vpop.permute.xlu0 %416
      %vm418 = vcmask 261120
      %v419 = vsel %vm418, %v395, %v397
      %v420 = vsel %vm418, %v397, %v399
      %v421 = vsel %vm418, %v399, %v401
      %v422 = vsel %vm418, %v403, %v405
      %v423 = vsel %vm418, %v405, %v407
      %v424 = vsel %vm418, %v407, %v409
      %v425 = vsel %vm418, %v411, %v413
      %v426 = vsel %vm418, %v413, %v415
      %v427 = vsel %vm418, %v415, %v417
      %v443 = vsel %vm418, 0.0, %v395
      %v444 = vsel %vm418, 0.0, %v403
      %v445 = vsel %vm418, 0.0, %v411
      %v446 = vsel %vm418, %v401, 0.0
      %v447 = vsel %vm418, %v409, 0.0
      %v448 = vsel %vm418, %v417, 0.0
      %v449 = vld [vmem:[%s1] sm:$0xff]
      %v450 = vld [vmem:[%s1 + $0x8] sm:$0xff]
      %v451 = vld [vmem:[%s1 + $0x10] sm:$0xff]
      %v452 = vld [vmem:[%s1 + $0x18] sm:$0xff]
      %v453 = vld [vmem:[%s1 + $0x20] sm:$0x1]
      %v454 = vld [vmem:[%s1 + $0x28] sm:$0x1]
      %v455 = vld [vmem:[%s1 + $0x30] sm:$0x1]
      %v456 = vld [vmem:[%s1 + $0x38] sm:$0x1]
      %v457 = vperm.slane %v449, 0
      %v458 = vperm.slane %v450, 0
      %v459 = vperm.slane %v451, 0
      %v460 = vperm.slane %v452, 0
      %v461 = vmul.f32 %v443, %v457
      %v462 = vmul.f32 %v419, %v458
      %v463 = vmul.f32 %v420, %v459
      %v464 = vmul.f32 %v421, %v460
      %v465 = vmul.f32 %v444, %v457
      %v466 = vmul.f32 %v422, %v458
      %v467 = vmul.f32 %v423, %v459
      %v468 = vmul.f32 %v424, %v460
      %v469 = vadd.f32 %v461, 0.0
      %v470 = vadd.f32 %v462, 0.0
      %v471 = vadd.f32 %v463, 0.0
      %v472 = vadd.f32 %v464, 0.0
      %v473 = vadd.f32 %v465, 0.0
      %v474 = vadd.f32 %v466, 0.0
      %v475 = vadd.f32 %v467, 0.0
      %v476 = vadd.f32 %v468, 0.0
      %v477 = vperm.slane %v449, 3
      %v478 = vperm.slane %v450, 3
      %v479 = vperm.slane %v451, 3
      %v480 = vperm.slane %v452, 3
      %v481 = vmul.f32 %v443, %v477
      %v482 = vmul.f32 %v419, %v478
      %v483 = vmul.f32 %v420, %v479
      %v484 = vmul.f32 %v421, %v480
      %v485 = vmul.f32 %v444, %v477
      %v486 = vmul.f32 %v422, %v478
      %v487 = vmul.f32 %v423, %v479
      %v488 = vmul.f32 %v424, %v480
      %v489 = vmul.f32 %v445, %v477
      %v490 = vmul.f32 %v425, %v478
      %v491 = vmul.f32 %v426, %v479
      %v492 = vmul.f32 %v427, %v480
      %vm505 = vcmask 1046528
      %v506 = vrot.slane %v481, 1
      %v507 = vrot.slane %v485, 1
      %v508 = vsel %vm505, %v506, %v507
      %v509 = vrot.slane %v482, 1
      %v510 = vrot.slane %v486, 1
      %v511 = vsel %vm505, %v509, %v510
      %v512 = vrot.slane %v483, 1
      %v513 = vrot.slane %v487, 1
      %v514 = vsel %vm505, %v512, %v513
      %v515 = vrot.slane %v484, 1
      %v516 = vrot.slane %v488, 1
      %v517 = vsel %vm505, %v515, %v516
      %v518 = vrot.slane %v489, 1
      %v519 = vsel %vm505, %v507, %v518
      %v520 = vrot.slane %v490, 1
      %v521 = vsel %vm505, %v510, %v520
      %v522 = vrot.slane %v491, 1
      %v523 = vsel %vm505, %v513, %v522
      %v524 = vrot.slane %v492, 1
      %v525 = vsel %vm505, %v516, %v524
      %v534 = vadd.f32 %v469, %v508
      %v535 = vadd.f32 %v470, %v511
      %v536 = vadd.f32 %v471, %v514
      %v537 = vadd.f32 %v472, %v517
      %v538 = vadd.f32 %v473, %v519
      %v539 = vadd.f32 %v474, %v521
      %v540 = vadd.f32 %v475, %v523
      %v541 = vadd.f32 %v476, %v525
      %v542 = vperm.slane %v449, 6
      %v543 = vperm.slane %v450, 6
      %v544 = vperm.slane %v451, 6
      %v545 = vperm.slane %v452, 6
      %v546 = vmul.f32 %v443, %v542
      %v547 = vmul.f32 %v419, %v543
      %v548 = vmul.f32 %v420, %v544
      %v549 = vmul.f32 %v421, %v545
      %v550 = vmul.f32 %v444, %v542
      %v551 = vmul.f32 %v422, %v543
      %v552 = vmul.f32 %v423, %v544
      %v553 = vmul.f32 %v424, %v545
      %v554 = vmul.f32 %v445, %v542
      %v555 = vmul.f32 %v425, %v543
      %v556 = vmul.f32 %v426, %v544
      %v557 = vmul.f32 %v427, %v545
      %vm570 = vcmask 1045504
      %v571 = vrot.slane %v546, 2
      %v572 = vrot.slane %v550, 2
      %v573 = vsel %vm570, %v571, %v572
      %v574 = vrot.slane %v547, 2
      %v575 = vrot.slane %v551, 2
      %v576 = vsel %vm570, %v574, %v575
      %v577 = vrot.slane %v548, 2
      %v578 = vrot.slane %v552, 2
      %v579 = vsel %vm570, %v577, %v578
      %v580 = vrot.slane %v549, 2
      %v581 = vrot.slane %v553, 2
      %v582 = vsel %vm570, %v580, %v581
      %v583 = vrot.slane %v554, 2
      %v584 = vsel %vm570, %v572, %v583
      %v585 = vrot.slane %v555, 2
      %v586 = vsel %vm570, %v575, %v585
      %v587 = vrot.slane %v556, 2
      %v588 = vsel %vm570, %v578, %v587
      %v589 = vrot.slane %v557, 2
      %v590 = vsel %vm570, %v581, %v589
      %v599 = vadd.f32 %v534, %v573
      %v600 = vadd.f32 %v535, %v576
      %v601 = vadd.f32 %v536, %v579
      %v602 = vadd.f32 %v537, %v582
      %v603 = vadd.f32 %v538, %v584
      %v604 = vadd.f32 %v539, %v586
      %v605 = vadd.f32 %v540, %v588
      %v606 = vadd.f32 %v541, %v590
      %v607 = vperm.slane %v449, 1
      %v608 = vperm.slane %v450, 1
      %v609 = vperm.slane %v451, 1
      %v610 = vperm.slane %v452, 1
      %615 = vrot.lane.b32.xlu0 %v607, 32
      %v616 = vpop.permute.xlu0 %615
      %617 = vrot.lane.b32.xlu0 %v608, 32
      %v618 = vpop.permute.xlu0 %617
      %619 = vrot.lane.b32.xlu0 %v609, 32
      %v620 = vpop.permute.xlu0 %619
      %621 = vrot.lane.b32.xlu0 %v610, 32
      %v622 = vpop.permute.xlu0 %621
      %v623 = vsel %vm418, %v616, %v618
      %v624 = vsel %vm418, %v618, %v620
      %v625 = vsel %vm418, %v620, %v622
      %v631 = vmul.f32 %v443, %v616
      %v632 = vmul.f32 %v419, %v623
      %v633 = vmul.f32 %v420, %v624
      %v634 = vmul.f32 %v421, %v625
      %v635 = vmul.f32 %v446, %v622
      %v636 = vmul.f32 %v444, %v616
      %v637 = vmul.f32 %v422, %v623
      %v638 = vmul.f32 %v423, %v624
      %v639 = vmul.f32 %v424, %v625
      %v640 = vmul.f32 %v447, %v622
      %651 = vrot.lane.b32.xlu0 %v631, 96
      %v652 = vpop.permute.xlu0 %651
      %653 = vrot.lane.b32.xlu0 %v632, 96
      %v654 = vpop.permute.xlu0 %653
      %655 = vrot.lane.b32.xlu0 %v633, 96
      %v656 = vpop.permute.xlu0 %655
      %657 = vrot.lane.b32.xlu0 %v634, 96
      %v658 = vpop.permute.xlu0 %657
      %659 = vrot.lane.b32.xlu0 %v635, 96
      %v660 = vpop.permute.xlu0 %659
      %661 = vrot.lane.b32.xlu0 %v636, 96
      %v662 = vpop.permute.xlu0 %661
      %663 = vrot.lane.b32.xlu0 %v637, 96
      %v664 = vpop.permute.xlu0 %663
      %665 = vrot.lane.b32.xlu0 %v638, 96
      %v666 = vpop.permute.xlu0 %665
      %667 = vrot.lane.b32.xlu0 %v639, 96
      %v668 = vpop.permute.xlu0 %667
      %669 = vrot.lane.b32.xlu0 %v640, 96
      %v670 = vpop.permute.xlu0 %669
      %vm671 = vcmask 785408
      %v672 = vsel %vm671, %v652, %v654
      %v673 = vsel %vm671, %v654, %v656
      %v674 = vsel %vm671, %v656, %v658
      %v675 = vsel %vm671, %v658, %v660
      %v676 = vsel %vm671, %v662, %v664
      %v677 = vsel %vm671, %v664, %v666
      %v678 = vsel %vm671, %v666, %v668
      %v679 = vsel %vm671, %v668, %v670
      %v688 = vadd.f32 %v599, %v672
      %v689 = vadd.f32 %v600, %v673
      %v690 = vadd.f32 %v601, %v674
      %v691 = vadd.f32 %v602, %v675
      %v692 = vadd.f32 %v603, %v676
      %v693 = vadd.f32 %v604, %v677
      %v694 = vadd.f32 %v605, %v678
      %v695 = vadd.f32 %v606, %v679
      %v696 = vperm.slane %v449, 4
      %v697 = vperm.slane %v450, 4
      %v698 = vperm.slane %v451, 4
      %v699 = vperm.slane %v452, 4
      %704 = vrot.lane.b32.xlu0 %v696, 32
      %v705 = vpop.permute.xlu0 %704
      %706 = vrot.lane.b32.xlu0 %v697, 32
      %v707 = vpop.permute.xlu0 %706
      %708 = vrot.lane.b32.xlu0 %v698, 32
      %v709 = vpop.permute.xlu0 %708
      %710 = vrot.lane.b32.xlu0 %v699, 32
      %v711 = vpop.permute.xlu0 %710
      %v712 = vsel %vm418, %v705, %v707
      %v713 = vsel %vm418, %v707, %v709
      %v714 = vsel %vm418, %v709, %v711
      %v720 = vmul.f32 %v443, %v705
      %v721 = vmul.f32 %v419, %v712
      %v722 = vmul.f32 %v420, %v713
      %v723 = vmul.f32 %v421, %v714
      %v724 = vmul.f32 %v446, %v711
      %v725 = vmul.f32 %v444, %v705
      %v726 = vmul.f32 %v422, %v712
      %v727 = vmul.f32 %v423, %v713
      %v728 = vmul.f32 %v424, %v714
      %v729 = vmul.f32 %v447, %v711
      %v730 = vmul.f32 %v445, %v705
      %v731 = vmul.f32 %v425, %v712
      %v732 = vmul.f32 %v426, %v713
      %v733 = vmul.f32 %v427, %v714
      %v734 = vmul.f32 %v448, %v711
      %v750 = vrot.slane %v720, 1
      %v751 = vrot.slane %v725, 1
      %v752 = vsel %vm505, %v750, %v751
      %v753 = vrot.slane %v721, 1
      %v754 = vrot.slane %v726, 1
      %v755 = vsel %vm505, %v753, %v754
      %v756 = vrot.slane %v722, 1
      %v757 = vrot.slane %v727, 1
      %v758 = vsel %vm505, %v756, %v757
      %v759 = vrot.slane %v723, 1
      %v760 = vrot.slane %v728, 1
      %v761 = vsel %vm505, %v759, %v760
      %v762 = vrot.slane %v724, 1
      %v763 = vrot.slane %v729, 1
      %v764 = vsel %vm505, %v762, %v763
      %v765 = vrot.slane %v730, 1
      %v766 = vsel %vm505, %v751, %v765
      %v767 = vrot.slane %v731, 1
      %v768 = vsel %vm505, %v754, %v767
      %v769 = vrot.slane %v732, 1
      %v770 = vsel %vm505, %v757, %v769
      %v771 = vrot.slane %v733, 1
      %v772 = vsel %vm505, %v760, %v771
      %v773 = vrot.slane %v734, 1
      %v774 = vsel %vm505, %v763, %v773
      %775 = vrot.lane.b32.xlu0 %v752, 96
      %v776 = vpop.permute.xlu0 %775
      %777 = vrot.lane.b32.xlu0 %v755, 96
      %v778 = vpop.permute.xlu0 %777
      %779 = vrot.lane.b32.xlu0 %v758, 96
      %v780 = vpop.permute.xlu0 %779
      %781 = vrot.lane.b32.xlu0 %v761, 96
      %v782 = vpop.permute.xlu0 %781
      %783 = vrot.lane.b32.xlu0 %v764, 96
      %v784 = vpop.permute.xlu0 %783
      %785 = vrot.lane.b32.xlu0 %v766, 96
      %v786 = vpop.permute.xlu0 %785
      %787 = vrot.lane.b32.xlu0 %v768, 96
      %v788 = vpop.permute.xlu0 %787
      %789 = vrot.lane.b32.xlu0 %v770, 96
      %v790 = vpop.permute.xlu0 %789
      %791 = vrot.lane.b32.xlu0 %v772, 96
      %v792 = vpop.permute.xlu0 %791
      %793 = vrot.lane.b32.xlu0 %v774, 96
      %v794 = vpop.permute.xlu0 %793
      %v795 = vsel %vm671, %v776, %v778
      %v796 = vsel %vm671, %v778, %v780
      %v797 = vsel %vm671, %v780, %v782
      %v798 = vsel %vm671, %v782, %v784
      %v799 = vsel %vm671, %v786, %v788
      %v800 = vsel %vm671, %v788, %v790
      %v801 = vsel %vm671, %v790, %v792
      %v802 = vsel %vm671, %v792, %v794
      %v811 = vadd.f32 %v688, %v795
      %v812 = vadd.f32 %v689, %v796
      %v813 = vadd.f32 %v690, %v797
      %v814 = vadd.f32 %v691, %v798
      %v815 = vadd.f32 %v692, %v799
      %v816 = vadd.f32 %v693, %v800
      %v817 = vadd.f32 %v694, %v801
      %v818 = vadd.f32 %v695, %v802
      %v819 = vperm.slane %v449, 7
      %v820 = vperm.slane %v450, 7
      %v821 = vperm.slane %v451, 7
      %v822 = vperm.slane %v452, 7
      %827 = vrot.lane.b32.xlu0 %v819, 32
      %v828 = vpop.permute.xlu0 %827
      %829 = vrot.lane.b32.xlu0 %v820, 32
      %v830 = vpop.permute.xlu0 %829
      %831 = vrot.lane.b32.xlu0 %v821, 32
      %v832 = vpop.permute.xlu0 %831
      %833 = vrot.lane.b32.xlu0 %v822, 32
      %v834 = vpop.permute.xlu0 %833
      %v835 = vsel %vm418, %v828, %v830
      %v836 = vsel %vm418, %v830, %v832
      %v837 = vsel %vm418, %v832, %v834
      %v843 = vmul.f32 %v443, %v828
      %v844 = vmul.f32 %v419, %v835
      %v845 = vmul.f32 %v420, %v836
      %v846 = vmul.f32 %v421, %v837
      %v847 = vmul.f32 %v446, %v834
      %v848 = vmul.f32 %v444, %v828
      %v849 = vmul.f32 %v422, %v835
      %v850 = vmul.f32 %v423, %v836
      %v851 = vmul.f32 %v424, %v837
      %v852 = vmul.f32 %v447, %v834
      %v853 = vmul.f32 %v445, %v828
      %v854 = vmul.f32 %v425, %v835
      %v855 = vmul.f32 %v426, %v836
      %v856 = vmul.f32 %v427, %v837
      %v857 = vmul.f32 %v448, %v834
      %v873 = vrot.slane %v843, 2
      %v874 = vrot.slane %v848, 2
      %v875 = vsel %vm570, %v873, %v874
      %v876 = vrot.slane %v844, 2
      %v877 = vrot.slane %v849, 2
      %v878 = vsel %vm570, %v876, %v877
      %v879 = vrot.slane %v845, 2
      %v880 = vrot.slane %v850, 2
      %v881 = vsel %vm570, %v879, %v880
      %v882 = vrot.slane %v846, 2
      %v883 = vrot.slane %v851, 2
      %v884 = vsel %vm570, %v882, %v883
      %v885 = vrot.slane %v847, 2
      %v886 = vrot.slane %v852, 2
      %v887 = vsel %vm570, %v885, %v886
      %v888 = vrot.slane %v853, 2
      %v889 = vsel %vm570, %v874, %v888
      %v890 = vrot.slane %v854, 2
      %v891 = vsel %vm570, %v877, %v890
      %v892 = vrot.slane %v855, 2
      %v893 = vsel %vm570, %v880, %v892
      %v894 = vrot.slane %v856, 2
      %v895 = vsel %vm570, %v883, %v894
      %v896 = vrot.slane %v857, 2
      %v897 = vsel %vm570, %v886, %v896
      %898 = vrot.lane.b32.xlu0 %v875, 96
      %v899 = vpop.permute.xlu0 %898
      %900 = vrot.lane.b32.xlu0 %v878, 96
      %v901 = vpop.permute.xlu0 %900
      %902 = vrot.lane.b32.xlu0 %v881, 96
      %v903 = vpop.permute.xlu0 %902
      %904 = vrot.lane.b32.xlu0 %v884, 96
      %v905 = vpop.permute.xlu0 %904
      %906 = vrot.lane.b32.xlu0 %v887, 96
      %v907 = vpop.permute.xlu0 %906
      %908 = vrot.lane.b32.xlu0 %v889, 96
      %v909 = vpop.permute.xlu0 %908
      %910 = vrot.lane.b32.xlu0 %v891, 96
      %v911 = vpop.permute.xlu0 %910
      %912 = vrot.lane.b32.xlu0 %v893, 96
      %v913 = vpop.permute.xlu0 %912
      %914 = vrot.lane.b32.xlu0 %v895, 96
      %v915 = vpop.permute.xlu0 %914
      %916 = vrot.lane.b32.xlu0 %v897, 96
      %v917 = vpop.permute.xlu0 %916
      %v918 = vsel %vm671, %v899, %v901
      %v919 = vsel %vm671, %v901, %v903
      %v920 = vsel %vm671, %v903, %v905
      %v921 = vsel %vm671, %v905, %v907
      %v922 = vsel %vm671, %v909, %v911
      %v923 = vsel %vm671, %v911, %v913
      %v924 = vsel %vm671, %v913, %v915
      %v925 = vsel %vm671, %v915, %v917
      %v934 = vadd.f32 %v811, %v918
      %v935 = vadd.f32 %v812, %v919
      %v936 = vadd.f32 %v813, %v920
      %v937 = vadd.f32 %v814, %v921
      %v938 = vadd.f32 %v815, %v922
      %v939 = vadd.f32 %v816, %v923
      %v940 = vadd.f32 %v817, %v924
      %v941 = vadd.f32 %v818, %v925
      %v942 = vperm.slane %v449, 2
      %v943 = vperm.slane %v450, 2
      %v944 = vperm.slane %v451, 2
      %v945 = vperm.slane %v452, 2
      %950 = vrot.lane.b32.xlu0 %v942, 64
      %v951 = vpop.permute.xlu0 %950
      %952 = vrot.lane.b32.xlu0 %v943, 64
      %v953 = vpop.permute.xlu0 %952
      %954 = vrot.lane.b32.xlu0 %v944, 64
      %v955 = vpop.permute.xlu0 %954
      %956 = vrot.lane.b32.xlu0 %v945, 64
      %v957 = vpop.permute.xlu0 %956
      %vm958 = vcmask 523264
      %v959 = vsel %vm958, %v951, %v953
      %v960 = vsel %vm958, %v953, %v955
      %v961 = vsel %vm958, %v955, %v957
      %v967 = vmul.f32 %v443, %v951
      %v968 = vmul.f32 %v419, %v959
      %v969 = vmul.f32 %v420, %v960
      %v970 = vmul.f32 %v421, %v961
      %v971 = vmul.f32 %v446, %v957
      %v972 = vmul.f32 %v444, %v951
      %v973 = vmul.f32 %v422, %v959
      %v974 = vmul.f32 %v423, %v960
      %v975 = vmul.f32 %v424, %v961
      %v976 = vmul.f32 %v447, %v957
      %987 = vrot.lane.b32.xlu0 %v967, 64
      %v988 = vpop.permute.xlu0 %987
      %989 = vrot.lane.b32.xlu0 %v968, 64
      %v990 = vpop.permute.xlu0 %989
      %991 = vrot.lane.b32.xlu0 %v969, 64
      %v992 = vpop.permute.xlu0 %991
      %993 = vrot.lane.b32.xlu0 %v970, 64
      %v994 = vpop.permute.xlu0 %993
      %995 = vrot.lane.b32.xlu0 %v971, 64
      %v996 = vpop.permute.xlu0 %995
      %997 = vrot.lane.b32.xlu0 %v972, 64
      %v998 = vpop.permute.xlu0 %997
      %999 = vrot.lane.b32.xlu0 %v973, 64
      %v1000 = vpop.permute.xlu0 %999
      %1001 = vrot.lane.b32.xlu0 %v974, 64
      %v1002 = vpop.permute.xlu0 %1001
      %1003 = vrot.lane.b32.xlu0 %v975, 64
      %v1004 = vpop.permute.xlu0 %1003
      %1005 = vrot.lane.b32.xlu0 %v976, 64
      %v1006 = vpop.permute.xlu0 %1005
      %v1007 = vsel %vm958, %v988, %v990
      %v1008 = vsel %vm958, %v990, %v992
      %v1009 = vsel %vm958, %v992, %v994
      %v1010 = vsel %vm958, %v994, %v996
      %v1011 = vsel %vm958, %v998, %v1000
      %v1012 = vsel %vm958, %v1000, %v1002
      %v1013 = vsel %vm958, %v1002, %v1004
      %v1014 = vsel %vm958, %v1004, %v1006
      %v1023 = vadd.f32 %v934, %v1007
      %v1024 = vadd.f32 %v935, %v1008
      %v1025 = vadd.f32 %v936, %v1009
      %v1026 = vadd.f32 %v937, %v1010
      %v1027 = vadd.f32 %v938, %v1011
      %v1028 = vadd.f32 %v939, %v1012
      %v1029 = vadd.f32 %v940, %v1013
      %v1030 = vadd.f32 %v941, %v1014
      %v1031 = vperm.slane %v449, 5
      %v1032 = vperm.slane %v450, 5
      %v1033 = vperm.slane %v451, 5
      %v1034 = vperm.slane %v452, 5
      %1039 = vrot.lane.b32.xlu0 %v1031, 64
      %v1040 = vpop.permute.xlu0 %1039
      %1041 = vrot.lane.b32.xlu0 %v1032, 64
      %v1042 = vpop.permute.xlu0 %1041
      %1043 = vrot.lane.b32.xlu0 %v1033, 64
      %v1044 = vpop.permute.xlu0 %1043
      %1045 = vrot.lane.b32.xlu0 %v1034, 64
      %v1046 = vpop.permute.xlu0 %1045
      %v1047 = vsel %vm958, %v1040, %v1042
      %v1048 = vsel %vm958, %v1042, %v1044
      %v1049 = vsel %vm958, %v1044, %v1046
      %v1055 = vmul.f32 %v443, %v1040
      %v1056 = vmul.f32 %v419, %v1047
      %v1057 = vmul.f32 %v420, %v1048
      %v1058 = vmul.f32 %v421, %v1049
      %v1059 = vmul.f32 %v446, %v1046
      %v1060 = vmul.f32 %v444, %v1040
      %v1061 = vmul.f32 %v422, %v1047
      %v1062 = vmul.f32 %v423, %v1048
      %v1063 = vmul.f32 %v424, %v1049
      %v1064 = vmul.f32 %v447, %v1046
      %v1065 = vmul.f32 %v445, %v1040
      %v1066 = vmul.f32 %v425, %v1047
      %v1067 = vmul.f32 %v426, %v1048
      %v1068 = vmul.f32 %v427, %v1049
      %v1069 = vmul.f32 %v448, %v1046
      %v1085 = vrot.slane %v1055, 1
      %v1086 = vrot.slane %v1060, 1
      %v1087 = vsel %vm505, %v1085, %v1086
      %v1088 = vrot.slane %v1056, 1
      %v1089 = vrot.slane %v1061, 1
      %v1090 = vsel %vm505, %v1088, %v1089
      %v1091 = vrot.slane %v1057, 1
      %v1092 = vrot.slane %v1062, 1
      %v1093 = vsel %vm505, %v1091, %v1092
      %v1094 = vrot.slane %v1058, 1
      %v1095 = vrot.slane %v1063, 1
      %v1096 = vsel %vm505, %v1094, %v1095
      %v1097 = vrot.slane %v1059, 1
      %v1098 = vrot.slane %v1064, 1
      %v1099 = vsel %vm505, %v1097, %v1098
      %v1100 = vrot.slane %v1065, 1
      %v1101 = vsel %vm505, %v1086, %v1100
      %v1102 = vrot.slane %v1066, 1
      %v1103 = vsel %vm505, %v1089, %v1102
      %v1104 = vrot.slane %v1067, 1
      %v1105 = vsel %vm505, %v1092, %v1104
      %v1106 = vrot.slane %v1068, 1
      %v1107 = vsel %vm505, %v1095, %v1106
      %v1108 = vrot.slane %v1069, 1
      %v1109 = vsel %vm505, %v1098, %v1108
      %1110 = vrot.lane.b32.xlu0 %v1087, 64
      %v1111 = vpop.permute.xlu0 %1110
      %1112 = vrot.lane.b32.xlu0 %v1090, 64
      %v1113 = vpop.permute.xlu0 %1112
      %1114 = vrot.lane.b32.xlu0 %v1093, 64
      %v1115 = vpop.permute.xlu0 %1114
      %1116 = vrot.lane.b32.xlu0 %v1096, 64
      %v1117 = vpop.permute.xlu0 %1116
      %1118 = vrot.lane.b32.xlu0 %v1099, 64
      %v1119 = vpop.permute.xlu0 %1118
      %1120 = vrot.lane.b32.xlu0 %v1101, 64
      %v1121 = vpop.permute.xlu0 %1120
      %1122 = vrot.lane.b32.xlu0 %v1103, 64
      %v1123 = vpop.permute.xlu0 %1122
      %1124 = vrot.lane.b32.xlu0 %v1105, 64
      %v1125 = vpop.permute.xlu0 %1124
      %1126 = vrot.lane.b32.xlu0 %v1107, 64
      %v1127 = vpop.permute.xlu0 %1126
      %1128 = vrot.lane.b32.xlu0 %v1109, 64
      %v1129 = vpop.permute.xlu0 %1128
      %v1130 = vsel %vm958, %v1111, %v1113
      %v1131 = vsel %vm958, %v1113, %v1115
      %v1132 = vsel %vm958, %v1115, %v1117
      %v1133 = vsel %vm958, %v1117, %v1119
      %v1134 = vsel %vm958, %v1121, %v1123
      %v1135 = vsel %vm958, %v1123, %v1125
      %v1136 = vsel %vm958, %v1125, %v1127
      %v1137 = vsel %vm958, %v1127, %v1129
      %v1146 = vadd.f32 %v1023, %v1130
      %v1147 = vadd.f32 %v1024, %v1131
      %v1148 = vadd.f32 %v1025, %v1132
      %v1149 = vadd.f32 %v1026, %v1133
      %v1150 = vadd.f32 %v1027, %v1134
      %v1151 = vadd.f32 %v1028, %v1135
      %v1152 = vadd.f32 %v1029, %v1136
      %v1153 = vadd.f32 %v1030, %v1137
      %v1154 = vperm.slane %v453, 0
      %v1155 = vperm.slane %v454, 0
      %v1156 = vperm.slane %v455, 0
      %v1157 = vperm.slane %v456, 0
      %1162 = vrot.lane.b32.xlu0 %v1154, 64
      %v1163 = vpop.permute.xlu0 %1162
      %1164 = vrot.lane.b32.xlu0 %v1155, 64
      %v1165 = vpop.permute.xlu0 %1164
      %1166 = vrot.lane.b32.xlu0 %v1156, 64
      %v1167 = vpop.permute.xlu0 %1166
      %1168 = vrot.lane.b32.xlu0 %v1157, 64
      %v1169 = vpop.permute.xlu0 %1168
      %v1170 = vsel %vm958, %v1163, %v1165
      %v1171 = vsel %vm958, %v1165, %v1167
      %v1172 = vsel %vm958, %v1167, %v1169
      %v1178 = vmul.f32 %v443, %v1163
      %v1179 = vmul.f32 %v419, %v1170
      %v1180 = vmul.f32 %v420, %v1171
      %v1181 = vmul.f32 %v421, %v1172
      %v1182 = vmul.f32 %v446, %v1169
      %v1183 = vmul.f32 %v444, %v1163
      %v1184 = vmul.f32 %v422, %v1170
      %v1185 = vmul.f32 %v423, %v1171
      %v1186 = vmul.f32 %v424, %v1172
      %v1187 = vmul.f32 %v447, %v1169
      %v1188 = vmul.f32 %v445, %v1163
      %v1189 = vmul.f32 %v425, %v1170
      %v1190 = vmul.f32 %v426, %v1171
      %v1191 = vmul.f32 %v427, %v1172
      %v1192 = vmul.f32 %v448, %v1169
      %v1208 = vrot.slane %v1178, 2
      %v1209 = vrot.slane %v1183, 2
      %v1210 = vsel %vm570, %v1208, %v1209
      %v1211 = vrot.slane %v1179, 2
      %v1212 = vrot.slane %v1184, 2
      %v1213 = vsel %vm570, %v1211, %v1212
      %v1214 = vrot.slane %v1180, 2
      %v1215 = vrot.slane %v1185, 2
      %v1216 = vsel %vm570, %v1214, %v1215
      %v1217 = vrot.slane %v1181, 2
      %v1218 = vrot.slane %v1186, 2
      %v1219 = vsel %vm570, %v1217, %v1218
      %v1220 = vrot.slane %v1182, 2
      %v1221 = vrot.slane %v1187, 2
      %v1222 = vsel %vm570, %v1220, %v1221
      %v1223 = vrot.slane %v1188, 2
      %v1224 = vsel %vm570, %v1209, %v1223
      %v1225 = vrot.slane %v1189, 2
      %v1226 = vsel %vm570, %v1212, %v1225
      %v1227 = vrot.slane %v1190, 2
      %v1228 = vsel %vm570, %v1215, %v1227
      %v1229 = vrot.slane %v1191, 2
      %v1230 = vsel %vm570, %v1218, %v1229
      %v1231 = vrot.slane %v1192, 2
      %v1232 = vsel %vm570, %v1221, %v1231
      %1233 = vrot.lane.b32.xlu0 %v1210, 64
      %v1234 = vpop.permute.xlu0 %1233
      %1235 = vrot.lane.b32.xlu0 %v1213, 64
      %v1236 = vpop.permute.xlu0 %1235
      %1237 = vrot.lane.b32.xlu0 %v1216, 64
      %v1238 = vpop.permute.xlu0 %1237
      %1239 = vrot.lane.b32.xlu0 %v1219, 64
      %v1240 = vpop.permute.xlu0 %1239
      %1241 = vrot.lane.b32.xlu0 %v1222, 64
      %v1242 = vpop.permute.xlu0 %1241
      %1243 = vrot.lane.b32.xlu0 %v1224, 64
      %v1244 = vpop.permute.xlu0 %1243
      %1245 = vrot.lane.b32.xlu0 %v1226, 64
      %v1246 = vpop.permute.xlu0 %1245
      %1247 = vrot.lane.b32.xlu0 %v1228, 64
      %v1248 = vpop.permute.xlu0 %1247
      %1249 = vrot.lane.b32.xlu0 %v1230, 64
      %v1250 = vpop.permute.xlu0 %1249
      %1251 = vrot.lane.b32.xlu0 %v1232, 64
      %v1252 = vpop.permute.xlu0 %1251
      %v1253 = vsel %vm958, %v1234, %v1236
      %v1254 = vsel %vm958, %v1236, %v1238
      %v1255 = vsel %vm958, %v1238, %v1240
      %v1256 = vsel %vm958, %v1240, %v1242
      %v1257 = vsel %vm958, %v1244, %v1246
      %v1258 = vsel %vm958, %v1246, %v1248
      %v1259 = vsel %vm958, %v1248, %v1250
      %v1260 = vsel %vm958, %v1250, %v1252
      %v1269 = vadd.f32 %v1146, %v1253
      %v1270 = vadd.f32 %v1147, %v1254
      %v1271 = vadd.f32 %v1148, %v1255
      %v1272 = vadd.f32 %v1149, %v1256
      %v1273 = vadd.f32 %v1150, %v1257
      %v1274 = vadd.f32 %v1151, %v1258
      %v1275 = vadd.f32 %v1152, %v1259
      %v1276 = vadd.f32 %v1153, %v1260
      %v1277 = vpack.c.bf16 %v1273, %v1269
      %v1278 = vpack.c.bf16 %v1274, %v1270
      %v1279 = vpack.c.bf16 %v1275, %v1271
      %v1280 = vpack.c.bf16 %v1276, %v1272
      %v1281 = vld [vmem:[%s2] sm:$0xff]
      %v1282 = vld [vmem:[%s2 + $0x8] sm:$0xff]
      %v1283 = vld [vmem:[%s2 + $0x10] sm:$0xff]
      %v1284 = vld [vmem:[%s2 + $0x18] sm:$0xff]
      %v1285 = vld [vmem:[%s2 + $0x20] sm:$0xff]
      %v1286 = vld [vmem:[%s2 + $0x28] sm:$0xff]
      %v1287 = vld [vmem:[%s2 + $0x30] sm:$0xff]
      %v1288 = vld [vmem:[%s2 + $0x38] sm:$0xff]
      %v1289 = vld [vmem:[%s2 + $0x40] sm:$0xff]
      %v1290 = vld [vmem:[%s2 + $0x48] sm:$0xff]
      %v1291 = vld [vmem:[%s2 + $0x50] sm:$0xff]
      %v1292 = vld [vmem:[%s2 + $0x58] sm:$0xff]
      %v1293 = vld [vmem:[%s2 + $0x60] sm:$0xff]
      %v1294 = vld [vmem:[%s2 + $0x68] sm:$0xff]
      %v1295 = vld [vmem:[%s2 + $0x70] sm:$0xff]
      %v1296 = vld [vmem:[%s2 + $0x78] sm:$0xff]
      %v1297 = vld [vmem:[%s2 + $0x80] sm:$0xff]
      %v1298 = vld [vmem:[%s2 + $0x88] sm:$0xff]
      %v1299 = vld [vmem:[%s2 + $0x90] sm:$0xff]
      %v1300 = vld [vmem:[%s2 + $0x98] sm:$0xff]
      %v1301 = vld [vmem:[%s2 + $0xa0] sm:$0xff]
      %v1302 = vld [vmem:[%s2 + $0xa8] sm:$0xff]
      %v1303 = vld [vmem:[%s2 + $0xb0] sm:$0xff]
      %v1304 = vld [vmem:[%s2 + $0xb8] sm:$0xff]
      %v1305 = vld [vmem:[%s2 + $0xc0] sm:$0xff]
      %v1306 = vld [vmem:[%s2 + $0xc8] sm:$0xff]
      %v1307 = vld [vmem:[%s2 + $0xd0] sm:$0xff]
      %v1308 = vld [vmem:[%s2 + $0xd8] sm:$0xff]
      %v1309 = vld [vmem:[%s2 + $0xe0] sm:$0xff]
      %v1310 = vld [vmem:[%s2 + $0xe8] sm:$0xff]
      %v1311 = vld [vmem:[%s2 + $0xf0] sm:$0xff]
      %v1312 = vld [vmem:[%s2 + $0xf8] sm:$0xff]
      %v1313 = vld [vmem:[%s2 + $0x100] sm:$0xff]
      %v1314 = vld [vmem:[%s2 + $0x108] sm:$0xff]
      %v1315 = vld [vmem:[%s2 + $0x110] sm:$0xff]
      %v1316 = vld [vmem:[%s2 + $0x118] sm:$0xff]
      %v1317 = vld [vmem:[%s2 + $0x120] sm:$0xff]
      %v1318 = vld [vmem:[%s2 + $0x128] sm:$0xff]
      %v1319 = vld [vmem:[%s2 + $0x130] sm:$0xff]
      %v1320 = vld [vmem:[%s2 + $0x138] sm:$0xff]
      %v1321 = vld [vmem:[%s2 + $0x140] sm:$0xff]
      %v1322 = vld [vmem:[%s2 + $0x148] sm:$0xff]
      %v1323 = vld [vmem:[%s2 + $0x150] sm:$0xff]
      %v1324 = vld [vmem:[%s2 + $0x158] sm:$0xff]
      %v1325 = vld [vmem:[%s2 + $0x160] sm:$0xff]
      %v1326 = vld [vmem:[%s2 + $0x168] sm:$0xff]
      %v1327 = vld [vmem:[%s2 + $0x170] sm:$0xff]
      %v1328 = vld [vmem:[%s2 + $0x178] sm:$0xff]
      %v1329 = vld [vmem:[%s2 + $0x180] sm:$0xff]
      %v1330 = vld [vmem:[%s2 + $0x188] sm:$0xff]
      %v1331 = vld [vmem:[%s2 + $0x190] sm:$0xff]
      %v1332 = vld [vmem:[%s2 + $0x198] sm:$0xff]
      %v1333 = vld [vmem:[%s2 + $0x1a0] sm:$0xff]
      %v1334 = vld [vmem:[%s2 + $0x1a8] sm:$0xff]
      %v1335 = vld [vmem:[%s2 + $0x1b0] sm:$0xff]
      %v1336 = vld [vmem:[%s2 + $0x1b8] sm:$0xff]
      %v1337 = vld [vmem:[%s2 + $0x1c0] sm:$0xff]
      %v1338 = vld [vmem:[%s2 + $0x1c8] sm:$0xff]
      %v1339 = vld [vmem:[%s2 + $0x1d0] sm:$0xff]
      %v1340 = vld [vmem:[%s2 + $0x1d8] sm:$0xff]
      %v1341 = vld [vmem:[%s2 + $0x1e0] sm:$0xff]
      %v1342 = vld [vmem:[%s2 + $0x1e8] sm:$0xff]
      %v1343 = vld [vmem:[%s2 + $0x1f0] sm:$0xff]
      %v1344 = vld [vmem:[%s2 + $0x1f8] sm:$0xff]
      %v1345 = vld [vmem:[%s2 + $0x200] sm:$0xff]
      %v1346 = vld [vmem:[%s2 + $0x208] sm:$0xff]
      %v1347 = vld [vmem:[%s2 + $0x210] sm:$0xff]
      %v1348 = vld [vmem:[%s2 + $0x218] sm:$0xff]
      %v1349 = vld [vmem:[%s2 + $0x220] sm:$0xff]
      %v1350 = vld [vmem:[%s2 + $0x228] sm:$0xff]
      %v1351 = vld [vmem:[%s2 + $0x230] sm:$0xff]
      %v1352 = vld [vmem:[%s2 + $0x238] sm:$0xff]
      %v1353 = vld [vmem:[%s2 + $0x240] sm:$0xff]
      %v1354 = vld [vmem:[%s2 + $0x248] sm:$0xff]
      %v1355 = vld [vmem:[%s2 + $0x250] sm:$0xff]
      %v1356 = vld [vmem:[%s2 + $0x258] sm:$0xff]
      %v1357 = vld [vmem:[%s2 + $0x260] sm:$0xff]
      %v1358 = vld [vmem:[%s2 + $0x268] sm:$0xff]
      %v1359 = vld [vmem:[%s2 + $0x270] sm:$0xff]
      %v1360 = vld [vmem:[%s2 + $0x278] sm:$0xff]
      %v1361 = vld [vmem:[%s2 + $0x280] sm:$0xff]
      %v1362 = vld [vmem:[%s2 + $0x288] sm:$0xff]
      %v1363 = vld [vmem:[%s2 + $0x290] sm:$0xff]
      %v1364 = vld [vmem:[%s2 + $0x298] sm:$0xff]
      %v1365 = vld [vmem:[%s2 + $0x2a0] sm:$0xff]
      %v1366 = vld [vmem:[%s2 + $0x2a8] sm:$0xff]
      %v1367 = vld [vmem:[%s2 + $0x2b0] sm:$0xff]
      %v1368 = vld [vmem:[%s2 + $0x2b8] sm:$0xff]
      %v1369 = vld [vmem:[%s2 + $0x2c0] sm:$0xff]
      %v1370 = vld [vmem:[%s2 + $0x2c8] sm:$0xff]
      %v1371 = vld [vmem:[%s2 + $0x2d0] sm:$0xff]
      %v1372 = vld [vmem:[%s2 + $0x2d8] sm:$0xff]
      %v1373 = vld [vmem:[%s2 + $0x2e0] sm:$0xff]
      %v1374 = vld [vmem:[%s2 + $0x2e8] sm:$0xff]
      %v1375 = vld [vmem:[%s2 + $0x2f0] sm:$0xff]
      %v1376 = vld [vmem:[%s2 + $0x2f8] sm:$0xff]
      %v1377 = vld [vmem:[%s2 + $0x300] sm:$0xff]
      %v1378 = vld [vmem:[%s2 + $0x308] sm:$0xff]
      %v1379 = vld [vmem:[%s2 + $0x310] sm:$0xff]
      %v1380 = vld [vmem:[%s2 + $0x318] sm:$0xff]
      %v1381 = vld [vmem:[%s2 + $0x320] sm:$0xff]
      %v1382 = vld [vmem:[%s2 + $0x328] sm:$0xff]
      %v1383 = vld [vmem:[%s2 + $0x330] sm:$0xff]
      %v1384 = vld [vmem:[%s2 + $0x338] sm:$0xff]
      %v1385 = vld [vmem:[%s2 + $0x340] sm:$0xff]
      %v1386 = vld [vmem:[%s2 + $0x348] sm:$0xff]
      %v1387 = vld [vmem:[%s2 + $0x350] sm:$0xff]
      %v1388 = vld [vmem:[%s2 + $0x358] sm:$0xff]
      %v1389 = vld [vmem:[%s2 + $0x360] sm:$0xff]
      %v1390 = vld [vmem:[%s2 + $0x368] sm:$0xff]
      %v1391 = vld [vmem:[%s2 + $0x370] sm:$0xff]
      %v1392 = vld [vmem:[%s2 + $0x378] sm:$0xff]
      %v1393 = vld [vmem:[%s2 + $0x380] sm:$0xff]
      %v1394 = vld [vmem:[%s2 + $0x388] sm:$0xff]
      %v1395 = vld [vmem:[%s2 + $0x390] sm:$0xff]
      %v1396 = vld [vmem:[%s2 + $0x398] sm:$0xff]
      %v1397 = vld [vmem:[%s2 + $0x3a0] sm:$0xff]
      %v1398 = vld [vmem:[%s2 + $0x3a8] sm:$0xff]
      %v1399 = vld [vmem:[%s2 + $0x3b0] sm:$0xff]
      %v1400 = vld [vmem:[%s2 + $0x3b8] sm:$0xff]
      %v1401 = vld [vmem:[%s2 + $0x3c0] sm:$0xff]
      %v1402 = vld [vmem:[%s2 + $0x3c8] sm:$0xff]
      %v1403 = vld [vmem:[%s2 + $0x3d0] sm:$0xff]
      %v1404 = vld [vmem:[%s2 + $0x3d8] sm:$0xff]
      %v1405 = vld [vmem:[%s2 + $0x3e0] sm:$0xff]
      %v1406 = vld [vmem:[%s2 + $0x3e8] sm:$0xff]
      %v1407 = vld [vmem:[%s2 + $0x3f0] sm:$0xff]
      %v1408 = vld [vmem:[%s2 + $0x3f8] sm:$0xff]
      %v1537 = vunpack.c.l.b16 %v1281
      %v1538 = vunpack.c.h.b16 %v1281
      %v1539 = vunpack.c.l.b16 %v1282
      %v1540 = vunpack.c.h.b16 %v1282
      %v1541 = vunpack.c.l.b16 %v1283
      %v1542 = vunpack.c.h.b16 %v1283
      %v1543 = vunpack.c.l.b16 %v1284
      %v1544 = vunpack.c.h.b16 %v1284
      %v1545 = vunpack.c.l.b16 %v1285
      %v1546 = vunpack.c.h.b16 %v1285
      %v1547 = vunpack.c.l.b16 %v1286
      %v1548 = vunpack.c.h.b16 %v1286
      %v1549 = vunpack.c.l.b16 %v1287
      %v1550 = vunpack.c.h.b16 %v1287
      %v1551 = vunpack.c.l.b16 %v1288
      %v1552 = vunpack.c.h.b16 %v1288
      %v1553 = vunpack.c.l.b16 %v1289
      %v1554 = vunpack.c.h.b16 %v1289
      %v1555 = vunpack.c.l.b16 %v1290
      %v1556 = vunpack.c.h.b16 %v1290
      %v1557 = vunpack.c.l.b16 %v1291
      %v1558 = vunpack.c.h.b16 %v1291
      %v1559 = vunpack.c.l.b16 %v1292
      %v1560 = vunpack.c.h.b16 %v1292
      %v1561 = vunpack.c.l.b16 %v1293
      %v1562 = vunpack.c.h.b16 %v1293
      %v1563 = vunpack.c.l.b16 %v1294
      %v1564 = vunpack.c.h.b16 %v1294
      %v1565 = vunpack.c.l.b16 %v1295
      %v1566 = vunpack.c.h.b16 %v1295
      %v1567 = vunpack.c.l.b16 %v1296
      %v1568 = vunpack.c.h.b16 %v1296
      %v1569 = vunpack.c.l.b16 %v1297
      %v1570 = vunpack.c.h.b16 %v1297
      %v1571 = vunpack.c.l.b16 %v1298
      %v1572 = vunpack.c.h.b16 %v1298
      %v1573 = vunpack.c.l.b16 %v1299
      %v1574 = vunpack.c.h.b16 %v1299
      %v1575 = vunpack.c.l.b16 %v1300
      %v1576 = vunpack.c.h.b16 %v1300
      %v1577 = vunpack.c.l.b16 %v1301
      %v1578 = vunpack.c.h.b16 %v1301
      %v1579 = vunpack.c.l.b16 %v1302
      %v1580 = vunpack.c.h.b16 %v1302
      %v1581 = vunpack.c.l.b16 %v1303
      %v1582 = vunpack.c.h.b16 %v1303
      %v1583 = vunpack.c.l.b16 %v1304
      %v1584 = vunpack.c.h.b16 %v1304
      %v1585 = vunpack.c.l.b16 %v1305
      %v1586 = vunpack.c.h.b16 %v1305
      %v1587 = vunpack.c.l.b16 %v1306
      %v1588 = vunpack.c.h.b16 %v1306
      %v1589 = vunpack.c.l.b16 %v1307
      %v1590 = vunpack.c.h.b16 %v1307
      %v1591 = vunpack.c.l.b16 %v1308
      %v1592 = vunpack.c.h.b16 %v1308
      %v1593 = vunpack.c.l.b16 %v1309
      %v1594 = vunpack.c.h.b16 %v1309
      %v1595 = vunpack.c.l.b16 %v1310
      %v1596 = vunpack.c.h.b16 %v1310
      %v1597 = vunpack.c.l.b16 %v1311
      %v1598 = vunpack.c.h.b16 %v1311
      %v1599 = vunpack.c.l.b16 %v1312
      %v1600 = vunpack.c.h.b16 %v1312
      %v1601 = vunpack.c.l.b16 %v1313
      %v1602 = vunpack.c.h.b16 %v1313
      %v1603 = vunpack.c.l.b16 %v1314
      %v1604 = vunpack.c.h.b16 %v1314
      %v1605 = vunpack.c.l.b16 %v1315
      %v1606 = vunpack.c.h.b16 %v1315
      %v1607 = vunpack.c.l.b16 %v1316
      %v1608 = vunpack.c.h.b16 %v1316
      %v1609 = vunpack.c.l.b16 %v1317
      %v1610 = vunpack.c.h.b16 %v1317
      %v1611 = vunpack.c.l.b16 %v1318
      %v1612 = vunpack.c.h.b16 %v1318
      %v1613 = vunpack.c.l.b16 %v1319
      %v1614 = vunpack.c.h.b16 %v1319
      %v1615 = vunpack.c.l.b16 %v1320
      %v1616 = vunpack.c.h.b16 %v1320
      %v1617 = vunpack.c.l.b16 %v1321
      %v1618 = vunpack.c.h.b16 %v1321
      %v1619 = vunpack.c.l.b16 %v1322
      %v1620 = vunpack.c.h.b16 %v1322
      %v1621 = vunpack.c.l.b16 %v1323
      %v1622 = vunpack.c.h.b16 %v1323
      %v1623 = vunpack.c.l.b16 %v1324
      %v1624 = vunpack.c.h.b16 %v1324
      %v1625 = vunpack.c.l.b16 %v1325
      %v1626 = vunpack.c.h.b16 %v1325
      %v1627 = vunpack.c.l.b16 %v1326
      %v1628 = vunpack.c.h.b16 %v1326
      %v1629 = vunpack.c.l.b16 %v1327
      %v1630 = vunpack.c.h.b16 %v1327
      %v1631 = vunpack.c.l.b16 %v1328
      %v1632 = vunpack.c.h.b16 %v1328
      %v1633 = vunpack.c.l.b16 %v1329
      %v1634 = vunpack.c.h.b16 %v1329
      %v1635 = vunpack.c.l.b16 %v1330
      %v1636 = vunpack.c.h.b16 %v1330
      %v1637 = vunpack.c.l.b16 %v1331
      %v1638 = vunpack.c.h.b16 %v1331
      %v1639 = vunpack.c.l.b16 %v1332
      %v1640 = vunpack.c.h.b16 %v1332
      %v1641 = vunpack.c.l.b16 %v1333
      %v1642 = vunpack.c.h.b16 %v1333
      %v1643 = vunpack.c.l.b16 %v1334
      %v1644 = vunpack.c.h.b16 %v1334
      %v1645 = vunpack.c.l.b16 %v1335
      %v1646 = vunpack.c.h.b16 %v1335
      %v1647 = vunpack.c.l.b16 %v1336
      %v1648 = vunpack.c.h.b16 %v1336
      %v1649 = vunpack.c.l.b16 %v1337
      %v1650 = vunpack.c.h.b16 %v1337
      %v1651 = vunpack.c.l.b16 %v1338
      %v1652 = vunpack.c.h.b16 %v1338
      %v1653 = vunpack.c.l.b16 %v1339
      %v1654 = vunpack.c.h.b16 %v1339
      %v1655 = vunpack.c.l.b16 %v1340
      %v1656 = vunpack.c.h.b16 %v1340
      %v1657 = vunpack.c.l.b16 %v1341
      %v1658 = vunpack.c.h.b16 %v1341
      %v1659 = vunpack.c.l.b16 %v1342
      %v1660 = vunpack.c.h.b16 %v1342
      %v1661 = vunpack.c.l.b16 %v1343
      %v1662 = vunpack.c.h.b16 %v1343
      %v1663 = vunpack.c.l.b16 %v1344
      %v1664 = vunpack.c.h.b16 %v1344
      %v1665 = vunpack.c.l.b16 %v1345
      %v1666 = vunpack.c.h.b16 %v1345
      %v1667 = vunpack.c.l.b16 %v1346
      %v1668 = vunpack.c.h.b16 %v1346
      %v1669 = vunpack.c.l.b16 %v1347
      %v1670 = vunpack.c.h.b16 %v1347
      %v1671 = vunpack.c.l.b16 %v1348
      %v1672 = vunpack.c.h.b16 %v1348
      %v1673 = vunpack.c.l.b16 %v1349
      %v1674 = vunpack.c.h.b16 %v1349
      %v1675 = vunpack.c.l.b16 %v1350
      %v1676 = vunpack.c.h.b16 %v1350
      %v1677 = vunpack.c.l.b16 %v1351
      %v1678 = vunpack.c.h.b16 %v1351
      %v1679 = vunpack.c.l.b16 %v1352
      %v1680 = vunpack.c.h.b16 %v1352
      %v1681 = vunpack.c.l.b16 %v1353
      %v1682 = vunpack.c.h.b16 %v1353
      %v1683 = vunpack.c.l.b16 %v1354
      %v1684 = vunpack.c.h.b16 %v1354
      %v1685 = vunpack.c.l.b16 %v1355
      %v1686 = vunpack.c.h.b16 %v1355
      %v1687 = vunpack.c.l.b16 %v1356
      %v1688 = vunpack.c.h.b16 %v1356
      %v1689 = vunpack.c.l.b16 %v1357
      %v1690 = vunpack.c.h.b16 %v1357
      %v1691 = vunpack.c.l.b16 %v1358
      %v1692 = vunpack.c.h.b16 %v1358
      %v1693 = vunpack.c.l.b16 %v1359
      %v1694 = vunpack.c.h.b16 %v1359
      %v1695 = vunpack.c.l.b16 %v1360
      %v1696 = vunpack.c.h.b16 %v1360
      %v1697 = vunpack.c.l.b16 %v1361
      %v1698 = vunpack.c.h.b16 %v1361
      %v1699 = vunpack.c.l.b16 %v1362
      %v1700 = vunpack.c.h.b16 %v1362
      %v1701 = vunpack.c.l.b16 %v1363
      %v1702 = vunpack.c.h.b16 %v1363
      %v1703 = vunpack.c.l.b16 %v1364
      %v1704 = vunpack.c.h.b16 %v1364
      %v1705 = vunpack.c.l.b16 %v1365
      %v1706 = vunpack.c.h.b16 %v1365
      %v1707 = vunpack.c.l.b16 %v1366
      %v1708 = vunpack.c.h.b16 %v1366
      %v1709 = vunpack.c.l.b16 %v1367
      %v1710 = vunpack.c.h.b16 %v1367
      %v1711 = vunpack.c.l.b16 %v1368
      %v1712 = vunpack.c.h.b16 %v1368
      %v1713 = vunpack.c.l.b16 %v1369
      %v1714 = vunpack.c.h.b16 %v1369
      %v1715 = vunpack.c.l.b16 %v1370
      %v1716 = vunpack.c.h.b16 %v1370
      %v1717 = vunpack.c.l.b16 %v1371
      %v1718 = vunpack.c.h.b16 %v1371
      %v1719 = vunpack.c.l.b16 %v1372
      %v1720 = vunpack.c.h.b16 %v1372
      %v1721 = vunpack.c.l.b16 %v1373
      %v1722 = vunpack.c.h.b16 %v1373
      %v1723 = vunpack.c.l.b16 %v1374
      %v1724 = vunpack.c.h.b16 %v1374
      %v1725 = vunpack.c.l.b16 %v1375
      %v1726 = vunpack.c.h.b16 %v1375
      %v1727 = vunpack.c.l.b16 %v1376
      %v1728 = vunpack.c.h.b16 %v1376
      %v1729 = vunpack.c.l.b16 %v1377
      %v1730 = vunpack.c.h.b16 %v1377
      %v1731 = vunpack.c.l.b16 %v1378
      %v1732 = vunpack.c.h.b16 %v1378
      %v1733 = vunpack.c.l.b16 %v1379
      %v1734 = vunpack.c.h.b16 %v1379
      %v1735 = vunpack.c.l.b16 %v1380
      %v1736 = vunpack.c.h.b16 %v1380
      %v1737 = vunpack.c.l.b16 %v1381
      %v1738 = vunpack.c.h.b16 %v1381
      %v1739 = vunpack.c.l.b16 %v1382
      %v1740 = vunpack.c.h.b16 %v1382
      %v1741 = vunpack.c.l.b16 %v1383
      %v1742 = vunpack.c.h.b16 %v1383
      %v1743 = vunpack.c.l.b16 %v1384
      %v1744 = vunpack.c.h.b16 %v1384
      %v1745 = vunpack.c.l.b16 %v1385
      %v1746 = vunpack.c.h.b16 %v1385
      %v1747 = vunpack.c.l.b16 %v1386
      %v1748 = vunpack.c.h.b16 %v1386
      %v1749 = vunpack.c.l.b16 %v1387
      %v1750 = vunpack.c.h.b16 %v1387
      %v1751 = vunpack.c.l.b16 %v1388
      %v1752 = vunpack.c.h.b16 %v1388
      %v1753 = vunpack.c.l.b16 %v1389
      %v1754 = vunpack.c.h.b16 %v1389
      %v1755 = vunpack.c.l.b16 %v1390
      %v1756 = vunpack.c.h.b16 %v1390
      %v1757 = vunpack.c.l.b16 %v1391
      %v1758 = vunpack.c.h.b16 %v1391
      %v1759 = vunpack.c.l.b16 %v1392
      %v1760 = vunpack.c.h.b16 %v1392
      %v1761 = vunpack.c.l.b16 %v1393
      %v1762 = vunpack.c.h.b16 %v1393
      %v1763 = vunpack.c.l.b16 %v1394
      %v1764 = vunpack.c.h.b16 %v1394
      %v1765 = vunpack.c.l.b16 %v1395
      %v1766 = vunpack.c.h.b16 %v1395
      %v1767 = vunpack.c.l.b16 %v1396
      %v1768 = vunpack.c.h.b16 %v1396
      %v1769 = vunpack.c.l.b16 %v1397
      %v1770 = vunpack.c.h.b16 %v1397
      %v1771 = vunpack.c.l.b16 %v1398
      %v1772 = vunpack.c.h.b16 %v1398
      %v1773 = vunpack.c.l.b16 %v1399
      %v1774 = vunpack.c.h.b16 %v1399
      %v1775 = vunpack.c.l.b16 %v1400
      %v1776 = vunpack.c.h.b16 %v1400
      %v1777 = vunpack.c.l.b16 %v1401
      %v1778 = vunpack.c.h.b16 %v1401
      %v1779 = vunpack.c.l.b16 %v1402
      %v1780 = vunpack.c.h.b16 %v1402
      %v1781 = vunpack.c.l.b16 %v1403
      %v1782 = vunpack.c.h.b16 %v1403
      %v1783 = vunpack.c.l.b16 %v1404
      %v1784 = vunpack.c.h.b16 %v1404
      %v1785 = vunpack.c.l.b16 %v1405
      %v1786 = vunpack.c.h.b16 %v1405
      %v1787 = vunpack.c.l.b16 %v1406
      %v1788 = vunpack.c.h.b16 %v1406
      %v1789 = vunpack.c.l.b16 %v1407
      %v1790 = vunpack.c.h.b16 %v1407
      %v1791 = vunpack.c.l.b16 %v1408
      %v1792 = vunpack.c.h.b16 %v1408
      %v1793 = vpack.c.b16 %v1541, %v1537
      %v1794 = vpack.c.b16 %v1542, %v1538
      %v1795 = vpack.c.b16 %v1543, %v1539
      %v1796 = vpack.c.b16 %v1544, %v1540
      %v1797 = vpack.c.b16 %v1549, %v1545
      %v1798 = vpack.c.b16 %v1550, %v1546
      %v1799 = vpack.c.b16 %v1551, %v1547
      %v1800 = vpack.c.b16 %v1552, %v1548
      %v1801 = vpack.c.b16 %v1557, %v1553
      %v1802 = vpack.c.b16 %v1558, %v1554
      %v1803 = vpack.c.b16 %v1559, %v1555
      %v1804 = vpack.c.b16 %v1560, %v1556
      %v1805 = vpack.c.b16 %v1565, %v1561
      %v1806 = vpack.c.b16 %v1566, %v1562
      %v1807 = vpack.c.b16 %v1567, %v1563
      %v1808 = vpack.c.b16 %v1568, %v1564
      %v1809 = vpack.c.b16 %v1573, %v1569
      %v1810 = vpack.c.b16 %v1574, %v1570
      %v1811 = vpack.c.b16 %v1575, %v1571
      %v1812 = vpack.c.b16 %v1576, %v1572
      %v1813 = vpack.c.b16 %v1581, %v1577
      %v1814 = vpack.c.b16 %v1582, %v1578
      %v1815 = vpack.c.b16 %v1583, %v1579
      %v1816 = vpack.c.b16 %v1584, %v1580
      %v1817 = vpack.c.b16 %v1589, %v1585
      %v1818 = vpack.c.b16 %v1590, %v1586
      %v1819 = vpack.c.b16 %v1591, %v1587
      %v1820 = vpack.c.b16 %v1592, %v1588
      %v1821 = vpack.c.b16 %v1597, %v1593
      %v1822 = vpack.c.b16 %v1598, %v1594
      %v1823 = vpack.c.b16 %v1599, %v1595
      %v1824 = vpack.c.b16 %v1600, %v1596
      %v1825 = vpack.c.b16 %v1605, %v1601
      %v1826 = vpack.c.b16 %v1606, %v1602
      %v1827 = vpack.c.b16 %v1607, %v1603
      %v1828 = vpack.c.b16 %v1608, %v1604
      %v1829 = vpack.c.b16 %v1613, %v1609
      %v1830 = vpack.c.b16 %v1614, %v1610
      %v1831 = vpack.c.b16 %v1615, %v1611
      %v1832 = vpack.c.b16 %v1616, %v1612
      %v1833 = vpack.c.b16 %v1621, %v1617
      %v1834 = vpack.c.b16 %v1622, %v1618
      %v1835 = vpack.c.b16 %v1623, %v1619
      %v1836 = vpack.c.b16 %v1624, %v1620
      %v1837 = vpack.c.b16 %v1629, %v1625
      %v1838 = vpack.c.b16 %v1630, %v1626
      %v1839 = vpack.c.b16 %v1631, %v1627
      %v1840 = vpack.c.b16 %v1632, %v1628
      %v1841 = vpack.c.b16 %v1637, %v1633
      %v1842 = vpack.c.b16 %v1638, %v1634
      %v1843 = vpack.c.b16 %v1639, %v1635
      %v1844 = vpack.c.b16 %v1640, %v1636
      %v1845 = vpack.c.b16 %v1645, %v1641
      %v1846 = vpack.c.b16 %v1646, %v1642
      %v1847 = vpack.c.b16 %v1647, %v1643
      %v1848 = vpack.c.b16 %v1648, %v1644
      %v1849 = vpack.c.b16 %v1653, %v1649
      %v1850 = vpack.c.b16 %v1654, %v1650
      %v1851 = vpack.c.b16 %v1655, %v1651
      %v1852 = vpack.c.b16 %v1656, %v1652
      %v1853 = vpack.c.b16 %v1661, %v1657
      %v1854 = vpack.c.b16 %v1662, %v1658
      %v1855 = vpack.c.b16 %v1663, %v1659
      %v1856 = vpack.c.b16 %v1664, %v1660
      %v1857 = vpack.c.b16 %v1669, %v1665
      %v1858 = vpack.c.b16 %v1670, %v1666
      %v1859 = vpack.c.b16 %v1671, %v1667
      %v1860 = vpack.c.b16 %v1672, %v1668
      %v1861 = vpack.c.b16 %v1677, %v1673
      %v1862 = vpack.c.b16 %v1678, %v1674
      %v1863 = vpack.c.b16 %v1679, %v1675
      %v1864 = vpack.c.b16 %v1680, %v1676
      %v1865 = vpack.c.b16 %v1685, %v1681
      %v1866 = vpack.c.b16 %v1686, %v1682
      %v1867 = vpack.c.b16 %v1687, %v1683
      %v1868 = vpack.c.b16 %v1688, %v1684
      %v1869 = vpack.c.b16 %v1693, %v1689
      %v1870 = vpack.c.b16 %v1694, %v1690
      %v1871 = vpack.c.b16 %v1695, %v1691
      %v1872 = vpack.c.b16 %v1696, %v1692
      %v1873 = vpack.c.b16 %v1701, %v1697
      %v1874 = vpack.c.b16 %v1702, %v1698
      %v1875 = vpack.c.b16 %v1703, %v1699
      %v1876 = vpack.c.b16 %v1704, %v1700
      %v1877 = vpack.c.b16 %v1709, %v1705
      %v1878 = vpack.c.b16 %v1710, %v1706
      %v1879 = vpack.c.b16 %v1711, %v1707
      %v1880 = vpack.c.b16 %v1712, %v1708
      %v1881 = vpack.c.b16 %v1717, %v1713
      %v1882 = vpack.c.b16 %v1718, %v1714
      %v1883 = vpack.c.b16 %v1719, %v1715
      %v1884 = vpack.c.b16 %v1720, %v1716
      %v1885 = vpack.c.b16 %v1725, %v1721
      %v1886 = vpack.c.b16 %v1726, %v1722
      %v1887 = vpack.c.b16 %v1727, %v1723
      %v1888 = vpack.c.b16 %v1728, %v1724
      %v1889 = vpack.c.b16 %v1733, %v1729
      %v1890 = vpack.c.b16 %v1734, %v1730
      %v1891 = vpack.c.b16 %v1735, %v1731
      %v1892 = vpack.c.b16 %v1736, %v1732
      %v1893 = vpack.c.b16 %v1741, %v1737
      %v1894 = vpack.c.b16 %v1742, %v1738
      %v1895 = vpack.c.b16 %v1743, %v1739
      %v1896 = vpack.c.b16 %v1744, %v1740
      %v1897 = vpack.c.b16 %v1749, %v1745
      %v1898 = vpack.c.b16 %v1750, %v1746
      %v1899 = vpack.c.b16 %v1751, %v1747
      %v1900 = vpack.c.b16 %v1752, %v1748
      %v1901 = vpack.c.b16 %v1757, %v1753
      %v1902 = vpack.c.b16 %v1758, %v1754
      %v1903 = vpack.c.b16 %v1759, %v1755
      %v1904 = vpack.c.b16 %v1760, %v1756
      %v1905 = vpack.c.b16 %v1765, %v1761
      %v1906 = vpack.c.b16 %v1766, %v1762
      %v1907 = vpack.c.b16 %v1767, %v1763
      %v1908 = vpack.c.b16 %v1768, %v1764
      %v1909 = vpack.c.b16 %v1773, %v1769
      %v1910 = vpack.c.b16 %v1774, %v1770
      %v1911 = vpack.c.b16 %v1775, %v1771
      %v1912 = vpack.c.b16 %v1776, %v1772
      %v1913 = vpack.c.b16 %v1781, %v1777
      %v1914 = vpack.c.b16 %v1782, %v1778
      %v1915 = vpack.c.b16 %v1783, %v1779
      %v1916 = vpack.c.b16 %v1784, %v1780
      %v1917 = vpack.c.b16 %v1789, %v1785
      %v1918 = vpack.c.b16 %v1790, %v1786
      %v1919 = vpack.c.b16 %v1791, %v1787
      %v1920 = vpack.c.b16 %v1792, %v1788
      %2049 = vmatpush.bf16.msra.mxu0 %v1821
      %2050 = vmatpush.bf16.msra.mxu0 %v1817
      %2051 = vmatpush.bf16.msra.mxu0 %v1813
      %2052 = vmatpush.bf16.msra.mxu0 %v1809
      %2053 = vmatpush.bf16.msra.mxu0 %v1805
      %2054 = vmatpush.bf16.msra.mxu0 %v1801
      %2055 = vmatpush.bf16.msra.mxu0 %v1797
      %2056 = vmatpush.bf16.msra.mxu0 %v1793
      %2057 = vmatmul.bf16.gmra.mxu0 %v1277
      %v2058 = vpop.f32.mrf.mxu0
      %v2059 = vadd.f32 0.0, %v2058
      %v2060 = vpop.f32.mrf.mxu0
      %v2061 = vadd.f32 0.0, %v2060
      %2062 = vdwg.mxu0
      %2063 = vmatpush.bf16.msra.mxu0 %v1853
      %2064 = vmatpush.bf16.msra.mxu0 %v1849
      %2065 = vmatpush.bf16.msra.mxu0 %v1845
      %2066 = vmatpush.bf16.msra.mxu0 %v1841
      %2067 = vmatpush.bf16.msra.mxu0 %v1837
      %2068 = vmatpush.bf16.msra.mxu0 %v1833
      %2069 = vmatpush.bf16.msra.mxu0 %v1829
      %2070 = vmatpush.bf16.msra.mxu0 %v1825
      %2071 = vmatmul.bf16.gmra.mxu0 %v1278
      %v2072 = vpop.f32.mrf.mxu0
      %v2073 = vadd.f32 %v2059, %v2072
      %v2074 = vpop.f32.mrf.mxu0
      %v2075 = vadd.f32 %v2061, %v2074
      %2076 = vdwg.mxu0
      %2077 = vmatpush.bf16.msra.mxu0 %v1885
      %2078 = vmatpush.bf16.msra.mxu0 %v1881
      %2079 = vmatpush.bf16.msra.mxu0 %v1877
      %2080 = vmatpush.bf16.msra.mxu0 %v1873
      %2081 = vmatpush.bf16.msra.mxu0 %v1869
      %2082 = vmatpush.bf16.msra.mxu0 %v1865
      %2083 = vmatpush.bf16.msra.mxu0 %v1861
      %2084 = vmatpush.bf16.msra.mxu0 %v1857
      %2085 = vmatmul.bf16.gmra.mxu0 %v1279
      %v2086 = vpop.f32.mrf.mxu0
      %v2087 = vadd.f32 %v2073, %v2086
      %v2088 = vpop.f32.mrf.mxu0
      %v2089 = vadd.f32 %v2075, %v2088
      %2090 = vdwg.mxu0
      %2091 = vmatpush.bf16.msra.mxu0 %v1917
      %2092 = vmatpush.bf16.msra.mxu0 %v1913
      %2093 = vmatpush.bf16.msra.mxu0 %v1909
      %2094 = vmatpush.bf16.msra.mxu0 %v1905
      %2095 = vmatpush.bf16.msra.mxu0 %v1901
      %2096 = vmatpush.bf16.msra.mxu0 %v1897
      %2097 = vmatpush.bf16.msra.mxu0 %v1893
      %2098 = vmatpush.bf16.msra.mxu0 %v1889
      %2099 = vmatmul.bf16.gmra.mxu0 %v1280
      %v2100 = vpop.f32.mrf.mxu0
      %v2101 = vadd.f32 %v2087, %v2100
      %v2102 = vpop.f32.mrf.mxu0
      %v2103 = vadd.f32 %v2089, %v2102
      %2104 = vdwg.mxu0
      %2105 = vmatpush.bf16.msra.mxu0 %v1822
      %2106 = vmatpush.bf16.msra.mxu0 %v1818
      %2107 = vmatpush.bf16.msra.mxu0 %v1814
      %2108 = vmatpush.bf16.msra.mxu0 %v1810
      %2109 = vmatpush.bf16.msra.mxu0 %v1806
      %2110 = vmatpush.bf16.msra.mxu0 %v1802
      %2111 = vmatpush.bf16.msra.mxu0 %v1798
      %2112 = vmatpush.bf16.msra.mxu0 %v1794
      %2113 = vmatmul.bf16.gmra.mxu0 %v1277
      %v2114 = vpop.f32.mrf.mxu0
      %v2115 = vadd.f32 0.0, %v2114
      %v2116 = vpop.f32.mrf.mxu0
      %v2117 = vadd.f32 0.0, %v2116
      %2118 = vdwg.mxu0
      %2119 = vmatpush.bf16.msra.mxu0 %v1854
      %2120 = vmatpush.bf16.msra.mxu0 %v1850
      %2121 = vmatpush.bf16.msra.mxu0 %v1846
      %2122 = vmatpush.bf16.msra.mxu0 %v1842
      %2123 = vmatpush.bf16.msra.mxu0 %v1838
      %2124 = vmatpush.bf16.msra.mxu0 %v1834
      %2125 = vmatpush.bf16.msra.mxu0 %v1830
      %2126 = vmatpush.bf16.msra.mxu0 %v1826
      %2127 = vmatmul.bf16.gmra.mxu0 %v1278
      %v2128 = vpop.f32.mrf.mxu0
      %v2129 = vadd.f32 %v2115, %v2128
      %v2130 = vpop.f32.mrf.mxu0
      %v2131 = vadd.f32 %v2117, %v2130
      %2132 = vdwg.mxu0
      %2133 = vmatpush.bf16.msra.mxu0 %v1886
      %2134 = vmatpush.bf16.msra.mxu0 %v1882
      %2135 = vmatpush.bf16.msra.mxu0 %v1878
      %2136 = vmatpush.bf16.msra.mxu0 %v1874
      %2137 = vmatpush.bf16.msra.mxu0 %v1870
      %2138 = vmatpush.bf16.msra.mxu0 %v1866
      %2139 = vmatpush.bf16.msra.mxu0 %v1862
      %2140 = vmatpush.bf16.msra.mxu0 %v1858
      %2141 = vmatmul.bf16.gmra.mxu0 %v1279
      %v2142 = vpop.f32.mrf.mxu0
      %v2143 = vadd.f32 %v2129, %v2142
      %v2144 = vpop.f32.mrf.mxu0
      %v2145 = vadd.f32 %v2131, %v2144
      %2146 = vdwg.mxu0
      %2147 = vmatpush.bf16.msra.mxu0 %v1918
      %2148 = vmatpush.bf16.msra.mxu0 %v1914
      %2149 = vmatpush.bf16.msra.mxu0 %v1910
      %2150 = vmatpush.bf16.msra.mxu0 %v1906
      %2151 = vmatpush.bf16.msra.mxu0 %v1902
      %2152 = vmatpush.bf16.msra.mxu0 %v1898
      %2153 = vmatpush.bf16.msra.mxu0 %v1894
      %2154 = vmatpush.bf16.msra.mxu0 %v1890
      %2155 = vmatmul.bf16.gmra.mxu0 %v1280
      %v2156 = vpop.f32.mrf.mxu0
      %v2157 = vadd.f32 %v2143, %v2156
      %v2158 = vpop.f32.mrf.mxu0
      %v2159 = vadd.f32 %v2145, %v2158
      %2160 = vdwg.mxu0
      %2161 = vmatpush.bf16.msra.mxu0 %v1823
      %2162 = vmatpush.bf16.msra.mxu0 %v1819
      %2163 = vmatpush.bf16.msra.mxu0 %v1815
      %2164 = vmatpush.bf16.msra.mxu0 %v1811
      %2165 = vmatpush.bf16.msra.mxu0 %v1807
      %2166 = vmatpush.bf16.msra.mxu0 %v1803
      %2167 = vmatpush.bf16.msra.mxu0 %v1799
      %2168 = vmatpush.bf16.msra.mxu0 %v1795
      %2169 = vmatmul.bf16.gmra.mxu0 %v1277
      %v2170 = vpop.f32.mrf.mxu0
      %v2171 = vadd.f32 0.0, %v2170
      %v2172 = vpop.f32.mrf.mxu0
      %v2173 = vadd.f32 0.0, %v2172
      %2174 = vdwg.mxu0
      %2175 = vmatpush.bf16.msra.mxu0 %v1855
      %2176 = vmatpush.bf16.msra.mxu0 %v1851
      %2177 = vmatpush.bf16.msra.mxu0 %v1847
      %2178 = vmatpush.bf16.msra.mxu0 %v1843
      %2179 = vmatpush.bf16.msra.mxu0 %v1839
      %2180 = vmatpush.bf16.msra.mxu0 %v1835
      %2181 = vmatpush.bf16.msra.mxu0 %v1831
      %2182 = vmatpush.bf16.msra.mxu0 %v1827
      %2183 = vmatmul.bf16.gmra.mxu0 %v1278
      %v2184 = vpop.f32.mrf.mxu0
      %v2185 = vadd.f32 %v2171, %v2184
      %v2186 = vpop.f32.mrf.mxu0
      %v2187 = vadd.f32 %v2173, %v2186
      %2188 = vdwg.mxu0
      %2189 = vmatpush.bf16.msra.mxu0 %v1887
      %2190 = vmatpush.bf16.msra.mxu0 %v1883
      %2191 = vmatpush.bf16.msra.mxu0 %v1879
      %2192 = vmatpush.bf16.msra.mxu0 %v1875
      %2193 = vmatpush.bf16.msra.mxu0 %v1871
      %2194 = vmatpush.bf16.msra.mxu0 %v1867
      %2195 = vmatpush.bf16.msra.mxu0 %v1863
      %2196 = vmatpush.bf16.msra.mxu0 %v1859
      %2197 = vmatmul.bf16.gmra.mxu0 %v1279
      %v2198 = vpop.f32.mrf.mxu0
      %v2199 = vadd.f32 %v2185, %v2198
      %v2200 = vpop.f32.mrf.mxu0
      %v2201 = vadd.f32 %v2187, %v2200
      %2202 = vdwg.mxu0
      %2203 = vmatpush.bf16.msra.mxu0 %v1919
      %2204 = vmatpush.bf16.msra.mxu0 %v1915
      %2205 = vmatpush.bf16.msra.mxu0 %v1911
      %2206 = vmatpush.bf16.msra.mxu0 %v1907
      %2207 = vmatpush.bf16.msra.mxu0 %v1903
      %2208 = vmatpush.bf16.msra.mxu0 %v1899
      %2209 = vmatpush.bf16.msra.mxu0 %v1895
      %2210 = vmatpush.bf16.msra.mxu0 %v1891
      %2211 = vmatmul.bf16.gmra.mxu0 %v1280
      %v2212 = vpop.f32.mrf.mxu0
      %v2213 = vadd.f32 %v2199, %v2212
      %v2214 = vpop.f32.mrf.mxu0
      %v2215 = vadd.f32 %v2201, %v2214
      %2216 = vdwg.mxu0
      %2217 = vmatpush.bf16.msra.mxu0 %v1824
      %2218 = vmatpush.bf16.msra.mxu0 %v1820
      %2219 = vmatpush.bf16.msra.mxu0 %v1816
      %2220 = vmatpush.bf16.msra.mxu0 %v1812
      %2221 = vmatpush.bf16.msra.mxu0 %v1808
      %2222 = vmatpush.bf16.msra.mxu0 %v1804
      %2223 = vmatpush.bf16.msra.mxu0 %v1800
      %2224 = vmatpush.bf16.msra.mxu0 %v1796
      %2225 = vmatmul.bf16.gmra.mxu0 %v1277
      %v2226 = vpop.f32.mrf.mxu0
      %v2227 = vadd.f32 0.0, %v2226
      %v2228 = vpop.f32.mrf.mxu0
      %v2229 = vadd.f32 0.0, %v2228
      %2230 = vdwg.mxu0
      %2231 = vmatpush.bf16.msra.mxu0 %v1856
      %2232 = vmatpush.bf16.msra.mxu0 %v1852
      %2233 = vmatpush.bf16.msra.mxu0 %v1848
      %2234 = vmatpush.bf16.msra.mxu0 %v1844
      %2235 = vmatpush.bf16.msra.mxu0 %v1840
      %2236 = vmatpush.bf16.msra.mxu0 %v1836
      %2237 = vmatpush.bf16.msra.mxu0 %v1832
      %2238 = vmatpush.bf16.msra.mxu0 %v1828
      %2239 = vmatmul.bf16.gmra.mxu0 %v1278
      %v2240 = vpop.f32.mrf.mxu0
      %v2241 = vadd.f32 %v2227, %v2240
      %v2242 = vpop.f32.mrf.mxu0
      %v2243 = vadd.f32 %v2229, %v2242
      %2244 = vdwg.mxu0
      %2245 = vmatpush.bf16.msra.mxu0 %v1888
      %2246 = vmatpush.bf16.msra.mxu0 %v1884
      %2247 = vmatpush.bf16.msra.mxu0 %v1880
      %2248 = vmatpush.bf16.msra.mxu0 %v1876
      %2249 = vmatpush.bf16.msra.mxu0 %v1872
      %2250 = vmatpush.bf16.msra.mxu0 %v1868
      %2251 = vmatpush.bf16.msra.mxu0 %v1864
      %2252 = vmatpush.bf16.msra.mxu0 %v1860
      %2253 = vmatmul.bf16.gmra.mxu0 %v1279
      %v2254 = vpop.f32.mrf.mxu0
      %v2255 = vadd.f32 %v2241, %v2254
      %v2256 = vpop.f32.mrf.mxu0
      %v2257 = vadd.f32 %v2243, %v2256
      %2258 = vdwg.mxu0
      %2259 = vmatpush.bf16.msra.mxu0 %v1920
      %2260 = vmatpush.bf16.msra.mxu0 %v1916
      %2261 = vmatpush.bf16.msra.mxu0 %v1912
      %2262 = vmatpush.bf16.msra.mxu0 %v1908
      %2263 = vmatpush.bf16.msra.mxu0 %v1904
      %2264 = vmatpush.bf16.msra.mxu0 %v1900
      %2265 = vmatpush.bf16.msra.mxu0 %v1896
      %2266 = vmatpush.bf16.msra.mxu0 %v1892
      %2267 = vmatmul.bf16.gmra.mxu0 %v1280
      %v2268 = vpop.f32.mrf.mxu0
      %v2269 = vadd.f32 %v2255, %v2268
      %v2270 = vpop.f32.mrf.mxu0
      %v2271 = vadd.f32 %v2257, %v2270
      %2272 = vdwg.mxu0
      %v2273 = vld [vmem:[%s3] sm:$0xf]
      %v2275 = vperm.slane %v2273, 0
      %v2276 = vperm.slane %v2273, 1
      %v2277 = vperm.slane %v2273, 2
      %v2278 = vperm.slane %v2273, 3
      %v2283 = vmul.f32 %v2101, %v2275
      %v2284 = vmul.f32 %v2157, %v2276
      %v2285 = vmul.f32 %v2213, %v2277
      %v2286 = vmul.f32 %v2269, %v2278
      %v2287 = vmul.f32 %v2103, %v2275
      %v2288 = vmul.f32 %v2159, %v2276
      %v2289 = vmul.f32 %v2215, %v2277
      %v2290 = vmul.f32 %v2271, %v2278
      %v2291 = vld [vmem:[%s4] sm:$0xf]
      %v2293 = vperm.slane %v2291, 0
      %v2294 = vperm.slane %v2291, 1
      %v2295 = vperm.slane %v2291, 2
      %v2296 = vperm.slane %v2291, 3
      %v2301 = vadd.f32 %v2283, %v2293
      %v2302 = vadd.f32 %v2284, %v2294
      %v2303 = vadd.f32 %v2285, %v2295
      %v2304 = vadd.f32 %v2286, %v2296
      %v2305 = vadd.f32 %v2287, %v2293
      %v2306 = vadd.f32 %v2288, %v2294
      %v2307 = vadd.f32 %v2289, %v2295
      %v2308 = vadd.f32 %v2290, %v2296
      %v2309 = vmax.f32 %v2301, 0.0
      %v2310 = vmax.f32 %v2302, 0.0
      %v2311 = vmax.f32 %v2303, 0.0
      %v2312 = vmax.f32 %v2304, 0.0
      %v2313 = vmax.f32 %v2305, 0.0
      %v2314 = vmax.f32 %v2306, 0.0
      %v2315 = vmax.f32 %v2307, 0.0
      %v2316 = vmax.f32 %v2308, 0.0
      %v2325 = vrot.slane %v2309, 7
      %v2326 = vrot.slane %v2310, 7
      %v2327 = vrot.slane %v2311, 7
      %v2328 = vrot.slane %v2312, 7
      %v2329 = vrot.slane %v2313, 7
      %v2330 = vsel %vm357, %v2325, %v2329
      %v2331 = vrot.slane %v2314, 7
      %v2332 = vsel %vm357, %v2326, %v2331
      %v2333 = vrot.slane %v2315, 7
      %v2334 = vsel %vm357, %v2327, %v2333
      %v2335 = vrot.slane %v2316, 7
      %v2336 = vsel %vm357, %v2328, %v2335
      %v2345 = vsel %vm357, 0.0, %v2325
      %v2346 = vsel %vm357, 0.0, %v2326
      %v2347 = vsel %vm357, 0.0, %v2327
      %v2348 = vsel %vm357, 0.0, %v2328
      %v2349 = vsel %vm357, %v2329, 0.0
      %v2350 = vsel %vm357, %v2331, 0.0
      %v2351 = vsel %vm357, %v2333, 0.0
      %v2352 = vsel %vm357, %v2335, 0.0
      %2361 = vrot.lane.b32.xlu0 %v2345, 32
      %v2362 = vpop.permute.xlu0 %2361
      %2363 = vrot.lane.b32.xlu0 %v2346, 32
      %v2364 = vpop.permute.xlu0 %2363
      %2365 = vrot.lane.b32.xlu0 %v2347, 32
      %v2366 = vpop.permute.xlu0 %2365
      %2367 = vrot.lane.b32.xlu0 %v2348, 32
      %v2368 = vpop.permute.xlu0 %2367
      %2369 = vrot.lane.b32.xlu0 %v2330, 32
      %v2370 = vpop.permute.xlu0 %2369
      %2371 = vrot.lane.b32.xlu0 %v2332, 32
      %v2372 = vpop.permute.xlu0 %2371
      %2373 = vrot.lane.b32.xlu0 %v2334, 32
      %v2374 = vpop.permute.xlu0 %2373
      %2375 = vrot.lane.b32.xlu0 %v2336, 32
      %v2376 = vpop.permute.xlu0 %2375
      %2377 = vrot.lane.b32.xlu0 %v2349, 32
      %v2378 = vpop.permute.xlu0 %2377
      %2379 = vrot.lane.b32.xlu0 %v2350, 32
      %v2380 = vpop.permute.xlu0 %2379
      %2381 = vrot.lane.b32.xlu0 %v2351, 32
      %v2382 = vpop.permute.xlu0 %2381
      %2383 = vrot.lane.b32.xlu0 %v2352, 32
      %v2384 = vpop.permute.xlu0 %2383
      %v2385 = vsel %vm418, %v2362, %v2364
      %v2386 = vsel %vm418, %v2364, %v2366
      %v2387 = vsel %vm418, %v2366, %v2368
      %v2388 = vsel %vm418, %v2370, %v2372
      %v2389 = vsel %vm418, %v2372, %v2374
      %v2390 = vsel %vm418, %v2374, %v2376
      %v2391 = vsel %vm418, %v2378, %v2380
      %v2392 = vsel %vm418, %v2380, %v2382
      %v2393 = vsel %vm418, %v2382, %v2384
      %v2409 = vsel %vm418, 0.0, %v2362
      %v2410 = vsel %vm418, 0.0, %v2370
      %v2411 = vsel %vm418, 0.0, %v2378
      %v2412 = vsel %vm418, %v2368, 0.0
      %v2413 = vsel %vm418, %v2376, 0.0
      %v2414 = vsel %vm418, %v2384, 0.0
      %v2415 = vld [vmem:[%s5] sm:$0xff]
      %v2416 = vld [vmem:[%s5 + $0x8] sm:$0xff]
      %v2417 = vld [vmem:[%s5 + $0x10] sm:$0xff]
      %v2418 = vld [vmem:[%s5 + $0x18] sm:$0xff]
      %v2419 = vld [vmem:[%s5 + $0x20] sm:$0x1]
      %v2420 = vld [vmem:[%s5 + $0x28] sm:$0x1]
      %v2421 = vld [vmem:[%s5 + $0x30] sm:$0x1]
      %v2422 = vld [vmem:[%s5 + $0x38] sm:$0x1]
      %v2423 = vperm.slane %v2415, 0
      %v2424 = vperm.slane %v2416, 0
      %v2425 = vperm.slane %v2417, 0
      %v2426 = vperm.slane %v2418, 0
      %v2427 = vmul.f32 %v2409, %v2423
      %v2428 = vmul.f32 %v2385, %v2424
      %v2429 = vmul.f32 %v2386, %v2425
      %v2430 = vmul.f32 %v2387, %v2426
      %v2431 = vmul.f32 %v2410, %v2423
      %v2432 = vmul.f32 %v2388, %v2424
      %v2433 = vmul.f32 %v2389, %v2425
      %v2434 = vmul.f32 %v2390, %v2426
      %v2435 = vadd.f32 %v2427, 0.0
      %v2436 = vadd.f32 %v2428, 0.0
      %v2437 = vadd.f32 %v2429, 0.0
      %v2438 = vadd.f32 %v2430, 0.0
      %v2439 = vadd.f32 %v2431, 0.0
      %v2440 = vadd.f32 %v2432, 0.0
      %v2441 = vadd.f32 %v2433, 0.0
      %v2442 = vadd.f32 %v2434, 0.0
      %v2443 = vperm.slane %v2415, 3
      %v2444 = vperm.slane %v2416, 3
      %v2445 = vperm.slane %v2417, 3
      %v2446 = vperm.slane %v2418, 3
      %v2447 = vmul.f32 %v2409, %v2443
      %v2448 = vmul.f32 %v2385, %v2444
      %v2449 = vmul.f32 %v2386, %v2445
      %v2450 = vmul.f32 %v2387, %v2446
      %v2451 = vmul.f32 %v2410, %v2443
      %v2452 = vmul.f32 %v2388, %v2444
      %v2453 = vmul.f32 %v2389, %v2445
      %v2454 = vmul.f32 %v2390, %v2446
      %v2455 = vmul.f32 %v2411, %v2443
      %v2456 = vmul.f32 %v2391, %v2444
      %v2457 = vmul.f32 %v2392, %v2445
      %v2458 = vmul.f32 %v2393, %v2446
      %v2471 = vrot.slane %v2447, 1
      %v2472 = vrot.slane %v2451, 1
      %v2473 = vsel %vm505, %v2471, %v2472
      %v2474 = vrot.slane %v2448, 1
      %v2475 = vrot.slane %v2452, 1
      %v2476 = vsel %vm505, %v2474, %v2475
      %v2477 = vrot.slane %v2449, 1
      %v2478 = vrot.slane %v2453, 1
      %v2479 = vsel %vm505, %v2477, %v2478
      %v2480 = vrot.slane %v2450, 1
      %v2481 = vrot.slane %v2454, 1
      %v2482 = vsel %vm505, %v2480, %v2481
      %v2483 = vrot.slane %v2455, 1
      %v2484 = vsel %vm505, %v2472, %v2483
      %v2485 = vrot.slane %v2456, 1
      %v2486 = vsel %vm505, %v2475, %v2485
      %v2487 = vrot.slane %v2457, 1
      %v2488 = vsel %vm505, %v2478, %v2487
      %v2489 = vrot.slane %v2458, 1
      %v2490 = vsel %vm505, %v2481, %v2489
      %v2499 = vadd.f32 %v2435, %v2473
      %v2500 = vadd.f32 %v2436, %v2476
      %v2501 = vadd.f32 %v2437, %v2479
      %v2502 = vadd.f32 %v2438, %v2482
      %v2503 = vadd.f32 %v2439, %v2484
      %v2504 = vadd.f32 %v2440, %v2486
      %v2505 = vadd.f32 %v2441, %v2488
      %v2506 = vadd.f32 %v2442, %v2490
      %v2507 = vperm.slane %v2415, 6
      %v2508 = vperm.slane %v2416, 6
      %v2509 = vperm.slane %v2417, 6
      %v2510 = vperm.slane %v2418, 6
      %v2511 = vmul.f32 %v2409, %v2507
      %v2512 = vmul.f32 %v2385, %v2508
      %v2513 = vmul.f32 %v2386, %v2509
      %v2514 = vmul.f32 %v2387, %v2510
      %v2515 = vmul.f32 %v2410, %v2507
      %v2516 = vmul.f32 %v2388, %v2508
      %v2517 = vmul.f32 %v2389, %v2509
      %v2518 = vmul.f32 %v2390, %v2510
      %v2519 = vmul.f32 %v2411, %v2507
      %v2520 = vmul.f32 %v2391, %v2508
      %v2521 = vmul.f32 %v2392, %v2509
      %v2522 = vmul.f32 %v2393, %v2510
      %v2535 = vrot.slane %v2511, 2
      %v2536 = vrot.slane %v2515, 2
      %v2537 = vsel %vm570, %v2535, %v2536
      %v2538 = vrot.slane %v2512, 2
      %v2539 = vrot.slane %v2516, 2
      %v2540 = vsel %vm570, %v2538, %v2539
      %v2541 = vrot.slane %v2513, 2
      %v2542 = vrot.slane %v2517, 2
      %v2543 = vsel %vm570, %v2541, %v2542
      %v2544 = vrot.slane %v2514, 2
      %v2545 = vrot.slane %v2518, 2
      %v2546 = vsel %vm570, %v2544, %v2545
      %v2547 = vrot.slane %v2519, 2
      %v2548 = vsel %vm570, %v2536, %v2547
      %v2549 = vrot.slane %v2520, 2
      %v2550 = vsel %vm570, %v2539, %v2549
      %v2551 = vrot.slane %v2521, 2
      %v2552 = vsel %vm570, %v2542, %v2551
      %v2553 = vrot.slane %v2522, 2
      %v2554 = vsel %vm570, %v2545, %v2553
      %v2563 = vadd.f32 %v2499, %v2537
      %v2564 = vadd.f32 %v2500, %v2540
      %v2565 = vadd.f32 %v2501, %v2543
      %v2566 = vadd.f32 %v2502, %v2546
      %v2567 = vadd.f32 %v2503, %v2548
      %v2568 = vadd.f32 %v2504, %v2550
      %v2569 = vadd.f32 %v2505, %v2552
      %v2570 = vadd.f32 %v2506, %v2554
      %v2571 = vperm.slane %v2415, 1
      %v2572 = vperm.slane %v2416, 1
      %v2573 = vperm.slane %v2417, 1
      %v2574 = vperm.slane %v2418, 1
      %2579 = vrot.lane.b32.xlu0 %v2571, 32
      %v2580 = vpop.permute.xlu0 %2579
      %2581 = vrot.lane.b32.xlu0 %v2572, 32
      %v2582 = vpop.permute.xlu0 %2581
      %2583 = vrot.lane.b32.xlu0 %v2573, 32
      %v2584 = vpop.permute.xlu0 %2583
      %2585 = vrot.lane.b32.xlu0 %v2574, 32
      %v2586 = vpop.permute.xlu0 %2585
      %v2587 = vsel %vm418, %v2580, %v2582
      %v2588 = vsel %vm418, %v2582, %v2584
      %v2589 = vsel %vm418, %v2584, %v2586
      %v2595 = vmul.f32 %v2409, %v2580
      %v2596 = vmul.f32 %v2385, %v2587
      %v2597 = vmul.f32 %v2386, %v2588
      %v2598 = vmul.f32 %v2387, %v2589
      %v2599 = vmul.f32 %v2412, %v2586
      %v2600 = vmul.f32 %v2410, %v2580
      %v2601 = vmul.f32 %v2388, %v2587
      %v2602 = vmul.f32 %v2389, %v2588
      %v2603 = vmul.f32 %v2390, %v2589
      %v2604 = vmul.f32 %v2413, %v2586
      %2615 = vrot.lane.b32.xlu0 %v2595, 96
      %v2616 = vpop.permute.xlu0 %2615
      %2617 = vrot.lane.b32.xlu0 %v2596, 96
      %v2618 = vpop.permute.xlu0 %2617
      %2619 = vrot.lane.b32.xlu0 %v2597, 96
      %v2620 = vpop.permute.xlu0 %2619
      %2621 = vrot.lane.b32.xlu0 %v2598, 96
      %v2622 = vpop.permute.xlu0 %2621
      %2623 = vrot.lane.b32.xlu0 %v2599, 96
      %v2624 = vpop.permute.xlu0 %2623
      %2625 = vrot.lane.b32.xlu0 %v2600, 96
      %v2626 = vpop.permute.xlu0 %2625
      %2627 = vrot.lane.b32.xlu0 %v2601, 96
      %v2628 = vpop.permute.xlu0 %2627
      %2629 = vrot.lane.b32.xlu0 %v2602, 96
      %v2630 = vpop.permute.xlu0 %2629
      %2631 = vrot.lane.b32.xlu0 %v2603, 96
      %v2632 = vpop.permute.xlu0 %2631
      %2633 = vrot.lane.b32.xlu0 %v2604, 96
      %v2634 = vpop.permute.xlu0 %2633
      %v2635 = vsel %vm671, %v2616, %v2618
      %v2636 = vsel %vm671, %v2618, %v2620
      %v2637 = vsel %vm671, %v2620, %v2622
      %v2638 = vsel %vm671, %v2622, %v2624
      %v2639 = vsel %vm671, %v2626, %v2628
      %v2640 = vsel %vm671, %v2628, %v2630
      %v2641 = vsel %vm671, %v2630, %v2632
      %v2642 = vsel %vm671, %v2632, %v2634
      %v2651 = vadd.f32 %v2563, %v2635
      %v2652 = vadd.f32 %v2564, %v2636
      %v2653 = vadd.f32 %v2565, %v2637
      %v2654 = vadd.f32 %v2566, %v2638
      %v2655 = vadd.f32 %v2567, %v2639
      %v2656 = vadd.f32 %v2568, %v2640
      %v2657 = vadd.f32 %v2569, %v2641
      %v2658 = vadd.f32 %v2570, %v2642
      %v2659 = vperm.slane %v2415, 4
      %v2660 = vperm.slane %v2416, 4
      %v2661 = vperm.slane %v2417, 4
      %v2662 = vperm.slane %v2418, 4
      %2667 = vrot.lane.b32.xlu0 %v2659, 32
      %v2668 = vpop.permute.xlu0 %2667
      %2669 = vrot.lane.b32.xlu0 %v2660, 32
      %v2670 = vpop.permute.xlu0 %2669
      %2671 = vrot.lane.b32.xlu0 %v2661, 32
      %v2672 = vpop.permute.xlu0 %2671
      %2673 = vrot.lane.b32.xlu0 %v2662, 32
      %v2674 = vpop.permute.xlu0 %2673
      %v2675 = vsel %vm418, %v2668, %v2670
      %v2676 = vsel %vm418, %v2670, %v2672
      %v2677 = vsel %vm418, %v2672, %v2674
      %v2683 = vmul.f32 %v2409, %v2668
      %v2684 = vmul.f32 %v2385, %v2675
      %v2685 = vmul.f32 %v2386, %v2676
      %v2686 = vmul.f32 %v2387, %v2677
      %v2687 = vmul.f32 %v2412, %v2674
      %v2688 = vmul.f32 %v2410, %v2668
      %v2689 = vmul.f32 %v2388, %v2675
      %v2690 = vmul.f32 %v2389, %v2676
      %v2691 = vmul.f32 %v2390, %v2677
      %v2692 = vmul.f32 %v2413, %v2674
      %v2693 = vmul.f32 %v2411, %v2668
      %v2694 = vmul.f32 %v2391, %v2675
      %v2695 = vmul.f32 %v2392, %v2676
      %v2696 = vmul.f32 %v2393, %v2677
      %v2697 = vmul.f32 %v2414, %v2674
      %v2713 = vrot.slane %v2683, 1
      %v2714 = vrot.slane %v2688, 1
      %v2715 = vsel %vm505, %v2713, %v2714
      %v2716 = vrot.slane %v2684, 1
      %v2717 = vrot.slane %v2689, 1
      %v2718 = vsel %vm505, %v2716, %v2717
      %v2719 = vrot.slane %v2685, 1
      %v2720 = vrot.slane %v2690, 1
      %v2721 = vsel %vm505, %v2719, %v2720
      %v2722 = vrot.slane %v2686, 1
      %v2723 = vrot.slane %v2691, 1
      %v2724 = vsel %vm505, %v2722, %v2723
      %v2725 = vrot.slane %v2687, 1
      %v2726 = vrot.slane %v2692, 1
      %v2727 = vsel %vm505, %v2725, %v2726
      %v2728 = vrot.slane %v2693, 1
      %v2729 = vsel %vm505, %v2714, %v2728
      %v2730 = vrot.slane %v2694, 1
      %v2731 = vsel %vm505, %v2717, %v2730
      %v2732 = vrot.slane %v2695, 1
      %v2733 = vsel %vm505, %v2720, %v2732
      %v2734 = vrot.slane %v2696, 1
      %v2735 = vsel %vm505, %v2723, %v2734
      %v2736 = vrot.slane %v2697, 1
      %v2737 = vsel %vm505, %v2726, %v2736
      %2738 = vrot.lane.b32.xlu0 %v2715, 96
      %v2739 = vpop.permute.xlu0 %2738
      %2740 = vrot.lane.b32.xlu0 %v2718, 96
      %v2741 = vpop.permute.xlu0 %2740
      %2742 = vrot.lane.b32.xlu0 %v2721, 96
      %v2743 = vpop.permute.xlu0 %2742
      %2744 = vrot.lane.b32.xlu0 %v2724, 96
      %v2745 = vpop.permute.xlu0 %2744
      %2746 = vrot.lane.b32.xlu0 %v2727, 96
      %v2747 = vpop.permute.xlu0 %2746
      %2748 = vrot.lane.b32.xlu0 %v2729, 96
      %v2749 = vpop.permute.xlu0 %2748
      %2750 = vrot.lane.b32.xlu0 %v2731, 96
      %v2751 = vpop.permute.xlu0 %2750
      %2752 = vrot.lane.b32.xlu0 %v2733, 96
      %v2753 = vpop.permute.xlu0 %2752
      %2754 = vrot.lane.b32.xlu0 %v2735, 96
      %v2755 = vpop.permute.xlu0 %2754
      %2756 = vrot.lane.b32.xlu0 %v2737, 96
      %v2757 = vpop.permute.xlu0 %2756
      %v2758 = vsel %vm671, %v2739, %v2741
      %v2759 = vsel %vm671, %v2741, %v2743
      %v2760 = vsel %vm671, %v2743, %v2745
      %v2761 = vsel %vm671, %v2745, %v2747
      %v2762 = vsel %vm671, %v2749, %v2751
      %v2763 = vsel %vm671, %v2751, %v2753
      %v2764 = vsel %vm671, %v2753, %v2755
      %v2765 = vsel %vm671, %v2755, %v2757
      %v2774 = vadd.f32 %v2651, %v2758
      %v2775 = vadd.f32 %v2652, %v2759
      %v2776 = vadd.f32 %v2653, %v2760
      %v2777 = vadd.f32 %v2654, %v2761
      %v2778 = vadd.f32 %v2655, %v2762
      %v2779 = vadd.f32 %v2656, %v2763
      %v2780 = vadd.f32 %v2657, %v2764
      %v2781 = vadd.f32 %v2658, %v2765
      %v2782 = vperm.slane %v2415, 7
      %v2783 = vperm.slane %v2416, 7
      %v2784 = vperm.slane %v2417, 7
      %v2785 = vperm.slane %v2418, 7
      %2790 = vrot.lane.b32.xlu0 %v2782, 32
      %v2791 = vpop.permute.xlu0 %2790
      %2792 = vrot.lane.b32.xlu0 %v2783, 32
      %v2793 = vpop.permute.xlu0 %2792
      %2794 = vrot.lane.b32.xlu0 %v2784, 32
      %v2795 = vpop.permute.xlu0 %2794
      %2796 = vrot.lane.b32.xlu0 %v2785, 32
      %v2797 = vpop.permute.xlu0 %2796
      %v2798 = vsel %vm418, %v2791, %v2793
      %v2799 = vsel %vm418, %v2793, %v2795
      %v2800 = vsel %vm418, %v2795, %v2797
      %v2806 = vmul.f32 %v2409, %v2791
      %v2807 = vmul.f32 %v2385, %v2798
      %v2808 = vmul.f32 %v2386, %v2799
      %v2809 = vmul.f32 %v2387, %v2800
      %v2810 = vmul.f32 %v2412, %v2797
      %v2811 = vmul.f32 %v2410, %v2791
      %v2812 = vmul.f32 %v2388, %v2798
      %v2813 = vmul.f32 %v2389, %v2799
      %v2814 = vmul.f32 %v2390, %v2800
      %v2815 = vmul.f32 %v2413, %v2797
      %v2816 = vmul.f32 %v2411, %v2791
      %v2817 = vmul.f32 %v2391, %v2798
      %v2818 = vmul.f32 %v2392, %v2799
      %v2819 = vmul.f32 %v2393, %v2800
      %v2820 = vmul.f32 %v2414, %v2797
      %v2836 = vrot.slane %v2806, 2
      %v2837 = vrot.slane %v2811, 2
      %v2838 = vsel %vm570, %v2836, %v2837
      %v2839 = vrot.slane %v2807, 2
      %v2840 = vrot.slane %v2812, 2
      %v2841 = vsel %vm570, %v2839, %v2840
      %v2842 = vrot.slane %v2808, 2
      %v2843 = vrot.slane %v2813, 2
      %v2844 = vsel %vm570, %v2842, %v2843
      %v2845 = vrot.slane %v2809, 2
      %v2846 = vrot.slane %v2814, 2
      %v2847 = vsel %vm570, %v2845, %v2846
      %v2848 = vrot.slane %v2810, 2
      %v2849 = vrot.slane %v2815, 2
      %v2850 = vsel %vm570, %v2848, %v2849
      %v2851 = vrot.slane %v2816, 2
      %v2852 = vsel %vm570, %v2837, %v2851
      %v2853 = vrot.slane %v2817, 2
      %v2854 = vsel %vm570, %v2840, %v2853
      %v2855 = vrot.slane %v2818, 2
      %v2856 = vsel %vm570, %v2843, %v2855
      %v2857 = vrot.slane %v2819, 2
      %v2858 = vsel %vm570, %v2846, %v2857
      %v2859 = vrot.slane %v2820, 2
      %v2860 = vsel %vm570, %v2849, %v2859
      %2861 = vrot.lane.b32.xlu0 %v2838, 96
      %v2862 = vpop.permute.xlu0 %2861
      %2863 = vrot.lane.b32.xlu0 %v2841, 96
      %v2864 = vpop.permute.xlu0 %2863
      %2865 = vrot.lane.b32.xlu0 %v2844, 96
      %v2866 = vpop.permute.xlu0 %2865
      %2867 = vrot.lane.b32.xlu0 %v2847, 96
      %v2868 = vpop.permute.xlu0 %2867
      %2869 = vrot.lane.b32.xlu0 %v2850, 96
      %v2870 = vpop.permute.xlu0 %2869
      %2871 = vrot.lane.b32.xlu0 %v2852, 96
      %v2872 = vpop.permute.xlu0 %2871
      %2873 = vrot.lane.b32.xlu0 %v2854, 96
      %v2874 = vpop.permute.xlu0 %2873
      %2875 = vrot.lane.b32.xlu0 %v2856, 96
      %v2876 = vpop.permute.xlu0 %2875
      %2877 = vrot.lane.b32.xlu0 %v2858, 96
      %v2878 = vpop.permute.xlu0 %2877
      %2879 = vrot.lane.b32.xlu0 %v2860, 96
      %v2880 = vpop.permute.xlu0 %2879
      %v2881 = vsel %vm671, %v2862, %v2864
      %v2882 = vsel %vm671, %v2864, %v2866
      %v2883 = vsel %vm671, %v2866, %v2868
      %v2884 = vsel %vm671, %v2868, %v2870
      %v2885 = vsel %vm671, %v2872, %v2874
      %v2886 = vsel %vm671, %v2874, %v2876
      %v2887 = vsel %vm671, %v2876, %v2878
      %v2888 = vsel %vm671, %v2878, %v2880
      %v2897 = vadd.f32 %v2774, %v2881
      %v2898 = vadd.f32 %v2775, %v2882
      %v2899 = vadd.f32 %v2776, %v2883
      %v2900 = vadd.f32 %v2777, %v2884
      %v2901 = vadd.f32 %v2778, %v2885
      %v2902 = vadd.f32 %v2779, %v2886
      %v2903 = vadd.f32 %v2780, %v2887
      %v2904 = vadd.f32 %v2781, %v2888
      %v2905 = vperm.slane %v2415, 2
      %v2906 = vperm.slane %v2416, 2
      %v2907 = vperm.slane %v2417, 2
      %v2908 = vperm.slane %v2418, 2
      %2913 = vrot.lane.b32.xlu0 %v2905, 64
      %v2914 = vpop.permute.xlu0 %2913
      %2915 = vrot.lane.b32.xlu0 %v2906, 64
      %v2916 = vpop.permute.xlu0 %2915
      %2917 = vrot.lane.b32.xlu0 %v2907, 64
      %v2918 = vpop.permute.xlu0 %2917
      %2919 = vrot.lane.b32.xlu0 %v2908, 64
      %v2920 = vpop.permute.xlu0 %2919
      %v2921 = vsel %vm958, %v2914, %v2916
      %v2922 = vsel %vm958, %v2916, %v2918
      %v2923 = vsel %vm958, %v2918, %v2920
      %v2929 = vmul.f32 %v2409, %v2914
      %v2930 = vmul.f32 %v2385, %v2921
      %v2931 = vmul.f32 %v2386, %v2922
      %v2932 = vmul.f32 %v2387, %v2923
      %v2933 = vmul.f32 %v2412, %v2920
      %v2934 = vmul.f32 %v2410, %v2914
      %v2935 = vmul.f32 %v2388, %v2921
      %v2936 = vmul.f32 %v2389, %v2922
      %v2937 = vmul.f32 %v2390, %v2923
      %v2938 = vmul.f32 %v2413, %v2920
      %2949 = vrot.lane.b32.xlu0 %v2929, 64
      %v2950 = vpop.permute.xlu0 %2949
      %2951 = vrot.lane.b32.xlu0 %v2930, 64
      %v2952 = vpop.permute.xlu0 %2951
      %2953 = vrot.lane.b32.xlu0 %v2931, 64
      %v2954 = vpop.permute.xlu0 %2953
      %2955 = vrot.lane.b32.xlu0 %v2932, 64
      %v2956 = vpop.permute.xlu0 %2955
      %2957 = vrot.lane.b32.xlu0 %v2933, 64
      %v2958 = vpop.permute.xlu0 %2957
      %2959 = vrot.lane.b32.xlu0 %v2934, 64
      %v2960 = vpop.permute.xlu0 %2959
      %2961 = vrot.lane.b32.xlu0 %v2935, 64
      %v2962 = vpop.permute.xlu0 %2961
      %2963 = vrot.lane.b32.xlu0 %v2936, 64
      %v2964 = vpop.permute.xlu0 %2963
      %2965 = vrot.lane.b32.xlu0 %v2937, 64
      %v2966 = vpop.permute.xlu0 %2965
      %2967 = vrot.lane.b32.xlu0 %v2938, 64
      %v2968 = vpop.permute.xlu0 %2967
      %v2969 = vsel %vm958, %v2950, %v2952
      %v2970 = vsel %vm958, %v2952, %v2954
      %v2971 = vsel %vm958, %v2954, %v2956
      %v2972 = vsel %vm958, %v2956, %v2958
      %v2973 = vsel %vm958, %v2960, %v2962
      %v2974 = vsel %vm958, %v2962, %v2964
      %v2975 = vsel %vm958, %v2964, %v2966
      %v2976 = vsel %vm958, %v2966, %v2968
      %v2985 = vadd.f32 %v2897, %v2969
      %v2986 = vadd.f32 %v2898, %v2970
      %v2987 = vadd.f32 %v2899, %v2971
      %v2988 = vadd.f32 %v2900, %v2972
      %v2989 = vadd.f32 %v2901, %v2973
      %v2990 = vadd.f32 %v2902, %v2974
      %v2991 = vadd.f32 %v2903, %v2975
      %v2992 = vadd.f32 %v2904, %v2976
      %v2993 = vperm.slane %v2415, 5
      %v2994 = vperm.slane %v2416, 5
      %v2995 = vperm.slane %v2417, 5
      %v2996 = vperm.slane %v2418, 5
      %3001 = vrot.lane.b32.xlu0 %v2993, 64
      %v3002 = vpop.permute.xlu0 %3001
      %3003 = vrot.lane.b32.xlu0 %v2994, 64
      %v3004 = vpop.permute.xlu0 %3003
      %3005 = vrot.lane.b32.xlu0 %v2995, 64
      %v3006 = vpop.permute.xlu0 %3005
      %3007 = vrot.lane.b32.xlu0 %v2996, 64
      %v3008 = vpop.permute.xlu0 %3007
      %v3009 = vsel %vm958, %v3002, %v3004
      %v3010 = vsel %vm958, %v3004, %v3006
      %v3011 = vsel %vm958, %v3006, %v3008
      %v3017 = vmul.f32 %v2409, %v3002
      %v3018 = vmul.f32 %v2385, %v3009
      %v3019 = vmul.f32 %v2386, %v3010
      %v3020 = vmul.f32 %v2387, %v3011
      %v3021 = vmul.f32 %v2412, %v3008
      %v3022 = vmul.f32 %v2410, %v3002
      %v3023 = vmul.f32 %v2388, %v3009
      %v3024 = vmul.f32 %v2389, %v3010
      %v3025 = vmul.f32 %v2390, %v3011
      %v3026 = vmul.f32 %v2413, %v3008
      %v3027 = vmul.f32 %v2411, %v3002
      %v3028 = vmul.f32 %v2391, %v3009
      %v3029 = vmul.f32 %v2392, %v3010
      %v3030 = vmul.f32 %v2393, %v3011
      %v3031 = vmul.f32 %v2414, %v3008
      %v3047 = vrot.slane %v3017, 1
      %v3048 = vrot.slane %v3022, 1
      %v3049 = vsel %vm505, %v3047, %v3048
      %v3050 = vrot.slane %v3018, 1
      %v3051 = vrot.slane %v3023, 1
      %v3052 = vsel %vm505, %v3050, %v3051
      %v3053 = vrot.slane %v3019, 1
      %v3054 = vrot.slane %v3024, 1
      %v3055 = vsel %vm505, %v3053, %v3054
      %v3056 = vrot.slane %v3020, 1
      %v3057 = vrot.slane %v3025, 1
      %v3058 = vsel %vm505, %v3056, %v3057
      %v3059 = vrot.slane %v3021, 1
      %v3060 = vrot.slane %v3026, 1
      %v3061 = vsel %vm505, %v3059, %v3060
      %v3062 = vrot.slane %v3027, 1
      %v3063 = vsel %vm505, %v3048, %v3062
      %v3064 = vrot.slane %v3028, 1
      %v3065 = vsel %vm505, %v3051, %v3064
      %v3066 = vrot.slane %v3029, 1
      %v3067 = vsel %vm505, %v3054, %v3066
      %v3068 = vrot.slane %v3030, 1
      %v3069 = vsel %vm505, %v3057, %v3068
      %v3070 = vrot.slane %v3031, 1
      %v3071 = vsel %vm505, %v3060, %v3070
      %3072 = vrot.lane.b32.xlu0 %v3049, 64
      %v3073 = vpop.permute.xlu0 %3072
      %3074 = vrot.lane.b32.xlu0 %v3052, 64
      %v3075 = vpop.permute.xlu0 %3074
      %3076 = vrot.lane.b32.xlu0 %v3055, 64
      %v3077 = vpop.permute.xlu0 %3076
      %3078 = vrot.lane.b32.xlu0 %v3058, 64
      %v3079 = vpop.permute.xlu0 %3078
      %3080 = vrot.lane.b32.xlu0 %v3061, 64
      %v3081 = vpop.permute.xlu0 %3080
      %3082 = vrot.lane.b32.xlu0 %v3063, 64
      %v3083 = vpop.permute.xlu0 %3082
      %3084 = vrot.lane.b32.xlu0 %v3065, 64
      %v3085 = vpop.permute.xlu0 %3084
      %3086 = vrot.lane.b32.xlu0 %v3067, 64
      %v3087 = vpop.permute.xlu0 %3086
      %3088 = vrot.lane.b32.xlu0 %v3069, 64
      %v3089 = vpop.permute.xlu0 %3088
      %3090 = vrot.lane.b32.xlu0 %v3071, 64
      %v3091 = vpop.permute.xlu0 %3090
      %v3092 = vsel %vm958, %v3073, %v3075
      %v3093 = vsel %vm958, %v3075, %v3077
      %v3094 = vsel %vm958, %v3077, %v3079
      %v3095 = vsel %vm958, %v3079, %v3081
      %v3096 = vsel %vm958, %v3083, %v3085
      %v3097 = vsel %vm958, %v3085, %v3087
      %v3098 = vsel %vm958, %v3087, %v3089
      %v3099 = vsel %vm958, %v3089, %v3091
      %v3108 = vadd.f32 %v2985, %v3092
      %v3109 = vadd.f32 %v2986, %v3093
      %v3110 = vadd.f32 %v2987, %v3094
      %v3111 = vadd.f32 %v2988, %v3095
      %v3112 = vadd.f32 %v2989, %v3096
      %v3113 = vadd.f32 %v2990, %v3097
      %v3114 = vadd.f32 %v2991, %v3098
      %v3115 = vadd.f32 %v2992, %v3099
      %v3116 = vperm.slane %v2419, 0
      %v3117 = vperm.slane %v2420, 0
      %v3118 = vperm.slane %v2421, 0
      %v3119 = vperm.slane %v2422, 0
      %3124 = vrot.lane.b32.xlu0 %v3116, 64
      %v3125 = vpop.permute.xlu0 %3124
      %3126 = vrot.lane.b32.xlu0 %v3117, 64
      %v3127 = vpop.permute.xlu0 %3126
      %3128 = vrot.lane.b32.xlu0 %v3118, 64
      %v3129 = vpop.permute.xlu0 %3128
      %3130 = vrot.lane.b32.xlu0 %v3119, 64
      %v3131 = vpop.permute.xlu0 %3130
      %v3132 = vsel %vm958, %v3125, %v3127
      %v3133 = vsel %vm958, %v3127, %v3129
      %v3134 = vsel %vm958, %v3129, %v3131
      %v3140 = vmul.f32 %v2409, %v3125
      %v3141 = vmul.f32 %v2385, %v3132
      %v3142 = vmul.f32 %v2386, %v3133
      %v3143 = vmul.f32 %v2387, %v3134
      %v3144 = vmul.f32 %v2412, %v3131
      %v3145 = vmul.f32 %v2410, %v3125
      %v3146 = vmul.f32 %v2388, %v3132
      %v3147 = vmul.f32 %v2389, %v3133
      %v3148 = vmul.f32 %v2390, %v3134
      %v3149 = vmul.f32 %v2413, %v3131
      %v3150 = vmul.f32 %v2411, %v3125
      %v3151 = vmul.f32 %v2391, %v3132
      %v3152 = vmul.f32 %v2392, %v3133
      %v3153 = vmul.f32 %v2393, %v3134
      %v3154 = vmul.f32 %v2414, %v3131
      %v3170 = vrot.slane %v3140, 2
      %v3171 = vrot.slane %v3145, 2
      %v3172 = vsel %vm570, %v3170, %v3171
      %v3173 = vrot.slane %v3141, 2
      %v3174 = vrot.slane %v3146, 2
      %v3175 = vsel %vm570, %v3173, %v3174
      %v3176 = vrot.slane %v3142, 2
      %v3177 = vrot.slane %v3147, 2
      %v3178 = vsel %vm570, %v3176, %v3177
      %v3179 = vrot.slane %v3143, 2
      %v3180 = vrot.slane %v3148, 2
      %v3181 = vsel %vm570, %v3179, %v3180
      %v3182 = vrot.slane %v3144, 2
      %v3183 = vrot.slane %v3149, 2
      %v3184 = vsel %vm570, %v3182, %v3183
      %v3185 = vrot.slane %v3150, 2
      %v3186 = vsel %vm570, %v3171, %v3185
      %v3187 = vrot.slane %v3151, 2
      %v3188 = vsel %vm570, %v3174, %v3187
      %v3189 = vrot.slane %v3152, 2
      %v3190 = vsel %vm570, %v3177, %v3189
      %v3191 = vrot.slane %v3153, 2
      %v3192 = vsel %vm570, %v3180, %v3191
      %v3193 = vrot.slane %v3154, 2
      %v3194 = vsel %vm570, %v3183, %v3193
      %3195 = vrot.lane.b32.xlu0 %v3172, 64
      %v3196 = vpop.permute.xlu0 %3195
      %3197 = vrot.lane.b32.xlu0 %v3175, 64
      %v3198 = vpop.permute.xlu0 %3197
      %3199 = vrot.lane.b32.xlu0 %v3178, 64
      %v3200 = vpop.permute.xlu0 %3199
      %3201 = vrot.lane.b32.xlu0 %v3181, 64
      %v3202 = vpop.permute.xlu0 %3201
      %3203 = vrot.lane.b32.xlu0 %v3184, 64
      %v3204 = vpop.permute.xlu0 %3203
      %3205 = vrot.lane.b32.xlu0 %v3186, 64
      %v3206 = vpop.permute.xlu0 %3205
      %3207 = vrot.lane.b32.xlu0 %v3188, 64
      %v3208 = vpop.permute.xlu0 %3207
      %3209 = vrot.lane.b32.xlu0 %v3190, 64
      %v3210 = vpop.permute.xlu0 %3209
      %3211 = vrot.lane.b32.xlu0 %v3192, 64
      %v3212 = vpop.permute.xlu0 %3211
      %3213 = vrot.lane.b32.xlu0 %v3194, 64
      %v3214 = vpop.permute.xlu0 %3213
      %v3215 = vsel %vm958, %v3196, %v3198
      %v3216 = vsel %vm958, %v3198, %v3200
      %v3217 = vsel %vm958, %v3200, %v3202
      %v3218 = vsel %vm958, %v3202, %v3204
      %v3219 = vsel %vm958, %v3206, %v3208
      %v3220 = vsel %vm958, %v3208, %v3210
      %v3221 = vsel %vm958, %v3210, %v3212
      %v3222 = vsel %vm958, %v3212, %v3214
      %v3231 = vadd.f32 %v3108, %v3215
      %v3232 = vadd.f32 %v3109, %v3216
      %v3233 = vadd.f32 %v3110, %v3217
      %v3234 = vadd.f32 %v3111, %v3218
      %v3235 = vadd.f32 %v3112, %v3219
      %v3236 = vadd.f32 %v3113, %v3220
      %v3237 = vadd.f32 %v3114, %v3221
      %v3238 = vadd.f32 %v3115, %v3222
      %v3239 = vpack.c.bf16 %v3235, %v3231
      %v3240 = vpack.c.bf16 %v3236, %v3232
      %v3241 = vpack.c.bf16 %v3237, %v3233
      %v3242 = vpack.c.bf16 %v3238, %v3234
      %v3243 = vld [vmem:[%s6] sm:$0xff]
      %v3244 = vld [vmem:[%s6 + $0x8] sm:$0xff]
      %v3245 = vld [vmem:[%s6 + $0x10] sm:$0xff]
      %v3246 = vld [vmem:[%s6 + $0x18] sm:$0xff]
      %v3247 = vld [vmem:[%s6 + $0x20] sm:$0xff]
      %v3248 = vld [vmem:[%s6 + $0x28] sm:$0xff]
      %v3249 = vld [vmem:[%s6 + $0x30] sm:$0xff]
      %v3250 = vld [vmem:[%s6 + $0x38] sm:$0xff]
      %v3251 = vld [vmem:[%s6 + $0x40] sm:$0xff]
      %v3252 = vld [vmem:[%s6 + $0x48] sm:$0xff]
      %v3253 = vld [vmem:[%s6 + $0x50] sm:$0xff]
      %v3254 = vld [vmem:[%s6 + $0x58] sm:$0xff]
      %v3255 = vld [vmem:[%s6 + $0x60] sm:$0xff]
      %v3256 = vld [vmem:[%s6 + $0x68] sm:$0xff]
      %v3257 = vld [vmem:[%s6 + $0x70] sm:$0xff]
      %v3258 = vld [vmem:[%s6 + $0x78] sm:$0xff]
      %v3259 = vld [vmem:[%s6 + $0x80] sm:$0xff]
      %v3260 = vld [vmem:[%s6 + $0x88] sm:$0xff]
      %v3261 = vld [vmem:[%s6 + $0x90] sm:$0xff]
      %v3262 = vld [vmem:[%s6 + $0x98] sm:$0xff]
      %v3263 = vld [vmem:[%s6 + $0xa0] sm:$0xff]
      %v3264 = vld [vmem:[%s6 + $0xa8] sm:$0xff]
      %v3265 = vld [vmem:[%s6 + $0xb0] sm:$0xff]
      %v3266 = vld [vmem:[%s6 + $0xb8] sm:$0xff]
      %v3267 = vld [vmem:[%s6 + $0xc0] sm:$0xff]
      %v3268 = vld [vmem:[%s6 + $0xc8] sm:$0xff]
      %v3269 = vld [vmem:[%s6 + $0xd0] sm:$0xff]
      %v3270 = vld [vmem:[%s6 + $0xd8] sm:$0xff]
      %v3271 = vld [vmem:[%s6 + $0xe0] sm:$0xff]
      %v3272 = vld [vmem:[%s6 + $0xe8] sm:$0xff]
      %v3273 = vld [vmem:[%s6 + $0xf0] sm:$0xff]
      %v3274 = vld [vmem:[%s6 + $0xf8] sm:$0xff]
      %v3275 = vld [vmem:[%s6 + $0x100] sm:$0xff]
      %v3276 = vld [vmem:[%s6 + $0x108] sm:$0xff]
      %v3277 = vld [vmem:[%s6 + $0x110] sm:$0xff]
      %v3278 = vld [vmem:[%s6 + $0x118] sm:$0xff]
      %v3279 = vld [vmem:[%s6 + $0x120] sm:$0xff]
      %v3280 = vld [vmem:[%s6 + $0x128] sm:$0xff]
      %v3281 = vld [vmem:[%s6 + $0x130] sm:$0xff]
      %v3282 = vld [vmem:[%s6 + $0x138] sm:$0xff]
      %v3283 = vld [vmem:[%s6 + $0x140] sm:$0xff]
      %v3284 = vld [vmem:[%s6 + $0x148] sm:$0xff]
      %v3285 = vld [vmem:[%s6 + $0x150] sm:$0xff]
      %v3286 = vld [vmem:[%s6 + $0x158] sm:$0xff]
      %v3287 = vld [vmem:[%s6 + $0x160] sm:$0xff]
      %v3288 = vld [vmem:[%s6 + $0x168] sm:$0xff]
      %v3289 = vld [vmem:[%s6 + $0x170] sm:$0xff]
      %v3290 = vld [vmem:[%s6 + $0x178] sm:$0xff]
      %v3291 = vld [vmem:[%s6 + $0x180] sm:$0xff]
      %v3292 = vld [vmem:[%s6 + $0x188] sm:$0xff]
      %v3293 = vld [vmem:[%s6 + $0x190] sm:$0xff]
      %v3294 = vld [vmem:[%s6 + $0x198] sm:$0xff]
      %v3295 = vld [vmem:[%s6 + $0x1a0] sm:$0xff]
      %v3296 = vld [vmem:[%s6 + $0x1a8] sm:$0xff]
      %v3297 = vld [vmem:[%s6 + $0x1b0] sm:$0xff]
      %v3298 = vld [vmem:[%s6 + $0x1b8] sm:$0xff]
      %v3299 = vld [vmem:[%s6 + $0x1c0] sm:$0xff]
      %v3300 = vld [vmem:[%s6 + $0x1c8] sm:$0xff]
      %v3301 = vld [vmem:[%s6 + $0x1d0] sm:$0xff]
      %v3302 = vld [vmem:[%s6 + $0x1d8] sm:$0xff]
      %v3303 = vld [vmem:[%s6 + $0x1e0] sm:$0xff]
      %v3304 = vld [vmem:[%s6 + $0x1e8] sm:$0xff]
      %v3305 = vld [vmem:[%s6 + $0x1f0] sm:$0xff]
      %v3306 = vld [vmem:[%s6 + $0x1f8] sm:$0xff]
      %v3307 = vld [vmem:[%s6 + $0x200] sm:$0xff]
      %v3308 = vld [vmem:[%s6 + $0x208] sm:$0xff]
      %v3309 = vld [vmem:[%s6 + $0x210] sm:$0xff]
      %v3310 = vld [vmem:[%s6 + $0x218] sm:$0xff]
      %v3311 = vld [vmem:[%s6 + $0x220] sm:$0xff]
      %v3312 = vld [vmem:[%s6 + $0x228] sm:$0xff]
      %v3313 = vld [vmem:[%s6 + $0x230] sm:$0xff]
      %v3314 = vld [vmem:[%s6 + $0x238] sm:$0xff]
      %v3315 = vld [vmem:[%s6 + $0x240] sm:$0xff]
      %v3316 = vld [vmem:[%s6 + $0x248] sm:$0xff]
      %v3317 = vld [vmem:[%s6 + $0x250] sm:$0xff]
      %v3318 = vld [vmem:[%s6 + $0x258] sm:$0xff]
      %v3319 = vld [vmem:[%s6 + $0x260] sm:$0xff]
      %v3320 = vld [vmem:[%s6 + $0x268] sm:$0xff]
      %v3321 = vld [vmem:[%s6 + $0x270] sm:$0xff]
      %v3322 = vld [vmem:[%s6 + $0x278] sm:$0xff]
      %v3323 = vld [vmem:[%s6 + $0x280] sm:$0xff]
      %v3324 = vld [vmem:[%s6 + $0x288] sm:$0xff]
      %v3325 = vld [vmem:[%s6 + $0x290] sm:$0xff]
      %v3326 = vld [vmem:[%s6 + $0x298] sm:$0xff]
      %v3327 = vld [vmem:[%s6 + $0x2a0] sm:$0xff]
      %v3328 = vld [vmem:[%s6 + $0x2a8] sm:$0xff]
      %v3329 = vld [vmem:[%s6 + $0x2b0] sm:$0xff]
      %v3330 = vld [vmem:[%s6 + $0x2b8] sm:$0xff]
      %v3331 = vld [vmem:[%s6 + $0x2c0] sm:$0xff]
      %v3332 = vld [vmem:[%s6 + $0x2c8] sm:$0xff]
      %v3333 = vld [vmem:[%s6 + $0x2d0] sm:$0xff]
      %v3334 = vld [vmem:[%s6 + $0x2d8] sm:$0xff]
      %v3335 = vld [vmem:[%s6 + $0x2e0] sm:$0xff]
      %v3336 = vld [vmem:[%s6 + $0x2e8] sm:$0xff]
      %v3337 = vld [vmem:[%s6 + $0x2f0] sm:$0xff]
      %v3338 = vld [vmem:[%s6 + $0x2f8] sm:$0xff]
      %v3339 = vld [vmem:[%s6 + $0x300] sm:$0xff]
      %v3340 = vld [vmem:[%s6 + $0x308] sm:$0xff]
      %v3341 = vld [vmem:[%s6 + $0x310] sm:$0xff]
      %v3342 = vld [vmem:[%s6 + $0x318] sm:$0xff]
      %v3343 = vld [vmem:[%s6 + $0x320] sm:$0xff]
      %v3344 = vld [vmem:[%s6 + $0x328] sm:$0xff]
      %v3345 = vld [vmem:[%s6 + $0x330] sm:$0xff]
      %v3346 = vld [vmem:[%s6 + $0x338] sm:$0xff]
      %v3347 = vld [vmem:[%s6 + $0x340] sm:$0xff]
      %v3348 = vld [vmem:[%s6 + $0x348] sm:$0xff]
      %v3349 = vld [vmem:[%s6 + $0x350] sm:$0xff]
      %v3350 = vld [vmem:[%s6 + $0x358] sm:$0xff]
      %v3351 = vld [vmem:[%s6 + $0x360] sm:$0xff]
      %v3352 = vld [vmem:[%s6 + $0x368] sm:$0xff]
      %v3353 = vld [vmem:[%s6 + $0x370] sm:$0xff]
      %v3354 = vld [vmem:[%s6 + $0x378] sm:$0xff]
      %v3355 = vld [vmem:[%s6 + $0x380] sm:$0xff]
      %v3356 = vld [vmem:[%s6 + $0x388] sm:$0xff]
      %v3357 = vld [vmem:[%s6 + $0x390] sm:$0xff]
      %v3358 = vld [vmem:[%s6 + $0x398] sm:$0xff]
      %v3359 = vld [vmem:[%s6 + $0x3a0] sm:$0xff]
      %v3360 = vld [vmem:[%s6 + $0x3a8] sm:$0xff]
      %v3361 = vld [vmem:[%s6 + $0x3b0] sm:$0xff]
      %v3362 = vld [vmem:[%s6 + $0x3b8] sm:$0xff]
      %v3363 = vld [vmem:[%s6 + $0x3c0] sm:$0xff]
      %v3364 = vld [vmem:[%s6 + $0x3c8] sm:$0xff]
      %v3365 = vld [vmem:[%s6 + $0x3d0] sm:$0xff]
      %v3366 = vld [vmem:[%s6 + $0x3d8] sm:$0xff]
      %v3367 = vld [vmem:[%s6 + $0x3e0] sm:$0xff]
      %v3368 = vld [vmem:[%s6 + $0x3e8] sm:$0xff]
      %v3369 = vld [vmem:[%s6 + $0x3f0] sm:$0xff]
      %v3370 = vld [vmem:[%s6 + $0x3f8] sm:$0xff]
      %v3499 = vunpack.c.l.b16 %v3243
      %v3500 = vunpack.c.h.b16 %v3243
      %v3501 = vunpack.c.l.b16 %v3244
      %v3502 = vunpack.c.h.b16 %v3244
      %v3503 = vunpack.c.l.b16 %v3245
      %v3504 = vunpack.c.h.b16 %v3245
      %v3505 = vunpack.c.l.b16 %v3246
      %v3506 = vunpack.c.h.b16 %v3246
      %v3507 = vunpack.c.l.b16 %v3247
      %v3508 = vunpack.c.h.b16 %v3247
      %v3509 = vunpack.c.l.b16 %v3248
      %v3510 = vunpack.c.h.b16 %v3248
      %v3511 = vunpack.c.l.b16 %v3249
      %v3512 = vunpack.c.h.b16 %v3249
      %v3513 = vunpack.c.l.b16 %v3250
      %v3514 = vunpack.c.h.b16 %v3250
      %v3515 = vunpack.c.l.b16 %v3251
      %v3516 = vunpack.c.h.b16 %v3251
      %v3517 = vunpack.c.l.b16 %v3252
      %v3518 = vunpack.c.h.b16 %v3252
      %v3519 = vunpack.c.l.b16 %v3253
      %v3520 = vunpack.c.h.b16 %v3253
      %v3521 = vunpack.c.l.b16 %v3254
      %v3522 = vunpack.c.h.b16 %v3254
      %v3523 = vunpack.c.l.b16 %v3255
      %v3524 = vunpack.c.h.b16 %v3255
      %v3525 = vunpack.c.l.b16 %v3256
      %v3526 = vunpack.c.h.b16 %v3256
      %v3527 = vunpack.c.l.b16 %v3257
      %v3528 = vunpack.c.h.b16 %v3257
      %v3529 = vunpack.c.l.b16 %v3258
      %v3530 = vunpack.c.h.b16 %v3258
      %v3531 = vunpack.c.l.b16 %v3259
      %v3532 = vunpack.c.h.b16 %v3259
      %v3533 = vunpack.c.l.b16 %v3260
      %v3534 = vunpack.c.h.b16 %v3260
      %v3535 = vunpack.c.l.b16 %v3261
      %v3536 = vunpack.c.h.b16 %v3261
      %v3537 = vunpack.c.l.b16 %v3262
      %v3538 = vunpack.c.h.b16 %v3262
      %v3539 = vunpack.c.l.b16 %v3263
      %v3540 = vunpack.c.h.b16 %v3263
      %v3541 = vunpack.c.l.b16 %v3264
      %v3542 = vunpack.c.h.b16 %v3264
      %v3543 = vunpack.c.l.b16 %v3265
      %v3544 = vunpack.c.h.b16 %v3265
      %v3545 = vunpack.c.l.b16 %v3266
      %v3546 = vunpack.c.h.b16 %v3266
      %v3547 = vunpack.c.l.b16 %v3267
      %v3548 = vunpack.c.h.b16 %v3267
      %v3549 = vunpack.c.l.b16 %v3268
      %v3550 = vunpack.c.h.b16 %v3268
      %v3551 = vunpack.c.l.b16 %v3269
      %v3552 = vunpack.c.h.b16 %v3269
      %v3553 = vunpack.c.l.b16 %v3270
      %v3554 = vunpack.c.h.b16 %v3270
      %v3555 = vunpack.c.l.b16 %v3271
      %v3556 = vunpack.c.h.b16 %v3271
      %v3557 = vunpack.c.l.b16 %v3272
      %v3558 = vunpack.c.h.b16 %v3272
      %v3559 = vunpack.c.l.b16 %v3273
      %v3560 = vunpack.c.h.b16 %v3273
      %v3561 = vunpack.c.l.b16 %v3274
      %v3562 = vunpack.c.h.b16 %v3274
      %v3563 = vunpack.c.l.b16 %v3275
      %v3564 = vunpack.c.h.b16 %v3275
      %v3565 = vunpack.c.l.b16 %v3276
      %v3566 = vunpack.c.h.b16 %v3276
      %v3567 = vunpack.c.l.b16 %v3277
      %v3568 = vunpack.c.h.b16 %v3277
      %v3569 = vunpack.c.l.b16 %v3278
      %v3570 = vunpack.c.h.b16 %v3278
      %v3571 = vunpack.c.l.b16 %v3279
      %v3572 = vunpack.c.h.b16 %v3279
      %v3573 = vunpack.c.l.b16 %v3280
      %v3574 = vunpack.c.h.b16 %v3280
      %v3575 = vunpack.c.l.b16 %v3281
      %v3576 = vunpack.c.h.b16 %v3281
      %v3577 = vunpack.c.l.b16 %v3282
      %v3578 = vunpack.c.h.b16 %v3282
      %v3579 = vunpack.c.l.b16 %v3283
      %v3580 = vunpack.c.h.b16 %v3283
      %v3581 = vunpack.c.l.b16 %v3284
      %v3582 = vunpack.c.h.b16 %v3284
      %v3583 = vunpack.c.l.b16 %v3285
      %v3584 = vunpack.c.h.b16 %v3285
      %v3585 = vunpack.c.l.b16 %v3286
      %v3586 = vunpack.c.h.b16 %v3286
      %v3587 = vunpack.c.l.b16 %v3287
      %v3588 = vunpack.c.h.b16 %v3287
      %v3589 = vunpack.c.l.b16 %v3288
      %v3590 = vunpack.c.h.b16 %v3288
      %v3591 = vunpack.c.l.b16 %v3289
      %v3592 = vunpack.c.h.b16 %v3289
      %v3593 = vunpack.c.l.b16 %v3290
      %v3594 = vunpack.c.h.b16 %v3290
      %v3595 = vunpack.c.l.b16 %v3291
      %v3596 = vunpack.c.h.b16 %v3291
      %v3597 = vunpack.c.l.b16 %v3292
      %v3598 = vunpack.c.h.b16 %v3292
      %v3599 = vunpack.c.l.b16 %v3293
      %v3600 = vunpack.c.h.b16 %v3293
      %v3601 = vunpack.c.l.b16 %v3294
      %v3602 = vunpack.c.h.b16 %v3294
      %v3603 = vunpack.c.l.b16 %v3295
      %v3604 = vunpack.c.h.b16 %v3295
      %v3605 = vunpack.c.l.b16 %v3296
      %v3606 = vunpack.c.h.b16 %v3296
      %v3607 = vunpack.c.l.b16 %v3297
      %v3608 = vunpack.c.h.b16 %v3297
      %v3609 = vunpack.c.l.b16 %v3298
      %v3610 = vunpack.c.h.b16 %v3298
      %v3611 = vunpack.c.l.b16 %v3299
      %v3612 = vunpack.c.h.b16 %v3299
      %v3613 = vunpack.c.l.b16 %v3300
      %v3614 = vunpack.c.h.b16 %v3300
      %v3615 = vunpack.c.l.b16 %v3301
      %v3616 = vunpack.c.h.b16 %v3301
      %v3617 = vunpack.c.l.b16 %v3302
      %v3618 = vunpack.c.h.b16 %v3302
      %v3619 = vunpack.c.l.b16 %v3303
      %v3620 = vunpack.c.h.b16 %v3303
      %v3621 = vunpack.c.l.b16 %v3304
      %v3622 = vunpack.c.h.b16 %v3304
      %v3623 = vunpack.c.l.b16 %v3305
      %v3624 = vunpack.c.h.b16 %v3305
      %v3625 = vunpack.c.l.b16 %v3306
      %v3626 = vunpack.c.h.b16 %v3306
      %v3627 = vunpack.c.l.b16 %v3307
      %v3628 = vunpack.c.h.b16 %v3307
      %v3629 = vunpack.c.l.b16 %v3308
      %v3630 = vunpack.c.h.b16 %v3308
      %v3631 = vunpack.c.l.b16 %v3309
      %v3632 = vunpack.c.h.b16 %v3309
      %v3633 = vunpack.c.l.b16 %v3310
      %v3634 = vunpack.c.h.b16 %v3310
      %v3635 = vunpack.c.l.b16 %v3311
      %v3636 = vunpack.c.h.b16 %v3311
      %v3637 = vunpack.c.l.b16 %v3312
      %v3638 = vunpack.c.h.b16 %v3312
      %v3639 = vunpack.c.l.b16 %v3313
      %v3640 = vunpack.c.h.b16 %v3313
      %v3641 = vunpack.c.l.b16 %v3314
      %v3642 = vunpack.c.h.b16 %v3314
      %v3643 = vunpack.c.l.b16 %v3315
      %v3644 = vunpack.c.h.b16 %v3315
      %v3645 = vunpack.c.l.b16 %v3316
      %v3646 = vunpack.c.h.b16 %v3316
      %v3647 = vunpack.c.l.b16 %v3317
      %v3648 = vunpack.c.h.b16 %v3317
      %v3649 = vunpack.c.l.b16 %v3318
      %v3650 = vunpack.c.h.b16 %v3318
      %v3651 = vunpack.c.l.b16 %v3319
      %v3652 = vunpack.c.h.b16 %v3319
      %v3653 = vunpack.c.l.b16 %v3320
      %v3654 = vunpack.c.h.b16 %v3320
      %v3655 = vunpack.c.l.b16 %v3321
      %v3656 = vunpack.c.h.b16 %v3321
      %v3657 = vunpack.c.l.b16 %v3322
      %v3658 = vunpack.c.h.b16 %v3322
      %v3659 = vunpack.c.l.b16 %v3323
      %v3660 = vunpack.c.h.b16 %v3323
      %v3661 = vunpack.c.l.b16 %v3324
      %v3662 = vunpack.c.h.b16 %v3324
      %v3663 = vunpack.c.l.b16 %v3325
      %v3664 = vunpack.c.h.b16 %v3325
      %v3665 = vunpack.c.l.b16 %v3326
      %v3666 = vunpack.c.h.b16 %v3326
      %v3667 = vunpack.c.l.b16 %v3327
      %v3668 = vunpack.c.h.b16 %v3327
      %v3669 = vunpack.c.l.b16 %v3328
      %v3670 = vunpack.c.h.b16 %v3328
      %v3671 = vunpack.c.l.b16 %v3329
      %v3672 = vunpack.c.h.b16 %v3329
      %v3673 = vunpack.c.l.b16 %v3330
      %v3674 = vunpack.c.h.b16 %v3330
      %v3675 = vunpack.c.l.b16 %v3331
      %v3676 = vunpack.c.h.b16 %v3331
      %v3677 = vunpack.c.l.b16 %v3332
      %v3678 = vunpack.c.h.b16 %v3332
      %v3679 = vunpack.c.l.b16 %v3333
      %v3680 = vunpack.c.h.b16 %v3333
      %v3681 = vunpack.c.l.b16 %v3334
      %v3682 = vunpack.c.h.b16 %v3334
      %v3683 = vunpack.c.l.b16 %v3335
      %v3684 = vunpack.c.h.b16 %v3335
      %v3685 = vunpack.c.l.b16 %v3336
      %v3686 = vunpack.c.h.b16 %v3336
      %v3687 = vunpack.c.l.b16 %v3337
      %v3688 = vunpack.c.h.b16 %v3337
      %v3689 = vunpack.c.l.b16 %v3338
      %v3690 = vunpack.c.h.b16 %v3338
      %v3691 = vunpack.c.l.b16 %v3339
      %v3692 = vunpack.c.h.b16 %v3339
      %v3693 = vunpack.c.l.b16 %v3340
      %v3694 = vunpack.c.h.b16 %v3340
      %v3695 = vunpack.c.l.b16 %v3341
      %v3696 = vunpack.c.h.b16 %v3341
      %v3697 = vunpack.c.l.b16 %v3342
      %v3698 = vunpack.c.h.b16 %v3342
      %v3699 = vunpack.c.l.b16 %v3343
      %v3700 = vunpack.c.h.b16 %v3343
      %v3701 = vunpack.c.l.b16 %v3344
      %v3702 = vunpack.c.h.b16 %v3344
      %v3703 = vunpack.c.l.b16 %v3345
      %v3704 = vunpack.c.h.b16 %v3345
      %v3705 = vunpack.c.l.b16 %v3346
      %v3706 = vunpack.c.h.b16 %v3346
      %v3707 = vunpack.c.l.b16 %v3347
      %v3708 = vunpack.c.h.b16 %v3347
      %v3709 = vunpack.c.l.b16 %v3348
      %v3710 = vunpack.c.h.b16 %v3348
      %v3711 = vunpack.c.l.b16 %v3349
      %v3712 = vunpack.c.h.b16 %v3349
      %v3713 = vunpack.c.l.b16 %v3350
      %v3714 = vunpack.c.h.b16 %v3350
      %v3715 = vunpack.c.l.b16 %v3351
      %v3716 = vunpack.c.h.b16 %v3351
      %v3717 = vunpack.c.l.b16 %v3352
      %v3718 = vunpack.c.h.b16 %v3352
      %v3719 = vunpack.c.l.b16 %v3353
      %v3720 = vunpack.c.h.b16 %v3353
      %v3721 = vunpack.c.l.b16 %v3354
      %v3722 = vunpack.c.h.b16 %v3354
      %v3723 = vunpack.c.l.b16 %v3355
      %v3724 = vunpack.c.h.b16 %v3355
      %v3725 = vunpack.c.l.b16 %v3356
      %v3726 = vunpack.c.h.b16 %v3356
      %v3727 = vunpack.c.l.b16 %v3357
      %v3728 = vunpack.c.h.b16 %v3357
      %v3729 = vunpack.c.l.b16 %v3358
      %v3730 = vunpack.c.h.b16 %v3358
      %v3731 = vunpack.c.l.b16 %v3359
      %v3732 = vunpack.c.h.b16 %v3359
      %v3733 = vunpack.c.l.b16 %v3360
      %v3734 = vunpack.c.h.b16 %v3360
      %v3735 = vunpack.c.l.b16 %v3361
      %v3736 = vunpack.c.h.b16 %v3361
      %v3737 = vunpack.c.l.b16 %v3362
      %v3738 = vunpack.c.h.b16 %v3362
      %v3739 = vunpack.c.l.b16 %v3363
      %v3740 = vunpack.c.h.b16 %v3363
      %v3741 = vunpack.c.l.b16 %v3364
      %v3742 = vunpack.c.h.b16 %v3364
      %v3743 = vunpack.c.l.b16 %v3365
      %v3744 = vunpack.c.h.b16 %v3365
      %v3745 = vunpack.c.l.b16 %v3366
      %v3746 = vunpack.c.h.b16 %v3366
      %v3747 = vunpack.c.l.b16 %v3367
      %v3748 = vunpack.c.h.b16 %v3367
      %v3749 = vunpack.c.l.b16 %v3368
      %v3750 = vunpack.c.h.b16 %v3368
      %v3751 = vunpack.c.l.b16 %v3369
      %v3752 = vunpack.c.h.b16 %v3369
      %v3753 = vunpack.c.l.b16 %v3370
      %v3754 = vunpack.c.h.b16 %v3370
      %v3755 = vpack.c.b16 %v3503, %v3499
      %v3756 = vpack.c.b16 %v3504, %v3500
      %v3757 = vpack.c.b16 %v3505, %v3501
      %v3758 = vpack.c.b16 %v3506, %v3502
      %v3759 = vpack.c.b16 %v3511, %v3507
      %v3760 = vpack.c.b16 %v3512, %v3508
      %v3761 = vpack.c.b16 %v3513, %v3509
      %v3762 = vpack.c.b16 %v3514, %v3510
      %v3763 = vpack.c.b16 %v3519, %v3515
      %v3764 = vpack.c.b16 %v3520, %v3516
      %v3765 = vpack.c.b16 %v3521, %v3517
      %v3766 = vpack.c.b16 %v3522, %v3518
      %v3767 = vpack.c.b16 %v3527, %v3523
      %v3768 = vpack.c.b16 %v3528, %v3524
      %v3769 = vpack.c.b16 %v3529, %v3525
      %v3770 = vpack.c.b16 %v3530, %v3526
      %v3771 = vpack.c.b16 %v3535, %v3531
      %v3772 = vpack.c.b16 %v3536, %v3532
      %v3773 = vpack.c.b16 %v3537, %v3533
      %v3774 = vpack.c.b16 %v3538, %v3534
      %v3775 = vpack.c.b16 %v3543, %v3539
      %v3776 = vpack.c.b16 %v3544, %v3540
      %v3777 = vpack.c.b16 %v3545, %v3541
      %v3778 = vpack.c.b16 %v3546, %v3542
      %v3779 = vpack.c.b16 %v3551, %v3547
      %v3780 = vpack.c.b16 %v3552, %v3548
      %v3781 = vpack.c.b16 %v3553, %v3549
      %v3782 = vpack.c.b16 %v3554, %v3550
      %v3783 = vpack.c.b16 %v3559, %v3555
      %v3784 = vpack.c.b16 %v3560, %v3556
      %v3785 = vpack.c.b16 %v3561, %v3557
      %v3786 = vpack.c.b16 %v3562, %v3558
      %v3787 = vpack.c.b16 %v3567, %v3563
      %v3788 = vpack.c.b16 %v3568, %v3564
      %v3789 = vpack.c.b16 %v3569, %v3565
      %v3790 = vpack.c.b16 %v3570, %v3566
      %v3791 = vpack.c.b16 %v3575, %v3571
      %v3792 = vpack.c.b16 %v3576, %v3572
      %v3793 = vpack.c.b16 %v3577, %v3573
      %v3794 = vpack.c.b16 %v3578, %v3574
      %v3795 = vpack.c.b16 %v3583, %v3579
      %v3796 = vpack.c.b16 %v3584, %v3580
      %v3797 = vpack.c.b16 %v3585, %v3581
      %v3798 = vpack.c.b16 %v3586, %v3582
      %v3799 = vpack.c.b16 %v3591, %v3587
      %v3800 = vpack.c.b16 %v3592, %v3588
      %v3801 = vpack.c.b16 %v3593, %v3589
      %v3802 = vpack.c.b16 %v3594, %v3590
      %v3803 = vpack.c.b16 %v3599, %v3595
      %v3804 = vpack.c.b16 %v3600, %v3596
      %v3805 = vpack.c.b16 %v3601, %v3597
      %v3806 = vpack.c.b16 %v3602, %v3598
      %v3807 = vpack.c.b16 %v3607, %v3603
      %v3808 = vpack.c.b16 %v3608, %v3604
      %v3809 = vpack.c.b16 %v3609, %v3605
      %v3810 = vpack.c.b16 %v3610, %v3606
      %v3811 = vpack.c.b16 %v3615, %v3611
      %v3812 = vpack.c.b16 %v3616, %v3612
      %v3813 = vpack.c.b16 %v3617, %v3613
      %v3814 = vpack.c.b16 %v3618, %v3614
      %v3815 = vpack.c.b16 %v3623, %v3619
      %v3816 = vpack.c.b16 %v3624, %v3620
      %v3817 = vpack.c.b16 %v3625, %v3621
      %v3818 = vpack.c.b16 %v3626, %v3622
      %v3819 = vpack.c.b16 %v3631, %v3627
      %v3820 = vpack.c.b16 %v3632, %v3628
      %v3821 = vpack.c.b16 %v3633, %v3629
      %v3822 = vpack.c.b16 %v3634, %v3630
      %v3823 = vpack.c.b16 %v3639, %v3635
      %v3824 = vpack.c.b16 %v3640, %v3636
      %v3825 = vpack.c.b16 %v3641, %v3637
      %v3826 = vpack.c.b16 %v3642, %v3638
      %v3827 = vpack.c.b16 %v3647, %v3643
      %v3828 = vpack.c.b16 %v3648, %v3644
      %v3829 = vpack.c.b16 %v3649, %v3645
      %v3830 = vpack.c.b16 %v3650, %v3646
      %v3831 = vpack.c.b16 %v3655, %v3651
      %v3832 = vpack.c.b16 %v3656, %v3652
      %v3833 = vpack.c.b16 %v3657, %v3653
      %v3834 = vpack.c.b16 %v3658, %v3654
      %v3835 = vpack.c.b16 %v3663, %v3659
      %v3836 = vpack.c.b16 %v3664, %v3660
      %v3837 = vpack.c.b16 %v3665, %v3661
      %v3838 = vpack.c.b16 %v3666, %v3662
      %v3839 = vpack.c.b16 %v3671, %v3667
      %v3840 = vpack.c.b16 %v3672, %v3668
      %v3841 = vpack.c.b16 %v3673, %v3669
      %v3842 = vpack.c.b16 %v3674, %v3670
      %v3843 = vpack.c.b16 %v3679, %v3675
      %v3844 = vpack.c.b16 %v3680, %v3676
      %v3845 = vpack.c.b16 %v3681, %v3677
      %v3846 = vpack.c.b16 %v3682, %v3678
      %v3847 = vpack.c.b16 %v3687, %v3683
      %v3848 = vpack.c.b16 %v3688, %v3684
      %v3849 = vpack.c.b16 %v3689, %v3685
      %v3850 = vpack.c.b16 %v3690, %v3686
      %v3851 = vpack.c.b16 %v3695, %v3691
      %v3852 = vpack.c.b16 %v3696, %v3692
      %v3853 = vpack.c.b16 %v3697, %v3693
      %v3854 = vpack.c.b16 %v3698, %v3694
      %v3855 = vpack.c.b16 %v3703, %v3699
      %v3856 = vpack.c.b16 %v3704, %v3700
      %v3857 = vpack.c.b16 %v3705, %v3701
      %v3858 = vpack.c.b16 %v3706, %v3702
      %v3859 = vpack.c.b16 %v3711, %v3707
      %v3860 = vpack.c.b16 %v3712, %v3708
      %v3861 = vpack.c.b16 %v3713, %v3709
      %v3862 = vpack.c.b16 %v3714, %v3710
      %v3863 = vpack.c.b16 %v3719, %v3715
      %v3864 = vpack.c.b16 %v3720, %v3716
      %v3865 = vpack.c.b16 %v3721, %v3717
      %v3866 = vpack.c.b16 %v3722, %v3718
      %v3867 = vpack.c.b16 %v3727, %v3723
      %v3868 = vpack.c.b16 %v3728, %v3724
      %v3869 = vpack.c.b16 %v3729, %v3725
      %v3870 = vpack.c.b16 %v3730, %v3726
      %v3871 = vpack.c.b16 %v3735, %v3731
      %v3872 = vpack.c.b16 %v3736, %v3732
      %v3873 = vpack.c.b16 %v3737, %v3733
      %v3874 = vpack.c.b16 %v3738, %v3734
      %v3875 = vpack.c.b16 %v3743, %v3739
      %v3876 = vpack.c.b16 %v3744, %v3740
      %v3877 = vpack.c.b16 %v3745, %v3741
      %v3878 = vpack.c.b16 %v3746, %v3742
      %v3879 = vpack.c.b16 %v3751, %v3747
      %v3880 = vpack.c.b16 %v3752, %v3748
      %v3881 = vpack.c.b16 %v3753, %v3749
      %v3882 = vpack.c.b16 %v3754, %v3750
      %4011 = vmatpush.bf16.msra.mxu0 %v3783
      %4012 = vmatpush.bf16.msra.mxu0 %v3779
      %4013 = vmatpush.bf16.msra.mxu0 %v3775
      %4014 = vmatpush.bf16.msra.mxu0 %v3771
      %4015 = vmatpush.bf16.msra.mxu0 %v3767
      %4016 = vmatpush.bf16.msra.mxu0 %v3763
      %4017 = vmatpush.bf16.msra.mxu0 %v3759
      %4018 = vmatpush.bf16.msra.mxu0 %v3755
      %4019 = vmatmul.bf16.gmra.mxu0 %v3239
      %v4020 = vpop.f32.mrf.mxu0
      %v4021 = vadd.f32 0.0, %v4020
      %v4022 = vpop.f32.mrf.mxu0
      %v4023 = vadd.f32 0.0, %v4022
      %4024 = vdwg.mxu0
      %4025 = vmatpush.bf16.msra.mxu0 %v3815
      %4026 = vmatpush.bf16.msra.mxu0 %v3811
      %4027 = vmatpush.bf16.msra.mxu0 %v3807
      %4028 = vmatpush.bf16.msra.mxu0 %v3803
      %4029 = vmatpush.bf16.msra.mxu0 %v3799
      %4030 = vmatpush.bf16.msra.mxu0 %v3795
      %4031 = vmatpush.bf16.msra.mxu0 %v3791
      %4032 = vmatpush.bf16.msra.mxu0 %v3787
      %4033 = vmatmul.bf16.gmra.mxu0 %v3240
      %v4034 = vpop.f32.mrf.mxu0
      %v4035 = vadd.f32 %v4021, %v4034
      %v4036 = vpop.f32.mrf.mxu0
      %v4037 = vadd.f32 %v4023, %v4036
      %4038 = vdwg.mxu0
      %4039 = vmatpush.bf16.msra.mxu0 %v3847
      %4040 = vmatpush.bf16.msra.mxu0 %v3843
      %4041 = vmatpush.bf16.msra.mxu0 %v3839
      %4042 = vmatpush.bf16.msra.mxu0 %v3835
      %4043 = vmatpush.bf16.msra.mxu0 %v3831
      %4044 = vmatpush.bf16.msra.mxu0 %v3827
      %4045 = vmatpush.bf16.msra.mxu0 %v3823
      %4046 = vmatpush.bf16.msra.mxu0 %v3819
      %4047 = vmatmul.bf16.gmra.mxu0 %v3241
      %v4048 = vpop.f32.mrf.mxu0
      %v4049 = vadd.f32 %v4035, %v4048
      %v4050 = vpop.f32.mrf.mxu0
      %v4051 = vadd.f32 %v4037, %v4050
      %4052 = vdwg.mxu0
      %4053 = vmatpush.bf16.msra.mxu0 %v3879
      %4054 = vmatpush.bf16.msra.mxu0 %v3875
      %4055 = vmatpush.bf16.msra.mxu0 %v3871
      %4056 = vmatpush.bf16.msra.mxu0 %v3867
      %4057 = vmatpush.bf16.msra.mxu0 %v3863
      %4058 = vmatpush.bf16.msra.mxu0 %v3859
      %4059 = vmatpush.bf16.msra.mxu0 %v3855
      %4060 = vmatpush.bf16.msra.mxu0 %v3851
      %4061 = vmatmul.bf16.gmra.mxu0 %v3242
      %v4062 = vpop.f32.mrf.mxu0
      %v4063 = vadd.f32 %v4049, %v4062
      %v4064 = vpop.f32.mrf.mxu0
      %v4065 = vadd.f32 %v4051, %v4064
      %4066 = vdwg.mxu0
      %4067 = vmatpush.bf16.msra.mxu0 %v3784
      %4068 = vmatpush.bf16.msra.mxu0 %v3780
      %4069 = vmatpush.bf16.msra.mxu0 %v3776
      %4070 = vmatpush.bf16.msra.mxu0 %v3772
      %4071 = vmatpush.bf16.msra.mxu0 %v3768
      %4072 = vmatpush.bf16.msra.mxu0 %v3764
      %4073 = vmatpush.bf16.msra.mxu0 %v3760
      %4074 = vmatpush.bf16.msra.mxu0 %v3756
      %4075 = vmatmul.bf16.gmra.mxu0 %v3239
      %v4076 = vpop.f32.mrf.mxu0
      %v4077 = vadd.f32 0.0, %v4076
      %v4078 = vpop.f32.mrf.mxu0
      %v4079 = vadd.f32 0.0, %v4078
      %4080 = vdwg.mxu0
      %4081 = vmatpush.bf16.msra.mxu0 %v3816
      %4082 = vmatpush.bf16.msra.mxu0 %v3812
      %4083 = vmatpush.bf16.msra.mxu0 %v3808
      %4084 = vmatpush.bf16.msra.mxu0 %v3804
      %4085 = vmatpush.bf16.msra.mxu0 %v3800
      %4086 = vmatpush.bf16.msra.mxu0 %v3796
      %4087 = vmatpush.bf16.msra.mxu0 %v3792
      %4088 = vmatpush.bf16.msra.mxu0 %v3788
      %4089 = vmatmul.bf16.gmra.mxu0 %v3240
      %v4090 = vpop.f32.mrf.mxu0
      %v4091 = vadd.f32 %v4077, %v4090
      %v4092 = vpop.f32.mrf.mxu0
      %v4093 = vadd.f32 %v4079, %v4092
      %4094 = vdwg.mxu0
      %4095 = vmatpush.bf16.msra.mxu0 %v3848
      %4096 = vmatpush.bf16.msra.mxu0 %v3844
      %4097 = vmatpush.bf16.msra.mxu0 %v3840
      %4098 = vmatpush.bf16.msra.mxu0 %v3836
      %4099 = vmatpush.bf16.msra.mxu0 %v3832
      %4100 = vmatpush.bf16.msra.mxu0 %v3828
      %4101 = vmatpush.bf16.msra.mxu0 %v3824
      %4102 = vmatpush.bf16.msra.mxu0 %v3820
      %4103 = vmatmul.bf16.gmra.mxu0 %v3241
      %v4104 = vpop.f32.mrf.mxu0
      %v4105 = vadd.f32 %v4091, %v4104
      %v4106 = vpop.f32.mrf.mxu0
      %v4107 = vadd.f32 %v4093, %v4106
      %4108 = vdwg.mxu0
      %4109 = vmatpush.bf16.msra.mxu0 %v3880
      %4110 = vmatpush.bf16.msra.mxu0 %v3876
      %4111 = vmatpush.bf16.msra.mxu0 %v3872
      %4112 = vmatpush.bf16.msra.mxu0 %v3868
      %4113 = vmatpush.bf16.msra.mxu0 %v3864
      %4114 = vmatpush.bf16.msra.mxu0 %v3860
      %4115 = vmatpush.bf16.msra.mxu0 %v3856
      %4116 = vmatpush.bf16.msra.mxu0 %v3852
      %4117 = vmatmul.bf16.gmra.mxu0 %v3242
      %v4118 = vpop.f32.mrf.mxu0
      %v4119 = vadd.f32 %v4105, %v4118
      %v4120 = vpop.f32.mrf.mxu0
      %v4121 = vadd.f32 %v4107, %v4120
      %4122 = vdwg.mxu0
      %4123 = vmatpush.bf16.msra.mxu0 %v3785
      %4124 = vmatpush.bf16.msra.mxu0 %v3781
      %4125 = vmatpush.bf16.msra.mxu0 %v3777
      %4126 = vmatpush.bf16.msra.mxu0 %v3773
      %4127 = vmatpush.bf16.msra.mxu0 %v3769
      %4128 = vmatpush.bf16.msra.mxu0 %v3765
      %4129 = vmatpush.bf16.msra.mxu0 %v3761
      %4130 = vmatpush.bf16.msra.mxu0 %v3757
      %4131 = vmatmul.bf16.gmra.mxu0 %v3239
      %v4132 = vpop.f32.mrf.mxu0
      %v4133 = vadd.f32 0.0, %v4132
      %v4134 = vpop.f32.mrf.mxu0
      %v4135 = vadd.f32 0.0, %v4134
      %4136 = vdwg.mxu0
      %4137 = vmatpush.bf16.msra.mxu0 %v3817
      %4138 = vmatpush.bf16.msra.mxu0 %v3813
      %4139 = vmatpush.bf16.msra.mxu0 %v3809
      %4140 = vmatpush.bf16.msra.mxu0 %v3805
      %4141 = vmatpush.bf16.msra.mxu0 %v3801
      %4142 = vmatpush.bf16.msra.mxu0 %v3797
      %4143 = vmatpush.bf16.msra.mxu0 %v3793
      %4144 = vmatpush.bf16.msra.mxu0 %v3789
      %4145 = vmatmul.bf16.gmra.mxu0 %v3240
      %v4146 = vpop.f32.mrf.mxu0
      %v4147 = vadd.f32 %v4133, %v4146
      %v4148 = vpop.f32.mrf.mxu0
      %v4149 = vadd.f32 %v4135, %v4148
      %4150 = vdwg.mxu0
      %4151 = vmatpush.bf16.msra.mxu0 %v3849
      %4152 = vmatpush.bf16.msra.mxu0 %v3845
      %4153 = vmatpush.bf16.msra.mxu0 %v3841
      %4154 = vmatpush.bf16.msra.mxu0 %v3837
      %4155 = vmatpush.bf16.msra.mxu0 %v3833
      %4156 = vmatpush.bf16.msra.mxu0 %v3829
      %4157 = vmatpush.bf16.msra.mxu0 %v3825
      %4158 = vmatpush.bf16.msra.mxu0 %v3821
      %4159 = vmatmul.bf16.gmra.mxu0 %v3241
      %v4160 = vpop.f32.mrf.mxu0
      %v4161 = vadd.f32 %v4147, %v4160
      %v4162 = vpop.f32.mrf.mxu0
      %v4163 = vadd.f32 %v4149, %v4162
      %4164 = vdwg.mxu0
      %4165 = vmatpush.bf16.msra.mxu0 %v3881
      %4166 = vmatpush.bf16.msra.mxu0 %v3877
      %4167 = vmatpush.bf16.msra.mxu0 %v3873
      %4168 = vmatpush.bf16.msra.mxu0 %v3869
      %4169 = vmatpush.bf16.msra.mxu0 %v3865
      %4170 = vmatpush.bf16.msra.mxu0 %v3861
      %4171 = vmatpush.bf16.msra.mxu0 %v3857
      %4172 = vmatpush.bf16.msra.mxu0 %v3853
      %4173 = vmatmul.bf16.gmra.mxu0 %v3242
      %v4174 = vpop.f32.mrf.mxu0
      %v4175 = vadd.f32 %v4161, %v4174
      %v4176 = vpop.f32.mrf.mxu0
      %v4177 = vadd.f32 %v4163, %v4176
      %4178 = vdwg.mxu0
      %4179 = vmatpush.bf16.msra.mxu0 %v3786
      %4180 = vmatpush.bf16.msra.mxu0 %v3782
      %4181 = vmatpush.bf16.msra.mxu0 %v3778
      %4182 = vmatpush.bf16.msra.mxu0 %v3774
      %4183 = vmatpush.bf16.msra.mxu0 %v3770
      %4184 = vmatpush.bf16.msra.mxu0 %v3766
      %4185 = vmatpush.bf16.msra.mxu0 %v3762
      %4186 = vmatpush.bf16.msra.mxu0 %v3758
      %4187 = vmatmul.bf16.gmra.mxu0 %v3239
      %v4188 = vpop.f32.mrf.mxu0
      %v4189 = vadd.f32 0.0, %v4188
      %v4190 = vpop.f32.mrf.mxu0
      %v4191 = vadd.f32 0.0, %v4190
      %4192 = vdwg.mxu0
      %4193 = vmatpush.bf16.msra.mxu0 %v3818
      %4194 = vmatpush.bf16.msra.mxu0 %v3814
      %4195 = vmatpush.bf16.msra.mxu0 %v3810
      %4196 = vmatpush.bf16.msra.mxu0 %v3806
      %4197 = vmatpush.bf16.msra.mxu0 %v3802
      %4198 = vmatpush.bf16.msra.mxu0 %v3798
      %4199 = vmatpush.bf16.msra.mxu0 %v3794
      %4200 = vmatpush.bf16.msra.mxu0 %v3790
      %4201 = vmatmul.bf16.gmra.mxu0 %v3240
      %v4202 = vpop.f32.mrf.mxu0
      %v4203 = vadd.f32 %v4189, %v4202
      %v4204 = vpop.f32.mrf.mxu0
      %v4205 = vadd.f32 %v4191, %v4204
      %4206 = vdwg.mxu0
      %4207 = vmatpush.bf16.msra.mxu0 %v3850
      %4208 = vmatpush.bf16.msra.mxu0 %v3846
      %4209 = vmatpush.bf16.msra.mxu0 %v3842
      %4210 = vmatpush.bf16.msra.mxu0 %v3838
      %4211 = vmatpush.bf16.msra.mxu0 %v3834
      %4212 = vmatpush.bf16.msra.mxu0 %v3830
      %4213 = vmatpush.bf16.msra.mxu0 %v3826
      %4214 = vmatpush.bf16.msra.mxu0 %v3822
      %4215 = vmatmul.bf16.gmra.mxu0 %v3241
      %v4216 = vpop.f32.mrf.mxu0
      %v4217 = vadd.f32 %v4203, %v4216
      %v4218 = vpop.f32.mrf.mxu0
      %v4219 = vadd.f32 %v4205, %v4218
      %4220 = vdwg.mxu0
      %4221 = vmatpush.bf16.msra.mxu0 %v3882
      %4222 = vmatpush.bf16.msra.mxu0 %v3878
      %4223 = vmatpush.bf16.msra.mxu0 %v3874
      %4224 = vmatpush.bf16.msra.mxu0 %v3870
      %4225 = vmatpush.bf16.msra.mxu0 %v3866
      %4226 = vmatpush.bf16.msra.mxu0 %v3862
      %4227 = vmatpush.bf16.msra.mxu0 %v3858
      %4228 = vmatpush.bf16.msra.mxu0 %v3854
      %4229 = vmatmul.bf16.gmra.mxu0 %v3242
      %v4230 = vpop.f32.mrf.mxu0
      %v4231 = vadd.f32 %v4217, %v4230
      %v4232 = vpop.f32.mrf.mxu0
      %v4233 = vadd.f32 %v4219, %v4232
      %4234 = vdwg.mxu0
      %v4235 = vld [vmem:[%s7] sm:$0xf]
      %v4237 = vperm.slane %v4235, 0
      %v4238 = vperm.slane %v4235, 1
      %v4239 = vperm.slane %v4235, 2
      %v4240 = vperm.slane %v4235, 3
      %v4245 = vmul.f32 %v4063, %v4237
      %v4246 = vmul.f32 %v4119, %v4238
      %v4247 = vmul.f32 %v4175, %v4239
      %v4248 = vmul.f32 %v4231, %v4240
      %v4249 = vmul.f32 %v4065, %v4237
      %v4250 = vmul.f32 %v4121, %v4238
      %v4251 = vmul.f32 %v4177, %v4239
      %v4252 = vmul.f32 %v4233, %v4240
      %v4253 = vld [vmem:[%s8] sm:$0xf]
      %v4255 = vperm.slane %v4253, 0
      %v4256 = vperm.slane %v4253, 1
      %v4257 = vperm.slane %v4253, 2
      %v4258 = vperm.slane %v4253, 3
      %v4263 = vadd.f32 %v4245, %v4255
      %v4264 = vadd.f32 %v4246, %v4256
      %v4265 = vadd.f32 %v4247, %v4257
      %v4266 = vadd.f32 %v4248, %v4258
      %v4267 = vadd.f32 %v4249, %v4255
      %v4268 = vadd.f32 %v4250, %v4256
      %v4269 = vadd.f32 %v4251, %v4257
      %v4270 = vadd.f32 %v4252, %v4258
      %4271 = vst [vmem:[%s332] sm:$0xff] %v4263
      %4272 = vst [vmem:[%s332 + $0x8] sm:$0xff] %v4264
      %4273 = vst [vmem:[%s332 + $0x10] sm:$0xff] %v4265
      %4274 = vst [vmem:[%s332 + $0x18] sm:$0xff] %v4266
      %4275 = vst [vmem:[%s332 + $0x20] sm:$0xff] %v4267
      %4276 = vst [vmem:[%s332 + $0x28] sm:$0xff] %v4268
      %4277 = vst [vmem:[%s332 + $0x30] sm:$0xff] %v4269
      %4278 = vst [vmem:[%s332 + $0x38] sm:$0xff] %v4270
      %p4279 = scmp.lt.s32.totalorder %s20, 1
      %s4280 = scalar_select %p4279, %s20, 1
      %s4281 = smul.addr %s4280, 8
      %s4282 = smul.addr %s4281, 8
      %s4283 = scalar_lea.vmem %s9, %s4282
      // Predicated region
      $region57: #{a_call__.2} parent=55 // pred_check
        %p4284 = pneg %p232
      $region58: #{a_call__.2} parent=55 // pred_check_branch
        %4286 = sbr.rel (%p4284) target = $region60
      $region59: #{a_call__.2} parent=55 // pred_region
        _
      $region60: #{a_call__.2} parent=55 // pred_fallthru
        _
    $region56: #{a_call__.2} parent=5 // pred_fallthru
      _
    %p4287 = scmp.le.s32.totalorder 2, %s15
    // Predicated region
    $region61: #{a_call__.2} parent=5 // pred_check
      %p4288 = pneg %p4287
    $region62: #{a_call__.2} parent=5 // pred_check_branch
      %4290 = sbr.rel (%p4288) target = $region64
    $region63: #{a_call__.2} parent=5 // pred_region
      %s4291 = ssub.s32 %s15, 2
      // Predicated region
      $region65: #{a_call__.2} parent=63 // pred_check
        %p4292 = pneg %p238
      $region66: #{a_call__.2} parent=63 // pred_check_branch
        %4294 = sbr.rel (%p4292) target = $region68
      $region67: #{a_call__.2} parent=63 // pred_region
        %p4295 = scmp.lt.s32.totalorder %s21, 1
        %s4296 = scalar_select %p4295, %s21, 1
        %s4297 = smul.addr %s4296, 8
        %s4298 = smul.addr %s4297, 8
        %s4299 = scalar_lea.vmem %s9, %s4298
      $region68: #{a_call__.2} parent=63 // pred_fallthru
        _
    $region64: #{a_call__.2} parent=5 // pred_fallthru
      _
  $region6: #{a_call__.2} parent=0 // loop_footer
    %s19 = sadd.s32 1, %s15
  $region7: #{a_call__.2} parent=0 // loop_footer_branch
    %14 = sbr.rel target = $region3
  $region8: #{a_call__.2} parent=0 // loop_exit
    _

</llo_original>
